<compile_context>
chip_gen: v7x
topology: tpu7x:2x2x1
jax: 0.10.0
libtpu: 0.0.40
codegen_flags: <defaults>
</compile_context>

<pallas_src>
import math

import jax
import jax.numpy as jnp
from jax.experimental import pallas as pl
from jax.experimental.pallas import tpu as pltpu

LATENT_DIM = 16
STYLE_DIM = 64
HIDDEN = 512
NUM_DOMAINS = 2


# ---------------------------------------------------------------------------
# Fused kernel: shared trunk (d==0) -> one unshared branch per grid step
# ---------------------------------------------------------------------------
def mapping_kernel(fetch_idx_ref, counts_ref,          # scalar-prefetch (SMEM)
                   z_ref, y_ref,                       # inputs
                   sw0_ref, swr_ref, sb_ref,           # shared weights / biases
                   uwh_ref, ubh_ref, uwo_ref, ubo_ref, # unshared (current domain)
                   s_ref,                              # output (resident block)
                   h_scr):                             # VMEM scratch
    f32 = jnp.float32
    bf16 = jnp.bfloat16
    d = pl.program_id(0)

    # ---- shared trunk: compute once, keep in VMEM scratch -------------------
    @pl.when(d == 0)
    def _trunk():
        h = jnp.dot(z_ref[...].astype(bf16), sw0_ref[...],
                    preferred_element_type=f32) + sb_ref[0:1, :]
        h = jnp.maximum(h, 0.0).astype(bf16)
        for i in range(3):
            h = jnp.dot(h, swr_ref[i], preferred_element_type=f32) + sb_ref[i + 1:i + 2, :]
            h = jnp.maximum(h, 0.0).astype(bf16)
        h_scr[...] = h
        s_ref[...] = jnp.zeros_like(s_ref)

    # ---- unshared branch for this domain (skipped if no sample uses it) -----
    @pl.when(counts_ref[d] > 0)
    def _branch():
        g = h_scr[...]                                            # (B, 512) bf16
        for i in range(3):
            g = jnp.dot(g, uwh_ref[0, i], preferred_element_type=f32) + ubh_ref[0, i:i + 1, :]
            g = jnp.maximum(g, 0.0).astype(bf16)
        out = jnp.dot(g, uwo_ref[0], preferred_element_type=f32) + ubo_ref[0]  # (B, style) f32
        sel = y_ref[...] == d                                     # (B, 1) bool
        s_ref[...] = jnp.where(sel, out, s_ref[...]).astype(s_ref.dtype)


# ---------------------------------------------------------------------------
# Wrapper
# ---------------------------------------------------------------------------
@jax.jit
def mapping_forward(z, y, params):
    b = z.shape[0]
    y = y.astype(jnp.int32)

    # Scalar-prefetch tables (index plumbing only):
    #   counts[d]    = #samples selecting domain d  -> gate compute
    #   fetch_idx[d] = d if used else last used idx -> unused domains reuse the
    #                  previous block index, so their weights are never DMA'd.
    counts = jnp.sum(jax.nn.one_hot(y, NUM_DOMAINS, dtype=jnp.int32), axis=0)  # (D,)
    idx = jnp.arange(NUM_DOMAINS, dtype=jnp.int32)
    masked = jnp.where(counts > 0, idx, -1)
    fetch_idx = jnp.maximum(jax.lax.cummax(masked, axis=0), 0).astype(jnp.int32)

    y_col = y.reshape(b, 1)

    grid_spec = pltpu.PrefetchScalarGridSpec(
        num_scalar_prefetch=2,
        grid=(NUM_DOMAINS,),
        in_specs=[
            pl.BlockSpec((b, LATENT_DIM), lambda d, fi, cn: (0, 0)),           # z
            pl.BlockSpec((b, 1), lambda d, fi, cn: (0, 0)),                    # y_col
            pl.BlockSpec((LATENT_DIM, HIDDEN), lambda d, fi, cn: (0, 0)),      # sw0
            pl.BlockSpec((3, HIDDEN, HIDDEN), lambda d, fi, cn: (0, 0, 0)),    # sw_rest
            pl.BlockSpec((4, HIDDEN), lambda d, fi, cn: (0, 0)),               # sb
            pl.BlockSpec((1, 3, HIDDEN, HIDDEN),
                         lambda d, fi, cn: (fi[d], 0, 0, 0)),                  # uw_hid
            pl.BlockSpec((1, 3, HIDDEN), lambda d, fi, cn: (fi[d], 0, 0)),     # ub_hid
            pl.BlockSpec((1, HIDDEN, STYLE_DIM),
                         lambda d, fi, cn: (fi[d], 0, 0)),                     # uw_out
            pl.BlockSpec((1, 1, STYLE_DIM), lambda d, fi, cn: (fi[d], 0, 0)),  # ub_out
        ],
        out_specs=pl.BlockSpec((b, STYLE_DIM), lambda d, fi, cn: (0, 0)),
        scratch_shapes=[pltpu.VMEM((b, HIDDEN), jnp.bfloat16)],
    )

    return pl.pallas_call(
        mapping_kernel,
        out_shape=jax.ShapeDtypeStruct((b, STYLE_DIM), jnp.float32),
        grid_spec=grid_spec,
        compiler_params=pltpu.CompilerParams(dimension_semantics=("arbitrary",)),
    )(fetch_idx, counts,
      z, y_col,
      params["sw0"], params["sw_rest"], params["sb"],
      params["uw_hid"], params["ub_hid"], params["uw_out"], params["ub_out"])


# ---------------------------------------------------------------------------
# Parameter init (PyTorch Linear default: U(-1/sqrt(fan_in), +1/sqrt(fan_in))),
# packed into a few bf16 weight slabs + f32 bias slabs.
# ---------------------------------------------------------------------------
def init_params(key):
    def linear(k, fan_in, fan_out):
        kw, kb = jax.random.split(k)
        bound = 1.0 / math.sqrt(fan_in)
        w = jax.random.uniform(kw, (fan_in, fan_out), jnp.float32, -bound, bound)
        b = jax.random.uniform(kb, (fan_out,), jnp.float32, -bound, bound)
        return w, b

    keys = jax.random.split(key, 4 + NUM_DOMAINS * 4)

    sw0, sb0 = linear(keys[0], LATENT_DIM, HIDDEN)
    swr, sbr = [], []
    for i in range(1, 4):
        w, b = linear(keys[i], HIDDEN, HIDDEN)
        swr.append(w)
        sbr.append(b)

    uwh, ubh, uwo, ubo = [], [], [], []
    for d in range(NUM_DOMAINS):
        ws, bs = [], []
        for li in range(3):
            w, b = linear(keys[4 + d * 4 + li], HIDDEN, HIDDEN)
            ws.append(w)
            bs.append(b)
        wo, bo = linear(keys[4 + d * 4 + 3], HIDDEN, STYLE_DIM)
        uwh.append(jnp.stack(ws))                  # (3, 512, 512)
        ubh.append(jnp.stack(bs))                  # (3, 512)
        uwo.append(wo)                             # (512, style)
        ubo.append(bo.reshape(1, STYLE_DIM))       # (1, style)

    return {
        "sw0": sw0.astype(jnp.bfloat16),                       # (latent, 512)
        "sw_rest": jnp.stack(swr).astype(jnp.bfloat16),        # (3, 512, 512)
        "sb": jnp.stack([sb0] + sbr),                          # (4, 512) f32
        "uw_hid": jnp.stack(uwh).astype(jnp.bfloat16),         # (D, 3, 512, 512)
        "ub_hid": jnp.stack(ubh),                              # (D, 3, 512) f32
        "uw_out": jnp.stack(uwo).astype(jnp.bfloat16),         # (D, 512, style)
        "ub_out": jnp.stack(ubo),                              # (D, 1, style) f32
    }


# ---------------------------------------------------------------------------
# Pure-JAX reference (same bf16 weights / f32 accumulation as the kernel)
# ---------------------------------------------------------------------------
def mapping_reference(z, y, params):
    f32, bf16 = jnp.float32, jnp.bfloat16
    h = z.astype(bf16)
    h = jnp.maximum(jnp.dot(h, params["sw0"], preferred_element_type=f32)
                    + params["sb"][0:1], 0.0).astype(bf16)
    for i in range(3):
        h = jnp.maximum(jnp.dot(h, params["sw_rest"][i], preferred_element_type=f32)
                        + params["sb"][i + 1:i + 2], 0.0).astype(bf16)
    outs = []
    for d in range(NUM_DOMAINS):
        g = h
        for i in range(3):
            g = jnp.maximum(jnp.dot(g, params["uw_hid"][d, i], preferred_element_type=f32)
                            + params["ub_hid"][d, i:i + 1], 0.0).astype(bf16)
        g = jnp.dot(g, params["uw_out"][d], preferred_element_type=f32) + params["ub_out"][d]
        outs.append(g)
    out = jnp.stack(outs, axis=1)                              # (B, D, style)
    return out[jnp.arange(z.shape[0]), y]                      # (B, style)


if __name__ == "__main__":
    key = jax.random.PRNGKey(0)
    kp, kz = jax.random.split(key)

    params = init_params(kp)

    B = 2
    z = jax.random.normal(kz, (B, LATENT_DIM), dtype=jnp.float32)
    y = jnp.array([0, 1], dtype=jnp.int32)

    s = jax.block_until_ready(mapping_forward(z, y, params))
    ref = mapping_reference(z, y, params)

    assert s.shape == (B, STYLE_DIM)
    assert jnp.allclose(s, ref, atol=1e-2, rtol=1e-2), "mismatch vs reference"

    print("KERNEL_OK")
</pallas_src>

<mosaic_0001>
module attributes {stable_mosaic.version = 11 : i64} {
  func.func @mapping_kernel(%arg0: i32, %arg1: memref<2xi32, #tpu.memory_space<smem>>, %arg2: memref<2xi32, #tpu.memory_space<smem>>, %arg3: memref<2x16xf32, #tpu.memory_space<vmem>>, %arg4: memref<2x1xi32, #tpu.memory_space<vmem>>, %arg5: memref<16x512xbf16, #tpu.memory_space<vmem>>, %arg6: memref<3x512x512xbf16, #tpu.memory_space<vmem>>, %arg7: memref<4x512xf32, #tpu.memory_space<vmem>>, %arg8: memref<1x3x512x512xbf16, #tpu.memory_space<vmem>>, %arg9: memref<1x3x512xf32, #tpu.memory_space<vmem>>, %arg10: memref<1x512x64xbf16, #tpu.memory_space<vmem>>, %arg11: memref<1x1x64xf32, #tpu.memory_space<vmem>>, %arg12: memref<2x64xf32, #tpu.memory_space<vmem>>, %arg13: memref<2x512xbf16, #tpu.memory_space<vmem>>) attributes {dimension_semantics = [#tpu.dimension_semantics<arbitrary>], iteration_bounds = array<i64: 2>, scalar_prefetch = 2 : i64, scratch_operands = 1 : i64, tpu.core_type = #tpu.core_type<tc>, window_params = [{pipeline_mode = #tpu.pipeline_mode<synchronous>, transform_indices = @transform_0, window_bounds = array<i64: 2, 16>}, {pipeline_mode = #tpu.pipeline_mode<synchronous>, transform_indices = @transform_1, window_bounds = array<i64: 2, 1>}, {pipeline_mode = #tpu.pipeline_mode<synchronous>, transform_indices = @transform_2, window_bounds = array<i64: 16, 512>}, {pipeline_mode = #tpu.pipeline_mode<synchronous>, transform_indices = @transform_3, window_bounds = array<i64: 3, 512, 512>}, {pipeline_mode = #tpu.pipeline_mode<synchronous>, transform_indices = @transform_4, window_bounds = array<i64: 4, 512>}, {transform_indices = @transform_5, window_bounds = array<i64: 1, 3, 512, 512>}, {transform_indices = @transform_6, window_bounds = array<i64: 1, 3, 512>}, {transform_indices = @transform_7, window_bounds = array<i64: 1, 512, 64>}, {transform_indices = @transform_8, window_bounds = array<i64: 1, 1, 64>}, {pipeline_mode = #tpu.pipeline_mode<synchronous>, transform_indices = @transform_9, window_bounds = array<i64: 2, 64>}]} {
    %c0_i32 = arith.constant 0 : i32
    %0 = arith.cmpi eq, %arg0, %c0_i32 : i32
    %1 = arith.extui %0 : i1 to i32
    %c0_i32_0 = arith.constant 0 : i32
    %2 = arith.cmpi ne, %1, %c0_i32_0 : i32
    scf.if %2 {
      %c0 = arith.constant 0 : index
      %c0_3 = arith.constant 0 : index
      %8 = vector.load %arg3[%c0, %c0_3] : memref<2x16xf32, #tpu.memory_space<vmem>>, vector<2x16xf32>
      %9 = arith.truncf %8 : vector<2x16xf32> to vector<2x16xbf16>
      %c0_4 = arith.constant 0 : index
      %c0_5 = arith.constant 0 : index
      %10 = vector.load %arg5[%c0_4, %c0_5] : memref<16x512xbf16, #tpu.memory_space<vmem>>, vector<16x512xbf16>
      %cst = arith.constant dense<0.000000e+00> : vector<2x512xf32>
      %11 = tpu.matmul %9, %10, %cst {dimension_numbers = #tpu.dot_dimension_numbers<[1], [0], [0], [1], [0, 0, 1, 1], [], []>} : vector<2x16xbf16>, vector<16x512xbf16>, vector<2x512xf32> -> vector<2x512xf32>
      %c0_6 = arith.constant 0 : index
      %c0_7 = arith.constant 0 : index
      %12 = vector.load %arg7[%c0_6, %c0_7] : memref<4x512xf32, #tpu.memory_space<vmem>>, vector<1x512xf32>
      %13 = vector.broadcast %12 : vector<1x512xf32> to vector<2x512xf32>
      %14 = arith.addf %11, %13 : vector<2x512xf32>
      %cst_8 = arith.constant 0.000000e+00 : f32
      %15 = vector.broadcast %cst_8 : f32 to vector<2x512xf32>
      %16 = arith.maximumf %14, %15 : vector<2x512xf32>
      %17 = arith.truncf %16 : vector<2x512xf32> to vector<2x512xbf16>
      %c0_9 = arith.constant 0 : index
      %c0_10 = arith.constant 0 : index
      %c0_11 = arith.constant 0 : index
      %18 = vector.load %arg6[%c0_9, %c0_10, %c0_11] : memref<3x512x512xbf16, #tpu.memory_space<vmem>>, vector<1x512x512xbf16>
      %19 = vector.shape_cast %18 : vector<1x512x512xbf16> to vector<512x512xbf16>
      %cst_12 = arith.constant dense<0.000000e+00> : vector<2x512xf32>
      %20 = tpu.matmul %17, %19, %cst_12 {dimension_numbers = #tpu.dot_dimension_numbers<[1], [0], [0], [1], [0, 0, 1, 1], [], []>} : vector<2x512xbf16>, vector<512x512xbf16>, vector<2x512xf32> -> vector<2x512xf32>
      %c1 = arith.constant 1 : index
      %c0_13 = arith.constant 0 : index
      %21 = vector.load %arg7[%c1, %c0_13] : memref<4x512xf32, #tpu.memory_space<vmem>>, vector<1x512xf32>
      %22 = vector.broadcast %21 : vector<1x512xf32> to vector<2x512xf32>
      %23 = arith.addf %20, %22 : vector<2x512xf32>
      %cst_14 = arith.constant 0.000000e+00 : f32
      %24 = vector.broadcast %cst_14 : f32 to vector<2x512xf32>
      %25 = arith.maximumf %23, %24 : vector<2x512xf32>
      %26 = arith.truncf %25 : vector<2x512xf32> to vector<2x512xbf16>
      %c1_15 = arith.constant 1 : index
      %c0_16 = arith.constant 0 : index
      %c0_17 = arith.constant 0 : index
      %27 = vector.load %arg6[%c1_15, %c0_16, %c0_17] : memref<3x512x512xbf16, #tpu.memory_space<vmem>>, vector<1x512x512xbf16>
      %28 = vector.shape_cast %27 : vector<1x512x512xbf16> to vector<512x512xbf16>
      %cst_18 = arith.constant dense<0.000000e+00> : vector<2x512xf32>
      %29 = tpu.matmul %26, %28, %cst_18 {dimension_numbers = #tpu.dot_dimension_numbers<[1], [0], [0], [1], [0, 0, 1, 1], [], []>} : vector<2x512xbf16>, vector<512x512xbf16>, vector<2x512xf32> -> vector<2x512xf32>
      %c2 = arith.constant 2 : index
      %c0_19 = arith.constant 0 : index
      %30 = vector.load %arg7[%c2, %c0_19] : memref<4x512xf32, #tpu.memory_space<vmem>>, vector<1x512xf32>
      %31 = vector.broadcast %30 : vector<1x512xf32> to vector<2x512xf32>
      %32 = arith.addf %29, %31 : vector<2x512xf32>
      %cst_20 = arith.constant 0.000000e+00 : f32
      %33 = vector.broadcast %cst_20 : f32 to vector<2x512xf32>
      %34 = arith.maximumf %32, %33 : vector<2x512xf32>
      %35 = arith.truncf %34 : vector<2x512xf32> to vector<2x512xbf16>
      %c2_21 = arith.constant 2 : index
      %c0_22 = arith.constant 0 : index
      %c0_23 = arith.constant 0 : index
      %36 = vector.load %arg6[%c2_21, %c0_22, %c0_23] : memref<3x512x512xbf16, #tpu.memory_space<vmem>>, vector<1x512x512xbf16>
      %37 = vector.shape_cast %36 : vector<1x512x512xbf16> to vector<512x512xbf16>
      %cst_24 = arith.constant dense<0.000000e+00> : vector<2x512xf32>
      %38 = tpu.matmul %35, %37, %cst_24 {dimension_numbers = #tpu.dot_dimension_numbers<[1], [0], [0], [1], [0, 0, 1, 1], [], []>} : vector<2x512xbf16>, vector<512x512xbf16>, vector<2x512xf32> -> vector<2x512xf32>
      %c3 = arith.constant 3 : index
      %c0_25 = arith.constant 0 : index
      %39 = vector.load %arg7[%c3, %c0_25] : memref<4x512xf32, #tpu.memory_space<vmem>>, vector<1x512xf32>
      %40 = vector.broadcast %39 : vector<1x512xf32> to vector<2x512xf32>
      %41 = arith.addf %38, %40 : vector<2x512xf32>
      %cst_26 = arith.constant 0.000000e+00 : f32
      %42 = vector.broadcast %cst_26 : f32 to vector<2x512xf32>
      %43 = arith.maximumf %41, %42 : vector<2x512xf32>
      %44 = arith.truncf %43 : vector<2x512xf32> to vector<2x512xbf16>
      %c0_27 = arith.constant 0 : index
      %c0_28 = arith.constant 0 : index
      %45 = vector.load %arg13[%c0_27, %c0_28] : memref<2x512xbf16, #tpu.memory_space<vmem>>, vector<2x512xbf16>
      tpu.vector_store %arg13[%c0_27, %c0_28], %44 {strides = array<i32>} : memref<2x512xbf16, #tpu.memory_space<vmem>>, vector<2x512xbf16>,
      %cst_29 = arith.constant 0.000000e+00 : f32
      %46 = vector.broadcast %cst_29 : f32 to vector<2x64xf32>
      %c0_30 = arith.constant 0 : index
      %c0_31 = arith.constant 0 : index
      %47 = vector.load %arg12[%c0_30, %c0_31] : memref<2x64xf32, #tpu.memory_space<vmem>>, vector<2x64xf32>
      tpu.vector_store %arg12[%c0_30, %c0_31], %46 {strides = array<i32>} : memref<2x64xf32, #tpu.memory_space<vmem>>, vector<2x64xf32>,
    } else {
    }
    %3 = arith.index_cast %arg0 : i32 to index
    %4 = memref.load %arg2[%3] : memref<2xi32, #tpu.memory_space<smem>>
    %c0_i32_1 = arith.constant 0 : i32
    %5 = arith.cmpi sgt, %4, %c0_i32_1 : i32
    %6 = arith.extui %5 : i1 to i32
    %c0_i32_2 = arith.constant 0 : i32
    %7 = arith.cmpi ne, %6, %c0_i32_2 : i32
    scf.if %7 {
      %c0 = arith.constant 0 : index
      %c0_3 = arith.constant 0 : index
      %8 = vector.load %arg13[%c0, %c0_3] : memref<2x512xbf16, #tpu.memory_space<vmem>>, vector<2x512xbf16>
      %c0_4 = arith.constant 0 : index
      %c0_5 = arith.constant 0 : index
      %c0_6 = arith.constant 0 : index
      %c0_7 = arith.constant 0 : index
      %9 = vector.load %arg8[%c0_4, %c0_5, %c0_6, %c0_7] : memref<1x3x512x512xbf16, #tpu.memory_space<vmem>>, vector<1x1x512x512xbf16>
      %10 = vector.shape_cast %9 : vector<1x1x512x512xbf16> to vector<512x512xbf16>
      %cst = arith.constant dense<0.000000e+00> : vector<2x512xf32>
      %11 = tpu.matmul %8, %10, %cst {dimension_numbers = #tpu.dot_dimension_numbers<[1], [0], [0], [1], [0, 0, 1, 1], [], []>} : vector<2x512xbf16>, vector<512x512xbf16>, vector<2x512xf32> -> vector<2x512xf32>
      %c0_8 = arith.constant 0 : index
      %c0_9 = arith.constant 0 : index
      %c0_10 = arith.constant 0 : index
      %12 = vector.load %arg9[%c0_8, %c0_9, %c0_10] : memref<1x3x512xf32, #tpu.memory_space<vmem>>, vector<1x1x512xf32>
      %13 = vector.shape_cast %12 : vector<1x1x512xf32> to vector<1x512xf32>
      %14 = vector.broadcast %13 : vector<1x512xf32> to vector<2x512xf32>
      %15 = arith.addf %11, %14 : vector<2x512xf32>
      %cst_11 = arith.constant 0.000000e+00 : f32
      %16 = vector.broadcast %cst_11 : f32 to vector<2x512xf32>
      %17 = arith.maximumf %15, %16 : vector<2x512xf32>
      %18 = arith.truncf %17 : vector<2x512xf32> to vector<2x512xbf16>
      %c0_12 = arith.constant 0 : index
      %c1 = arith.constant 1 : index
      %c0_13 = arith.constant 0 : index
      %c0_14 = arith.constant 0 : index
      %19 = vector.load %arg8[%c0_12, %c1, %c0_13, %c0_14] : memref<1x3x512x512xbf16, #tpu.memory_space<vmem>>, vector<1x1x512x512xbf16>
      %20 = vector.shape_cast %19 : vector<1x1x512x512xbf16> to vector<512x512xbf16>
      %cst_15 = arith.constant dense<0.000000e+00> : vector<2x512xf32>
      %21 = tpu.matmul %18, %20, %cst_15 {dimension_numbers = #tpu.dot_dimension_numbers<[1], [0], [0], [1], [0, 0, 1, 1], [], []>} : vector<2x512xbf16>, vector<512x512xbf16>, vector<2x512xf32> -> vector<2x512xf32>
      %c0_16 = arith.constant 0 : index
      %c1_17 = arith.constant 1 : index
      %c0_18 = arith.constant 0 : index
      %22 = vector.load %arg9[%c0_16, %c1_17, %c0_18] : memref<1x3x512xf32, #tpu.memory_space<vmem>>, vector<1x1x512xf32>
      %23 = vector.shape_cast %22 : vector<1x1x512xf32> to vector<1x512xf32>
      %24 = vector.broadcast %23 : vector<1x512xf32> to vector<2x512xf32>
      %25 = arith.addf %21, %24 : vector<2x512xf32>
      %cst_19 = arith.constant 0.000000e+00 : f32
      %26 = vector.broadcast %cst_19 : f32 to vector<2x512xf32>
      %27 = arith.maximumf %25, %26 : vector<2x512xf32>
      %28 = arith.truncf %27 : vector<2x512xf32> to vector<2x512xbf16>
      %c0_20 = arith.constant 0 : index
      %c2 = arith.constant 2 : index
      %c0_21 = arith.constant 0 : index
      %c0_22 = arith.constant 0 : index
      %29 = vector.load %arg8[%c0_20, %c2, %c0_21, %c0_22] : memref<1x3x512x512xbf16, #tpu.memory_space<vmem>>, vector<1x1x512x512xbf16>
      %30 = vector.shape_cast %29 : vector<1x1x512x512xbf16> to vector<512x512xbf16>
      %cst_23 = arith.constant dense<0.000000e+00> : vector<2x512xf32>
      %31 = tpu.matmul %28, %30, %cst_23 {dimension_numbers = #tpu.dot_dimension_numbers<[1], [0], [0], [1], [0, 0, 1, 1], [], []>} : vector<2x512xbf16>, vector<512x512xbf16>, vector<2x512xf32> -> vector<2x512xf32>
      %c0_24 = arith.constant 0 : index
      %c2_25 = arith.constant 2 : index
      %c0_26 = arith.constant 0 : index
      %32 = vector.load %arg9[%c0_24, %c2_25, %c0_26] : memref<1x3x512xf32, #tpu.memory_space<vmem>>, vector<1x1x512xf32>
      %33 = vector.shape_cast %32 : vector<1x1x512xf32> to vector<1x512xf32>
      %34 = vector.broadcast %33 : vector<1x512xf32> to vector<2x512xf32>
      %35 = arith.addf %31, %34 : vector<2x512xf32>
      %cst_27 = arith.constant 0.000000e+00 : f32
      %36 = vector.broadcast %cst_27 : f32 to vector<2x512xf32>
      %37 = arith.maximumf %35, %36 : vector<2x512xf32>
      %38 = arith.truncf %37 : vector<2x512xf32> to vector<2x512xbf16>
      %c0_28 = arith.constant 0 : index
      %c0_29 = arith.constant 0 : index
      %c0_30 = arith.constant 0 : index
      %39 = vector.load %arg10[%c0_28, %c0_29, %c0_30] : memref<1x512x64xbf16, #tpu.memory_space<vmem>>, vector<1x512x64xbf16>
      %40 = vector.shape_cast %39 : vector<1x512x64xbf16> to vector<512x64xbf16>
      %cst_31 = arith.constant dense<0.000000e+00> : vector<2x64xf32>
      %41 = tpu.matmul %38, %40, %cst_31 {dimension_numbers = #tpu.dot_dimension_numbers<[1], [0], [0], [1], [0, 0, 1, 1], [], []>} : vector<2x512xbf16>, vector<512x64xbf16>, vector<2x64xf32> -> vector<2x64xf32>
      %c0_32 = arith.constant 0 : index
      %c0_33 = arith.constant 0 : index
      %c0_34 = arith.constant 0 : index
      %42 = vector.load %arg11[%c0_32, %c0_33, %c0_34] : memref<1x1x64xf32, #tpu.memory_space<vmem>>, vector<1x1x64xf32>
      %43 = vector.shape_cast %42 : vector<1x1x64xf32> to vector<1x64xf32>
      %44 = vector.broadcast %43 : vector<1x64xf32> to vector<2x64xf32>
      %45 = arith.addf %41, %44 : vector<2x64xf32>
      %c0_35 = arith.constant 0 : index
      %c0_36 = arith.constant 0 : index
      %46 = vector.load %arg4[%c0_35, %c0_36] : memref<2x1xi32, #tpu.memory_space<vmem>>, vector<2x1xi32>
      %47 = vector.broadcast %arg0 : i32 to vector<2x1xi32>
      %48 = arith.cmpi eq, %46, %47 : vector<2x1xi32>
      %c0_37 = arith.constant 0 : index
      %c0_38 = arith.constant 0 : index
      %49 = vector.load %arg12[%c0_37, %c0_38] : memref<2x64xf32, #tpu.memory_space<vmem>>, vector<2x64xf32>
      %50 = vector.shape_cast %48 : vector<2x1xi1> to vector<2x1xi1>
      %51 = vector.broadcast %50 : vector<2x1xi1> to vector<2x64xi1>
      %52 = arith.select %51, %45, %49 : vector<2x64xi1>, vector<2x64xf32>
      %c0_39 = arith.constant 0 : index
      %c0_40 = arith.constant 0 : index
      %53 = vector.load %arg12[%c0_39, %c0_40] : memref<2x64xf32, #tpu.memory_space<vmem>>, vector<2x64xf32>
      tpu.vector_store %arg12[%c0_39, %c0_40], %52 {strides = array<i32>} : memref<2x64xf32, #tpu.memory_space<vmem>>, vector<2x64xf32>,
    } else {
    }
    return
  }
  func.func @transform_0(%arg0: i32, %arg1: memref<2xi32, #tpu.memory_space<smem>>, %arg2: memref<2xi32, #tpu.memory_space<smem>>) -> (i32, i32) {
    %c0_i32 = arith.constant 0 : i32
    %c0_i32_0 = arith.constant 0 : i32
    %c0_i32_1 = arith.constant 0 : i32
    return %c0_i32, %c0_i32_0 : i32, i32
  }
  func.func @transform_1(%arg0: i32, %arg1: memref<2xi32, #tpu.memory_space<smem>>, %arg2: memref<2xi32, #tpu.memory_space<smem>>) -> (i32, i32) {
    %c0_i32 = arith.constant 0 : i32
    %c0_i32_0 = arith.constant 0 : i32
    %c0_i32_1 = arith.constant 0 : i32
    return %c0_i32, %c0_i32_0 : i32, i32
  }
  func.func @transform_2(%arg0: i32, %arg1: memref<2xi32, #tpu.memory_space<smem>>, %arg2: memref<2xi32, #tpu.memory_space<smem>>) -> (i32, i32) {
    %c0_i32 = arith.constant 0 : i32
    %c0_i32_0 = arith.constant 0 : i32
    %c0_i32_1 = arith.constant 0 : i32
    return %c0_i32, %c0_i32_0 : i32, i32
  }
  func.func @transform_3(%arg0: i32, %arg1: memref<2xi32, #tpu.memory_space<smem>>, %arg2: memref<2xi32, #tpu.memory_space<smem>>) -> (i32, i32, i32) {
    %c0_i32 = arith.constant 0 : i32
    %c0_i32_0 = arith.constant 0 : i32
    %c0_i32_1 = arith.constant 0 : i32
    %c0_i32_2 = arith.constant 0 : i32
    return %c0_i32, %c0_i32_0, %c0_i32_1 : i32, i32, i32
  }
  func.func @transform_4(%arg0: i32, %arg1: memref<2xi32, #tpu.memory_space<smem>>, %arg2: memref<2xi32, #tpu.memory_space<smem>>) -> (i32, i32) {
    %c0_i32 = arith.constant 0 : i32
    %c0_i32_0 = arith.constant 0 : i32
    %c0_i32_1 = arith.constant 0 : i32
    return %c0_i32, %c0_i32_0 : i32, i32
  }
  func.func @transform_5(%arg0: i32, %arg1: memref<2xi32, #tpu.memory_space<smem>>, %arg2: memref<2xi32, #tpu.memory_space<smem>>) -> (i32, i32, i32, i32) {
    %0 = arith.index_cast %arg0 : i32 to index
    %1 = memref.load %arg1[%0] : memref<2xi32, #tpu.memory_space<smem>>
    %c0_i32 = arith.constant 0 : i32
    %c0_i32_0 = arith.constant 0 : i32
    %c0_i32_1 = arith.constant 0 : i32
    %c0_i32_2 = arith.constant 0 : i32
    return %1, %c0_i32, %c0_i32_0, %c0_i32_1 : i32, i32, i32, i32
  }
  func.func @transform_6(%arg0: i32, %arg1: memref<2xi32, #tpu.memory_space<smem>>, %arg2: memref<2xi32, #tpu.memory_space<smem>>) -> (i32, i32, i32) {
    %0 = arith.index_cast %arg0 : i32 to index
    %1 = memref.load %arg1[%0] : memref<2xi32, #tpu.memory_space<smem>>
    %c0_i32 = arith.constant 0 : i32
    %c0_i32_0 = arith.constant 0 : i32
    %c0_i32_1 = arith.constant 0 : i32
    return %1, %c0_i32, %c0_i32_0 : i32, i32, i32
  }
  func.func @transform_7(%arg0: i32, %arg1: memref<2xi32, #tpu.memory_space<smem>>, %arg2: memref<2xi32, #tpu.memory_space<smem>>) -> (i32, i32, i32) {
    %0 = arith.index_cast %arg0 : i32 to index
    %1 = memref.load %arg1[%0] : memref<2xi32, #tpu.memory_space<smem>>
    %c0_i32 = arith.constant 0 : i32
    %c0_i32_0 = arith.constant 0 : i32
    %c0_i32_1 = arith.constant 0 : i32
    return %1, %c0_i32, %c0_i32_0 : i32, i32, i32
  }
  func.func @transform_8(%arg0: i32, %arg1: memref<2xi32, #tpu.memory_space<smem>>, %arg2: memref<2xi32, #tpu.memory_space<smem>>) -> (i32, i32, i32) {
    %0 = arith.index_cast %arg0 : i32 to index
    %1 = memref.load %arg1[%0] : memref<2xi32, #tpu.memory_space<smem>>
    %c0_i32 = arith.constant 0 : i32
    %c0_i32_0 = arith.constant 0 : i32
    %c0_i32_1 = arith.constant 0 : i32
    return %1, %c0_i32, %c0_i32_0 : i32, i32, i32
  }
  func.func @transform_9(%arg0: i32, %arg1: memref<2xi32, #tpu.memory_space<smem>>, %arg2: memref<2xi32, #tpu.memory_space<smem>>) -> (i32, i32) {
    %c0_i32 = arith.constant 0 : i32
    %c0_i32_0 = arith.constant 0 : i32
    %c0_i32_1 = arith.constant 0 : i32
    return %c0_i32, %c0_i32_0 : i32, i32
  }
}

</mosaic_0001>

<llo_original>
// kernel: mapping_forward.1
$region0: #{mapping_forward.1}
  #allocation0 [shape = 'u32[]', space=smem, size = 0x4, offset = 0x4, fixed_abs, tag = 'smem constant byte address 0x4 - core index']
  #allocation1 [shape = 'u32[144,128]{1,0:T(1,128)}', space=vmem, size = 0x12000, scoped, tag = 'internal scratch']
  #allocation2 [shape = 'bf16[2,512]{1,0:T(2,128)(2,1)}', space=vmem, size = 0x800, scoped, tag = 'scratch operand']
  #allocation3 [shape = 's32[1]{0}', space=sflag, size = 0x4, scoped, tag = 'scoped memory for mapping_forward.1']
  #allocation4 [shape = 'u8[512]{0}', space=smem, size = 0x200, scoped, tag = 'prefetched SMEM operand 0']
  #allocation5 [shape = 'u8[512]{0}', space=smem, size = 0x200, scoped, tag = 'prefetched SMEM operand 1']
  %s0 = inlined_call_operand.vmem [shape: s32[2], index: 0, kind: input, shape index: {}]
  %s1 = inlined_call_operand.vmem [shape: s32[2], index: 1, kind: input, shape index: {}]
  %s2 = inlined_call_operand.hbm [shape: f32[2,16], index: 2, kind: input, shape index: {}]
  %s3 = inlined_call_operand.vmem [shape: s32[2,1], index: 3, kind: input, shape index: {}]
  %s4 = inlined_call_operand.hbm [shape: bf16[16,512], index: 4, kind: input, shape index: {}]
  %s5 = inlined_call_operand.hbm [shape: bf16[3,512,512], index: 5, kind: input, shape index: {}]
  %s6 = inlined_call_operand.hbm [shape: f32[4,512], index: 6, kind: input, shape index: {}]
  %s7 = inlined_call_operand.hbm [shape: bf16[2,3,512,512], index: 7, kind: input, shape index: {}]
  %s8 = inlined_call_operand.vmem [shape: f32[2,3,512], index: 8, kind: input, shape index: {}]
  %s9 = inlined_call_operand.vmem [shape: bf16[2,512,64], index: 9, kind: input, shape index: {}]
  %s10 = inlined_call_operand.hbm [shape: f32[2,1,64], index: 10, kind: input, shape index: {}]
  %s11 = inlined_call_operand.hbm [shape: f32[2,64], index: 11, kind: output, shape index: {}]
  %s12 = sld [smem:[#allocation0]]
  $region101: #{mapping_forward.1} parent=0
    _
  %s14 = ssub.s32 1, %s12
  %s15 = scalar_select 0, %s14, %s12
  %s16 = sshll.u32 %s0, 4
  %s17 = int_to_ptr.vmem [resolvable:$true] %s16
  %19 = dma.vmem_to_smem %s17, 16, [#allocation4], [#allocation3]
  %s20 = sshll.u32 %s1, 4
  %s21 = int_to_ptr.vmem [resolvable:$true] %s20
  %23 = dma.vmem_to_smem %s21, 16, [#allocation5], [#allocation3]
  %24 = dma.done [#allocation3], 32
  %25 = sfence
  $region1: #{mapping_forward.1} parent=0
    #allocation6 [shape = 'u8[1024]{0}', space=vmem, size = 0x400, scoped, tag = 'input window, operand 2, single buffered']
    #allocation7 [shape = 's32[2]{0}', space=sflag, size = 0x8, scoped, tag = 'scoped memory for mapping_forward.1']
    #allocation8 [shape = 's32[2]{0}', space=sflag, size = 0x8, scoped, tag = 'scoped memory for mapping_forward.1']
    #allocation9 [shape = 'u8[16384]{0}', space=vmem, size = 0x4000, scoped, tag = 'input window, operand 4, single buffered']
    #allocation10 [shape = 's32[1]{0}', space=sflag, size = 0x4, scoped, tag = 'scoped memory for mapping_forward.1']
    #allocation11 [shape = 'u8[1572864]{0}', space=vmem, size = 0x180000, scoped, tag = 'input window, operand 5, single buffered']
    #allocation12 [shape = 'u8[8192]{0}', space=vmem, size = 0x2000, scoped, tag = 'input window, operand 6, single buffered']
    #allocation13 [shape = 's32[1]{0}', space=sflag, size = 0x4, scoped, tag = 'scoped memory for mapping_forward.1']
    #allocation14 [shape = 'u8[3145728]{0}', space=vmem, size = 0x300000, scoped, tag = 'input window, operand 7']
    #allocation15 [shape = 'u8[1024]{0}', space=vmem, size = 0x400, scoped, tag = 'input window, operand 10']
    #allocation16 [shape = 'u8[1024]{0}', space=vmem, size = 0x400, scoped, tag = 'output window, operand 0, single buffered']
    %26 = vsyncpa [#allocation7], 0
    %27 = vsyncpa [#allocation10], 0
    %28 = vsyncpa [#allocation13], 0
    %29 = vsyncpa [#allocation8], 0
    loop: start=0, step=1, limit=4
    $region2: #{mapping_forward.1} parent=1 // loop_pre_header
      _
    $region3: #{mapping_forward.1} parent=1 // loop_header
      %s31 = sphi 0, %s35
      %p32 = scmp.ge.s32.totalorder %s31, 4
      %s39 = sphi 0, %s39
      %s41 = sphi 0, %s39
      %s42 = sphi 0, %s41
      %s56 = sphi 0, %s42
      %s60 = sphi 0, %s60
      %s62 = sphi 0, %s60
      %s63 = sphi 0, %s62
      %s77 = sphi 0, %s63
      %s81 = sphi 0, %s81
      %s83 = sphi 0, %s81
      %s84 = sphi 0, %s83
      %s98 = sphi 0, %s84
      %s102 = sphi 0, %s102
      %s104 = sphi 0, %s102
      %s105 = sphi 0, %s104
      %s119 = sphi 0, %s105
      %s123 = sphi 0, %s123
      %s125 = sphi 0, %s123
      %s126 = sphi 0, %s125
      %s140 = sphi 0, %s126
      %s148 = sphi 0, %s150
      %s151 = sphi 0, %s148
      %s152 = sphi 0, %s151
      %s168 = sphi 0, %s152
      %s176 = sphi 0, %s178
      %s179 = sphi 0, %s176
      %s180 = sphi 0, %s179
      %s196 = sphi 0, %s180
      %s204 = sphi 0, %s206
      %s207 = sphi 0, %s204
      %s208 = sphi 0, %s207
      %s224 = sphi 0, %s208
      %s232 = sphi 0, %s234
      %s235 = sphi 0, %s232
      %s236 = sphi 0, %s235
      %s252 = sphi 0, %s236
      %s256 = sphi 0, %s256
      %s258 = sphi 0, %s256
      %s259 = sphi 0, %s258
      %s273 = sphi 0, %s259
    $region4: #{mapping_forward.1} parent=1 // loop_header_branch
      %34 = sbr.rel (%p32) target = $region8
    $region5: #{mapping_forward.1} parent=1 // loop_body
      %s36 = ssub.s32 %s31, 1
      %s37 = ssub.s32 %s31, 2
      %s38 = sadd.s32 %s31, 1
      %s40 = sadd.s32 %s39, 1
      %p43 = scmp.eq.s32.totalorder %s31, 1
      %p44 = scmp.ne.s32.totalorder %s39, %s41
      %p45 = scmp.eq.s32.totalorder %s31, 0
      %p46 = por %p44, %p45
      %p47 = scmp.ne.s32.totalorder %s39, %s41
      %p48 = scmp.eq.s32.totalorder %s36, 1
      %p49 = por %p47, %p48
      %p50 = scmp.ne.s32.totalorder %s41, %s42
      %p51 = scmp.eq.s32.totalorder %s36, 0
      %p52 = por %p50, %p51
      %p53 = scmp.ne.s32.totalorder %s41, %s42
      %p54 = scmp.eq.s32.totalorder %s37, 1
      %p55 = por %p53, %p54
      %p57 = scmp.ne.s32.totalorder %s42, %s56
      %p58 = scmp.eq.s32.totalorder %s37, 0
      %p59 = por %p57, %p58
      %s61 = sadd.s32 %s60, 1
      %p64 = scmp.eq.s32.totalorder %s31, 1
      %p65 = scmp.ne.s32.totalorder %s60, %s62
      %p66 = scmp.eq.s32.totalorder %s31, 0
      %p67 = por %p65, %p66
      %p68 = scmp.ne.s32.totalorder %s60, %s62
      %p69 = scmp.eq.s32.totalorder %s36, 1
      %p70 = por %p68, %p69
      %p71 = scmp.ne.s32.totalorder %s62, %s63
      %p72 = scmp.eq.s32.totalorder %s36, 0
      %p73 = por %p71, %p72
      %p74 = scmp.ne.s32.totalorder %s62, %s63
      %p75 = scmp.eq.s32.totalorder %s37, 1
      %p76 = por %p74, %p75
      %p78 = scmp.ne.s32.totalorder %s63, %s77
      %p79 = scmp.eq.s32.totalorder %s37, 0
      %p80 = por %p78, %p79
      %s82 = sadd.s32 %s81, 1
      %p85 = scmp.eq.s32.totalorder %s31, 1
      %p86 = scmp.ne.s32.totalorder %s81, %s83
      %p87 = scmp.eq.s32.totalorder %s31, 0
      %p88 = por %p86, %p87
      %p89 = scmp.ne.s32.totalorder %s81, %s83
      %p90 = scmp.eq.s32.totalorder %s36, 1
      %p91 = por %p89, %p90
      %p92 = scmp.ne.s32.totalorder %s83, %s84
      %p93 = scmp.eq.s32.totalorder %s36, 0
      %p94 = por %p92, %p93
      %p95 = scmp.ne.s32.totalorder %s83, %s84
      %p96 = scmp.eq.s32.totalorder %s37, 1
      %p97 = por %p95, %p96
      %p99 = scmp.ne.s32.totalorder %s84, %s98
      %p100 = scmp.eq.s32.totalorder %s37, 0
      %p101 = por %p99, %p100
      %s103 = sadd.s32 %s102, 1
      %p106 = scmp.eq.s32.totalorder %s31, 1
      %p107 = scmp.ne.s32.totalorder %s102, %s104
      %p108 = scmp.eq.s32.totalorder %s31, 0
      %p109 = por %p107, %p108
      %p110 = scmp.ne.s32.totalorder %s102, %s104
      %p111 = scmp.eq.s32.totalorder %s36, 1
      %p112 = por %p110, %p111
      %p113 = scmp.ne.s32.totalorder %s104, %s105
      %p114 = scmp.eq.s32.totalorder %s36, 0
      %p115 = por %p113, %p114
      %p116 = scmp.ne.s32.totalorder %s104, %s105
      %p117 = scmp.eq.s32.totalorder %s37, 1
      %p118 = por %p116, %p117
      %p120 = scmp.ne.s32.totalorder %s105, %s119
      %p121 = scmp.eq.s32.totalorder %s37, 0
      %p122 = por %p120, %p121
      %s124 = sadd.s32 %s123, 1
      %p127 = scmp.eq.s32.totalorder %s31, 1
      %p128 = scmp.ne.s32.totalorder %s123, %s125
      %p129 = scmp.eq.s32.totalorder %s31, 0
      %p130 = por %p128, %p129
      %p131 = scmp.ne.s32.totalorder %s123, %s125
      %p132 = scmp.eq.s32.totalorder %s36, 1
      %p133 = por %p131, %p132
      %p134 = scmp.ne.s32.totalorder %s125, %s126
      %p135 = scmp.eq.s32.totalorder %s36, 0
      %p136 = por %p134, %p135
      %p137 = scmp.ne.s32.totalorder %s125, %s126
      %p138 = scmp.eq.s32.totalorder %s37, 1
      %p139 = por %p137, %p138
      %p141 = scmp.ne.s32.totalorder %s126, %s140
      %p142 = scmp.eq.s32.totalorder %s37, 0
      %p143 = por %p141, %p142
      %s144 = sld [smem:[#allocation4 + %s31]]
      %s145 = sld [smem:[#allocation4 + %s38]]
      %s146 = ssub.s32 %s144, %s145
      %p147 = scmp.eq.s32.totalorder %s146, 0
      %s149 = sadd.s32 %s148, 1
      %s150 = scalar_select %p147, %s148, %s149
      %p153 = pneg %p147
      %p154 = scmp.eq.s32.totalorder %s31, 1
      %p155 = por %p153, %p154
      %p156 = scmp.ne.s32.totalorder %s148, %s151
      %p157 = scmp.eq.s32.totalorder %s31, 0
      %p158 = por %p156, %p157
      %p159 = scmp.ne.s32.totalorder %s148, %s151
      %p160 = scmp.eq.s32.totalorder %s36, 1
      %p161 = por %p159, %p160
      %p162 = scmp.ne.s32.totalorder %s151, %s152
      %p163 = scmp.eq.s32.totalorder %s36, 0
      %p164 = por %p162, %p163
      %p165 = scmp.ne.s32.totalorder %s151, %s152
      %p166 = scmp.eq.s32.totalorder %s37, 1
      %p167 = por %p165, %p166
      %p169 = scmp.ne.s32.totalorder %s152, %s168
      %p170 = scmp.eq.s32.totalorder %s37, 0
      %p171 = por %p169, %p170
      %s172 = sld [smem:[#allocation4 + %s31]]
      %s173 = sld [smem:[#allocation4 + %s38]]
      %s174 = ssub.s32 %s172, %s173
      %p175 = scmp.eq.s32.totalorder %s174, 0
      %s177 = sadd.s32 %s176, 1
      %s178 = scalar_select %p175, %s176, %s177
      %p181 = pneg %p175
      %p182 = scmp.eq.s32.totalorder %s31, 1
      %p183 = por %p181, %p182
      %p184 = scmp.ne.s32.totalorder %s176, %s179
      %p185 = scmp.eq.s32.totalorder %s31, 0
      %p186 = por %p184, %p185
      %p187 = scmp.ne.s32.totalorder %s176, %s179
      %p188 = scmp.eq.s32.totalorder %s36, 1
      %p189 = por %p187, %p188
      %p190 = scmp.ne.s32.totalorder %s179, %s180
      %p191 = scmp.eq.s32.totalorder %s36, 0
      %p192 = por %p190, %p191
      %p193 = scmp.ne.s32.totalorder %s179, %s180
      %p194 = scmp.eq.s32.totalorder %s37, 1
      %p195 = por %p193, %p194
      %p197 = scmp.ne.s32.totalorder %s180, %s196
      %p198 = scmp.eq.s32.totalorder %s37, 0
      %p199 = por %p197, %p198
      %s200 = sld [smem:[#allocation4 + %s31]]
      %s201 = sld [smem:[#allocation4 + %s38]]
      %s202 = ssub.s32 %s200, %s201
      %p203 = scmp.eq.s32.totalorder %s202, 0
      %s205 = sadd.s32 %s204, 1
      %s206 = scalar_select %p203, %s204, %s205
      %p209 = pneg %p203
      %p210 = scmp.eq.s32.totalorder %s31, 1
      %p211 = por %p209, %p210
      %p212 = scmp.ne.s32.totalorder %s204, %s207
      %p213 = scmp.eq.s32.totalorder %s31, 0
      %p214 = por %p212, %p213
      %p215 = scmp.ne.s32.totalorder %s204, %s207
      %p216 = scmp.eq.s32.totalorder %s36, 1
      %p217 = por %p215, %p216
      %p218 = scmp.ne.s32.totalorder %s207, %s208
      %p219 = scmp.eq.s32.totalorder %s36, 0
      %p220 = por %p218, %p219
      %p221 = scmp.ne.s32.totalorder %s207, %s208
      %p222 = scmp.eq.s32.totalorder %s37, 1
      %p223 = por %p221, %p222
      %p225 = scmp.ne.s32.totalorder %s208, %s224
      %p226 = scmp.eq.s32.totalorder %s37, 0
      %p227 = por %p225, %p226
      %s228 = sld [smem:[#allocation4 + %s31]]
      %s229 = sld [smem:[#allocation4 + %s38]]
      %s230 = ssub.s32 %s228, %s229
      %p231 = scmp.eq.s32.totalorder %s230, 0
      %s233 = sadd.s32 %s232, 1
      %s234 = scalar_select %p231, %s232, %s233
      %p237 = pneg %p231
      %p238 = scmp.eq.s32.totalorder %s31, 1
      %p239 = por %p237, %p238
      %p240 = scmp.ne.s32.totalorder %s232, %s235
      %p241 = scmp.eq.s32.totalorder %s31, 0
      %p242 = por %p240, %p241
      %p243 = scmp.ne.s32.totalorder %s232, %s235
      %p244 = scmp.eq.s32.totalorder %s36, 1
      %p245 = por %p243, %p244
      %p246 = scmp.ne.s32.totalorder %s235, %s236
      %p247 = scmp.eq.s32.totalorder %s36, 0
      %p248 = por %p246, %p247
      %p249 = scmp.ne.s32.totalorder %s235, %s236
      %p250 = scmp.eq.s32.totalorder %s37, 1
      %p251 = por %p249, %p250
      %p253 = scmp.ne.s32.totalorder %s236, %s252
      %p254 = scmp.eq.s32.totalorder %s37, 0
      %p255 = por %p253, %p254
      %s257 = sadd.s32 %s256, 1
      %p260 = scmp.eq.s32.totalorder %s31, 1
      %p261 = scmp.ne.s32.totalorder %s256, %s258
      %p262 = scmp.eq.s32.totalorder %s31, 0
      %p263 = por %p261, %p262
      %p264 = scmp.ne.s32.totalorder %s256, %s258
      %p265 = scmp.eq.s32.totalorder %s36, 1
      %p266 = por %p264, %p265
      %p267 = scmp.ne.s32.totalorder %s258, %s259
      %p268 = scmp.eq.s32.totalorder %s36, 0
      %p269 = por %p267, %p268
      %p270 = scmp.ne.s32.totalorder %s258, %s259
      %p271 = scmp.eq.s32.totalorder %s37, 1
      %p272 = por %p270, %p271
      %p274 = scmp.ne.s32.totalorder %s259, %s273
      %p275 = scmp.eq.s32.totalorder %s37, 0
      %p276 = por %p274, %p275
      %p277 = scmp.le.s32.totalorder 1, %s31
      %p278 = scmp.lt.s32.totalorder %s31, 3
      %p279 = pnand %p277, %p278
      %p280 = pneg %p279
      // Predicated region
      $region9: #{mapping_forward.1} parent=5 // pred_check
        _
      $region10: #{mapping_forward.1} parent=5 // pred_check_branch
        %282 = sbr.rel (%p279) target = $region12
      $region11: #{mapping_forward.1} parent=5 // pred_region
        %s283 = ssub.s32 %s31, 1
        // Predicated region
        $region13: #{mapping_forward.1} parent=11 // pred_check
          %p284 = pneg %p52
        $region14: #{mapping_forward.1} parent=11 // pred_check_branch
          %286 = sbr.rel (%p284) target = $region16
        $region15: #{mapping_forward.1} parent=11 // pred_region
          %s288 = ssub.s32 32, 32
          %289 = vsyncadd [#allocation7], %s288
          %s291 = sshll.u32 [#allocation6], 4
          %s292 = int_to_ptr.vmem [resolvable:$true] %s291
          %294 = dma.hbm_to_vmem [thread:$0]  %s2, 32, %s292, [#allocation7]
        $region16: #{mapping_forward.1} parent=11 // pred_fallthru
          _
        // Predicated region
        $region17: #{mapping_forward.1} parent=11 // pred_check
          %p295 = pneg %p73
        $region18: #{mapping_forward.1} parent=11 // pred_check_branch
          %297 = sbr.rel (%p295) target = $region20
        $region19: #{mapping_forward.1} parent=11 // pred_region
          _
        $region20: #{mapping_forward.1} parent=11 // pred_fallthru
          _
        // Predicated region
        $region21: #{mapping_forward.1} parent=11 // pred_check
          %p298 = pneg %p94
        $region22: #{mapping_forward.1} parent=11 // pred_check_branch
          %300 = sbr.rel (%p298) target = $region24
        $region23: #{mapping_forward.1} parent=11 // pred_region
          %s302 = ssub.s32 512, 512
          %303 = vsyncadd [#allocation10], %s302
          %s304 = sshll.u32 [#allocation9], 4
          %s305 = int_to_ptr.vmem [resolvable:$true] %s304
          %310 = dma.hbm_to_vmem [thread:$0]  %s4, 512, %s305, [#allocation10], 256, 256, 16
        $region24: #{mapping_forward.1} parent=11 // pred_fallthru
          _
        // Predicated region
        $region25: #{mapping_forward.1} parent=11 // pred_check
          %p311 = pneg %p115
        $region26: #{mapping_forward.1} parent=11 // pred_check_branch
          %313 = sbr.rel (%p311) target = $region28
        $region27: #{mapping_forward.1} parent=11 // pred_region
          %s315 = ssub.s32 49152, 49152
          %316 = vsyncadd [#allocation10], %s315
          %s317 = sshll.u32 [#allocation11], 4
          %s318 = int_to_ptr.vmem [resolvable:$true] %s317
          %323 = dma.hbm_to_vmem [thread:$0]  %s5, 49152, %s318, [#allocation10], 256, 256, 16
        $region28: #{mapping_forward.1} parent=11 // pred_fallthru
          _
        // Predicated region
        $region29: #{mapping_forward.1} parent=11 // pred_check
          %p324 = pneg %p136
        $region30: #{mapping_forward.1} parent=11 // pred_check_branch
          %326 = sbr.rel (%p324) target = $region32
        $region31: #{mapping_forward.1} parent=11 // pred_region
          %s328 = ssub.s32 256, 256
          %329 = vsyncadd [#allocation13], %s328
          %s331 = sshll.u32 [#allocation12], 4
          %s332 = int_to_ptr.vmem [resolvable:$true] %s331
          %334 = dma.hbm_to_vmem [thread:$0]  %s6, 256, %s332, [#allocation13]
        $region32: #{mapping_forward.1} parent=11 // pred_fallthru
          _
      $region12: #{mapping_forward.1} parent=5 // pred_fallthru
        _
      %p335 = scmp.lt.s32.totalorder %s31, 2
      // Predicated region
      $region33: #{mapping_forward.1} parent=5 // pred_check
        %p336 = pneg %p335
      $region34: #{mapping_forward.1} parent=5 // pred_check_branch
        %338 = sbr.rel (%p336) target = $region36
      $region35: #{mapping_forward.1} parent=5 // pred_region
        // Predicated region
        $region37: #{mapping_forward.1} parent=35 // pred_check
          %p339 = pneg %p158
        $region38: #{mapping_forward.1} parent=35 // pred_check_branch
          %341 = sbr.rel (%p339) target = $region40
        $region39: #{mapping_forward.1} parent=35 // pred_region
          %s342 = sand.u32 %s31, 1
          %s343 = scalar_lea.sflag [#allocation7], %s342
          %s344 = sand.u32 %s148, 1
          %s345 = smul.addr %s344, 3072
          %s346 = scalar_lea.vmem [#allocation14], %s345
          %s347 = sld [smem:[#allocation4 + %s31]]
          %s349 = ssub.s32 49152, 49152
          %350 = vsyncadd %s343, %s349
          %s351 = smul.addr %s347, 768
          %s352 = smul.addr %s351, 64
          %s353 = scalar_lea.hbm %s7, %s352
          %s354 = sshll.u32 %s346, 4
          %s355 = int_to_ptr.vmem [resolvable:$true] %s354
          %360 = dma.hbm_to_vmem [thread:$0]  %s353, 49152, %s355, %s343, 256, 256, 16
        $region40: #{mapping_forward.1} parent=35 // pred_fallthru
          _
        // Predicated region
        $region41: #{mapping_forward.1} parent=35 // pred_check
          %p361 = pneg %p186
        $region42: #{mapping_forward.1} parent=35 // pred_check_branch
          %363 = sbr.rel (%p361) target = $region44
        $region43: #{mapping_forward.1} parent=35 // pred_region
          %s364 = sld [smem:[#allocation4 + %s31]]
          %p365 = scmp.lt.s32.totalorder %s364, 1
          %s366 = scalar_select %p365, %s364, 1
          %s367 = smul.addr %s366, 4
          %s368 = smul.addr %s367, 4
          %s369 = scalar_lea.vmem %s8, %s368
          %s370 = sld [smem:[#allocation4 + %s31]]
        $region44: #{mapping_forward.1} parent=35 // pred_fallthru
          _
        // Predicated region
        $region45: #{mapping_forward.1} parent=35 // pred_check
          %p371 = pneg %p214
        $region46: #{mapping_forward.1} parent=35 // pred_check_branch
          %373 = sbr.rel (%p371) target = $region48
        $region47: #{mapping_forward.1} parent=35 // pred_region
          %s374 = sld [smem:[#allocation4 + %s31]]
          %p375 = scmp.lt.s32.totalorder %s374, 1
          %s376 = scalar_select %p375, %s374, 1
          %s377 = smul.addr %s376, 64
          %s378 = smul.addr %s377, 4
          %s379 = scalar_lea.vmem %s9, %s378
          %s380 = sld [smem:[#allocation4 + %s31]]
        $region48: #{mapping_forward.1} parent=35 // pred_fallthru
          _
        // Predicated region
        $region49: #{mapping_forward.1} parent=35 // pred_check
          %p381 = pneg %p242
        $region50: #{mapping_forward.1} parent=35 // pred_check_branch
          %383 = sbr.rel (%p381) target = $region52
        $region51: #{mapping_forward.1} parent=35 // pred_region
          %s384 = sand.u32 %s31, 1
          %s385 = scalar_lea.sflag [#allocation7], %s384
          %s386 = sand.u32 %s232, 1
          %s387 = scalar_lea.vmem [#allocation15], %s386
          %s388 = sld [smem:[#allocation4 + %s31]]
          %s390 = ssub.s32 16, 16
          %391 = vsyncadd %s385, %s390
          %s392 = smul.addr %s388, 16
          %s393 = scalar_lea.hbm %s10, %s392
          %s395 = sshll.u32 %s387, 4
          %s396 = int_to_ptr.vmem [resolvable:$true] %s395
          %398 = dma.hbm_to_vmem [thread:$0]  %s393, 16, %s396, %s385
        $region52: #{mapping_forward.1} parent=35 // pred_fallthru
          _
      $region36: #{mapping_forward.1} parent=5 // pred_fallthru
        _
      %p399 = scmp.le.s32.totalorder 1, %s31
      %p400 = scmp.lt.s32.totalorder %s31, 3
      %p401 = pnand %p399, %p400
      %p402 = pneg %p401
      // Predicated region
      $region53: #{mapping_forward.1} parent=5 // pred_check
        _
      $region54: #{mapping_forward.1} parent=5 // pred_check_branch
        %404 = sbr.rel (%p401) target = $region56
      $region55: #{mapping_forward.1} parent=5 // pred_region
        %s405 = ssub.s32 %s31, 1
        // Predicated region
        $region57: #{mapping_forward.1} parent=55 // pred_check
          %p406 = pneg %p52
        $region58: #{mapping_forward.1} parent=55 // pred_check_branch
          %408 = sbr.rel (%p406) target = $region60
        $region59: #{mapping_forward.1} parent=55 // pred_region
          %409 = dma.done [#allocation7], 32
        $region60: #{mapping_forward.1} parent=55 // pred_fallthru
          _
        // Predicated region
        $region61: #{mapping_forward.1} parent=55 // pred_check
          %p410 = pneg %p94
        $region62: #{mapping_forward.1} parent=55 // pred_check_branch
          %412 = sbr.rel (%p410) target = $region64
        $region63: #{mapping_forward.1} parent=55 // pred_region
          %413 = dma.done [#allocation10], 512
        $region64: #{mapping_forward.1} parent=55 // pred_fallthru
          _
        // Predicated region
        $region65: #{mapping_forward.1} parent=55 // pred_check
          %p414 = pneg %p115
        $region66: #{mapping_forward.1} parent=55 // pred_check_branch
          %416 = sbr.rel (%p414) target = $region68
        $region67: #{mapping_forward.1} parent=55 // pred_region
          %417 = dma.done [#allocation10], 49152
        $region68: #{mapping_forward.1} parent=55 // pred_fallthru
          _
        // Predicated region
        $region69: #{mapping_forward.1} parent=55 // pred_check
          %p418 = pneg %p136
        $region70: #{mapping_forward.1} parent=55 // pred_check_branch
          %420 = sbr.rel (%p418) target = $region72
        $region71: #{mapping_forward.1} parent=55 // pred_region
          %421 = dma.done [#allocation13], 256
        $region72: #{mapping_forward.1} parent=55 // pred_fallthru
          _
        %s422 = sand.u32 %s36, 1
        %s423 = scalar_lea.sflag [#allocation7], %s422
        %s424 = sand.u32 %s151, 1
        %s425 = smul.addr %s424, 3072
        %s426 = scalar_lea.vmem [#allocation14], %s425
        // Predicated region
        $region73: #{mapping_forward.1} parent=55 // pred_check
          %p427 = pneg %p164
        $region74: #{mapping_forward.1} parent=55 // pred_check_branch
          %429 = sbr.rel (%p427) target = $region76
        $region75: #{mapping_forward.1} parent=55 // pred_region
          %430 = dma.done %s423, 49152
        $region76: #{mapping_forward.1} parent=55 // pred_fallthru
          _
        %s431 = sand.u32 %s36, 1
        %s432 = scalar_lea.sflag [#allocation7], %s431
        %s433 = sand.u32 %s235, 1
        %s434 = scalar_lea.vmem [#allocation15], %s433
        // Predicated region
        $region77: #{mapping_forward.1} parent=55 // pred_check
          %p435 = pneg %p248
        $region78: #{mapping_forward.1} parent=55 // pred_check_branch
          %437 = sbr.rel (%p435) target = $region80
        $region79: #{mapping_forward.1} parent=55 // pred_region
          %438 = dma.done %s432, 16
        $region80: #{mapping_forward.1} parent=55 // pred_fallthru
          _
        %p439 = pneg %p52
        %p440 = pneg %p49
        %p441 = pneg %p73
        %p442 = pneg %p70
        %p443 = pneg %p94
        %p444 = pneg %p91
        %p445 = pneg %p115
        %p446 = pneg %p112
        %p447 = pneg %p136
        %p448 = pneg %p133
        %s449 = sand.u32 %s36, 1
        %s450 = scalar_lea.sflag [#allocation7], %s449
        %s451 = sand.u32 %s151, 1
        %s452 = smul.addr %s451, 3072
        %s453 = scalar_lea.vmem [#allocation14], %s452
        %p454 = pneg %p164
        %p455 = pneg %p161
        %s456 = sld [smem:[#allocation4 + %s36]]
        %p457 = scmp.lt.s32.totalorder %s456, 1
        %s458 = scalar_select %p457, %s456, 1
        %s459 = smul.addr %s458, 4
        %s460 = smul.addr %s459, 4
        %s461 = scalar_lea.vmem %s8, %s460
        %p462 = pneg %p192
        %p463 = pneg %p189
        %s464 = sld [smem:[#allocation4 + %s36]]
        %p465 = scmp.lt.s32.totalorder %s464, 1
        %s466 = scalar_select %p465, %s464, 1
        %s467 = smul.addr %s466, 64
        %s468 = smul.addr %s467, 4
        %s469 = scalar_lea.vmem %s9, %s468
        %p470 = pneg %p220
        %p471 = pneg %p217
        %s472 = sand.u32 %s36, 1
        %s473 = scalar_lea.sflag [#allocation7], %s472
        %s474 = sand.u32 %s235, 1
        %s475 = scalar_lea.vmem [#allocation15], %s474
        %p476 = pneg %p248
        %p477 = pneg %p245
        %p478 = pneg %p269
        %p479 = pneg %p266
        %s480 = sld [smem:[#allocation4 + %s36]]
        %s481 = sld [smem:[#allocation4 + %s36]]
        %p482 = scmp.lt.s32.totalorder %s481, 1
        %s483 = scalar_select %p482, %s481, 1
        %s484 = smul.addr %s483, 4
        %s485 = smul.addr %s484, 4
        %s486 = scalar_lea.vmem %s8, %s485
        %s487 = sld [smem:[#allocation4 + %s36]]
        %s488 = sld [smem:[#allocation4 + %s36]]
        %p489 = scmp.lt.s32.totalorder %s488, 1
        %s490 = scalar_select %p489, %s488, 1
        %s491 = smul.addr %s490, 64
        %s492 = smul.addr %s491, 4
        %s493 = scalar_lea.vmem %s9, %s492
        %s494 = sld [smem:[#allocation4 + %s36]]
        %s495 = sld [smem:[#allocation4 + %s36]]
        %p497 = scmp.eq.s32.totalorder %s36, 0
        // Predicated region
        $region81: #{mapping_forward.1} parent=55 // pred_check
          %p498 = pneg %p497
        $region82: #{mapping_forward.1} parent=55 // pred_check_branch
          %500 = sbr.rel (%p498) target = $region84
        $region83: #{mapping_forward.1} parent=55 // pred_region
          %v501 = vld [vmem:[#allocation6] sm:$0x3]
          %v502 = vpack.c.bf16 %v501, %v501
          %v503 = vld [vmem:[#allocation9] sm:$0xff]
          %v504 = vld [vmem:[#allocation9 + $0x8] sm:$0xff]
          %v505 = vld [vmem:[#allocation9 + $0x10] sm:$0xff]
          %v506 = vld [vmem:[#allocation9 + $0x18] sm:$0xff]
          %v507 = vld [vmem:[#allocation12] ss:$4 sm:$0xf]
          %v509 = vlaneseq
          %v510 = vshrl.u32 %v509, 7
          %v511 = vsub.s32 0, %v510
          %v512 = vrot.slane %v507, %v511
          %v513 = vlaneseq
          %v514 = vshrl.u32 %v513, 7
          %v515 = vsub.s32 1, %v514
          %v516 = vrot.slane %v507, %v515
          %v517 = vlaneseq
          %v518 = vshrl.u32 %v517, 7
          %v519 = vsub.s32 2, %v518
          %v520 = vrot.slane %v507, %v519
          %v521 = vlaneseq
          %v522 = vshrl.u32 %v521, 7
          %v523 = vsub.s32 3, %v522
          %v524 = vrot.slane %v507, %v523
          %v533 = vunpack.c.l.b16 %v503
          %v534 = vunpack.c.h.b16 %v503
          %v535 = vunpack.c.l.b16 %v504
          %v536 = vunpack.c.h.b16 %v504
          %v537 = vunpack.c.l.b16 %v505
          %v538 = vunpack.c.h.b16 %v505
          %v539 = vunpack.c.l.b16 %v506
          %v540 = vunpack.c.h.b16 %v506
          %v541 = vpack.c.b16 %v537, %v533
          %v542 = vpack.c.b16 %v538, %v534
          %v543 = vpack.c.b16 %v539, %v535
          %v544 = vpack.c.b16 %v540, %v536
          %vm549 = vcmask 130048
          %v551 = vsel %vm549, %v502, 0
          %553 = vmatprep.subr.bf16.mxu0 %v542
          %554 = vmatpush1.bf16.msra.mxu0 %v541
          %555 = vmatprep.subr.bf16.mxu0 0
          %556 = vmatpush1.bf16.msra.mxu0 0
          %557 = vmatprep.subr.bf16.mxu0 0
          %558 = vmatpush1.bf16.msra.mxu0 0
          %559 = vmatprep.subr.bf16.mxu0 0
          %560 = vmatpush1.bf16.msra.mxu0 0
          %561 = vmatprep.subr.bf16.mxu0 0
          %562 = vmatpush1.bf16.msra.mxu0 0
          %563 = vmatprep.subr.bf16.mxu0 0
          %564 = vmatpush1.bf16.msra.mxu0 0
          %565 = vmatprep.subr.bf16.mxu0 0
          %566 = vmatpush1.bf16.msra.mxu0 0
          %567 = vmatprep.subr.bf16.mxu0 0
          %568 = vmatpush1.bf16.msra.mxu0 0
          %569 = vmatprep.subr.bf16.mxu0 0
          %570 = vmatpush1.bf16.msra.mxu0 0
          %571 = vmatprep.subr.bf16.mxu0 0
          %572 = vmatpush1.bf16.msra.mxu0 0
          %573 = vmatprep.subr.bf16.mxu0 0
          %574 = vmatpush1.bf16.msra.mxu0 0
          %575 = vmatprep.subr.bf16.mxu0 0
          %576 = vmatpush1.bf16.msra.mxu0 0
          %577 = vmatprep.subr.bf16.mxu0 0
          %578 = vmatpush1.bf16.msra.mxu0 0
          %579 = vmatprep.subr.bf16.mxu0 0
          %580 = vmatpush1.bf16.msra.mxu0 0
          %581 = vmatprep.subr.bf16.mxu0 0
          %582 = vmatpush1.bf16.msra.mxu0 0
          %583 = vmatprep.subr.bf16.mxu0 0
          %584 = vmatpush1.bf16.msra.mxu0 0
          %585 = vmatprep.mubr.bf16.mxu0 0
          %586 = vmatmul.mubr.bf16.gmra.mrb[0].mxu0 %v551
          %v587 = vpop.f32.mrb[0].mxu0
          %v588 = vadd.f32 %v512, %v587
          %v589 = vpop.f32.mrb[0].mxu0
          %v590 = vadd.f32 %v516, %v589
          %v591 = vpop.f32.mrb[0].mxu0
          %v592 = vpop.f32.mrb[0].mxu0
          %593 = vdwg.mxu0
          %594 = vmatprep.subr.bf16.mxu0 %v544
          %595 = vmatpush1.bf16.msra.mxu0 %v543
          %596 = vmatprep.subr.bf16.mxu0 0
          %597 = vmatpush1.bf16.msra.mxu0 0
          %598 = vmatprep.subr.bf16.mxu0 0
          %599 = vmatpush1.bf16.msra.mxu0 0
          %600 = vmatprep.subr.bf16.mxu0 0
          %601 = vmatpush1.bf16.msra.mxu0 0
          %602 = vmatprep.subr.bf16.mxu0 0
          %603 = vmatpush1.bf16.msra.mxu0 0
          %604 = vmatprep.subr.bf16.mxu0 0
          %605 = vmatpush1.bf16.msra.mxu0 0
          %606 = vmatprep.subr.bf16.mxu0 0
          %607 = vmatpush1.bf16.msra.mxu0 0
          %608 = vmatprep.subr.bf16.mxu0 0
          %609 = vmatpush1.bf16.msra.mxu0 0
          %610 = vmatprep.subr.bf16.mxu0 0
          %611 = vmatpush1.bf16.msra.mxu0 0
          %612 = vmatprep.subr.bf16.mxu0 0
          %613 = vmatpush1.bf16.msra.mxu0 0
          %614 = vmatprep.subr.bf16.mxu0 0
          %615 = vmatpush1.bf16.msra.mxu0 0
          %616 = vmatprep.subr.bf16.mxu0 0
          %617 = vmatpush1.bf16.msra.mxu0 0
          %618 = vmatprep.subr.bf16.mxu0 0
          %619 = vmatpush1.bf16.msra.mxu0 0
          %620 = vmatprep.subr.bf16.mxu0 0
          %621 = vmatpush1.bf16.msra.mxu0 0
          %622 = vmatprep.subr.bf16.mxu0 0
          %623 = vmatpush1.bf16.msra.mxu0 0
          %624 = vmatprep.subr.bf16.mxu0 0
          %625 = vmatpush1.bf16.msra.mxu0 0
          %626 = vmatprep.mubr.bf16.mxu0 0
          %627 = vmatmul.mubr.bf16.gmra.mrb[0].mxu0 %v551
          %v628 = vpop.f32.mrb[0].mxu0
          %v629 = vadd.f32 %v520, %v628
          %v630 = vpop.f32.mrb[0].mxu0
          %v631 = vadd.f32 %v524, %v630
          %v632 = vpop.f32.mrb[0].mxu0
          %v633 = vpop.f32.mrb[0].mxu0
          %634 = vdwg.mxu0
          %v635 = vmax.f32 %v588, 0.0
          %v636 = vmax.f32 %v590, 0.0
          %v637 = vmax.f32 %v629, 0.0
          %v638 = vmax.f32 %v631, 0.0
          %v639 = vpack.c.bf16 %v635, %v635
          %v640 = vpack.c.bf16 %v636, %v636
          %v641 = vpack.c.bf16 %v637, %v637
          %v642 = vpack.c.bf16 %v638, %v638
          %v643 = vld [vmem:[#allocation11] sm:$0xff]
          %v644 = vld [vmem:[#allocation11 + $0x8] sm:$0xff]
          %v645 = vld [vmem:[#allocation11 + $0x10] sm:$0xff]
          %v646 = vld [vmem:[#allocation11 + $0x18] sm:$0xff]
          %v647 = vld [vmem:[#allocation11 + $0x20] sm:$0xff]
          %v648 = vld [vmem:[#allocation11 + $0x28] sm:$0xff]
          %v649 = vld [vmem:[#allocation11 + $0x30] sm:$0xff]
          %v650 = vld [vmem:[#allocation11 + $0x38] sm:$0xff]
          %v651 = vld [vmem:[#allocation11 + $0x40] sm:$0xff]
          %v652 = vld [vmem:[#allocation11 + $0x48] sm:$0xff]
          %v653 = vld [vmem:[#allocation11 + $0x50] sm:$0xff]
          %v654 = vld [vmem:[#allocation11 + $0x58] sm:$0xff]
          %v655 = vld [vmem:[#allocation11 + $0x60] sm:$0xff]
          %v656 = vld [vmem:[#allocation11 + $0x68] sm:$0xff]
          %v657 = vld [vmem:[#allocation11 + $0x70] sm:$0xff]
          %v658 = vld [vmem:[#allocation11 + $0x78] sm:$0xff]
          %v659 = vld [vmem:[#allocation11 + $0x80] sm:$0xff]
          %v660 = vld [vmem:[#allocation11 + $0x88] sm:$0xff]
          %v661 = vld [vmem:[#allocation11 + $0x90] sm:$0xff]
          %v662 = vld [vmem:[#allocation11 + $0x98] sm:$0xff]
          %v663 = vld [vmem:[#allocation11 + $0xa0] sm:$0xff]
          %v664 = vld [vmem:[#allocation11 + $0xa8] sm:$0xff]
          %v665 = vld [vmem:[#allocation11 + $0xb0] sm:$0xff]
          %v666 = vld [vmem:[#allocation11 + $0xb8] sm:$0xff]
          %v667 = vld [vmem:[#allocation11 + $0xc0] sm:$0xff]
          %v668 = vld [vmem:[#allocation11 + $0xc8] sm:$0xff]
          %v669 = vld [vmem:[#allocation11 + $0xd0] sm:$0xff]
          %v670 = vld [vmem:[#allocation11 + $0xd8] sm:$0xff]
          %v671 = vld [vmem:[#allocation11 + $0xe0] sm:$0xff]
          %v672 = vld [vmem:[#allocation11 + $0xe8] sm:$0xff]
          %v673 = vld [vmem:[#allocation11 + $0xf0] sm:$0xff]
          %v674 = vld [vmem:[#allocation11 + $0xf8] sm:$0xff]
          %v675 = vld [vmem:[#allocation11 + $0x100] sm:$0xff]
          %v676 = vld [vmem:[#allocation11 + $0x108] sm:$0xff]
          %v677 = vld [vmem:[#allocation11 + $0x110] sm:$0xff]
          %v678 = vld [vmem:[#allocation11 + $0x118] sm:$0xff]
          %v679 = vld [vmem:[#allocation11 + $0x120] sm:$0xff]
          %v680 = vld [vmem:[#allocation11 + $0x128] sm:$0xff]
          %v681 = vld [vmem:[#allocation11 + $0x130] sm:$0xff]
          %v682 = vld [vmem:[#allocation11 + $0x138] sm:$0xff]
          %v683 = vld [vmem:[#allocation11 + $0x140] sm:$0xff]
          %v684 = vld [vmem:[#allocation11 + $0x148] sm:$0xff]
          %v685 = vld [vmem:[#allocation11 + $0x150] sm:$0xff]
          %v686 = vld [vmem:[#allocation11 + $0x158] sm:$0xff]
          %v687 = vld [vmem:[#allocation11 + $0x160] sm:$0xff]
          %v688 = vld [vmem:[#allocation11 + $0x168] sm:$0xff]
          %v689 = vld [vmem:[#allocation11 + $0x170] sm:$0xff]
          %v690 = vld [vmem:[#allocation11 + $0x178] sm:$0xff]
          %v691 = vld [vmem:[#allocation11 + $0x180] sm:$0xff]
          %v692 = vld [vmem:[#allocation11 + $0x188] sm:$0xff]
          %v693 = vld [vmem:[#allocation11 + $0x190] sm:$0xff]
          %v694 = vld [vmem:[#allocation11 + $0x198] sm:$0xff]
          %v695 = vld [vmem:[#allocation11 + $0x1a0] sm:$0xff]
          %v696 = vld [vmem:[#allocation11 + $0x1a8] sm:$0xff]
          %v697 = vld [vmem:[#allocation11 + $0x1b0] sm:$0xff]
          %v698 = vld [vmem:[#allocation11 + $0x1b8] sm:$0xff]
          %v699 = vld [vmem:[#allocation11 + $0x1c0] sm:$0xff]
          %v700 = vld [vmem:[#allocation11 + $0x1c8] sm:$0xff]
          %v701 = vld [vmem:[#allocation11 + $0x1d0] sm:$0xff]
          %v702 = vld [vmem:[#allocation11 + $0x1d8] sm:$0xff]
          %v703 = vld [vmem:[#allocation11 + $0x1e0] sm:$0xff]
          %v704 = vld [vmem:[#allocation11 + $0x1e8] sm:$0xff]
          %v705 = vld [vmem:[#allocation11 + $0x1f0] sm:$0xff]
          %v706 = vld [vmem:[#allocation11 + $0x1f8] sm:$0xff]
          %v707 = vld [vmem:[#allocation11 + $0x200] sm:$0xff]
          %v708 = vld [vmem:[#allocation11 + $0x208] sm:$0xff]
          %v709 = vld [vmem:[#allocation11 + $0x210] sm:$0xff]
          %v710 = vld [vmem:[#allocation11 + $0x218] sm:$0xff]
          %v711 = vld [vmem:[#allocation11 + $0x220] sm:$0xff]
          %v712 = vld [vmem:[#allocation11 + $0x228] sm:$0xff]
          %v713 = vld [vmem:[#allocation11 + $0x230] sm:$0xff]
          %v714 = vld [vmem:[#allocation11 + $0x238] sm:$0xff]
          %v715 = vld [vmem:[#allocation11 + $0x240] sm:$0xff]
          %v716 = vld [vmem:[#allocation11 + $0x248] sm:$0xff]
          %v717 = vld [vmem:[#allocation11 + $0x250] sm:$0xff]
          %v718 = vld [vmem:[#allocation11 + $0x258] sm:$0xff]
          %v719 = vld [vmem:[#allocation11 + $0x260] sm:$0xff]
          %v720 = vld [vmem:[#allocation11 + $0x268] sm:$0xff]
          %v721 = vld [vmem:[#allocation11 + $0x270] sm:$0xff]
          %v722 = vld [vmem:[#allocation11 + $0x278] sm:$0xff]
          %v723 = vld [vmem:[#allocation11 + $0x280] sm:$0xff]
          %v724 = vld [vmem:[#allocation11 + $0x288] sm:$0xff]
          %v725 = vld [vmem:[#allocation11 + $0x290] sm:$0xff]
          %v726 = vld [vmem:[#allocation11 + $0x298] sm:$0xff]
          %v727 = vld [vmem:[#allocation11 + $0x2a0] sm:$0xff]
          %v728 = vld [vmem:[#allocation11 + $0x2a8] sm:$0xff]
          %v729 = vld [vmem:[#allocation11 + $0x2b0] sm:$0xff]
          %v730 = vld [vmem:[#allocation11 + $0x2b8] sm:$0xff]
          %v731 = vld [vmem:[#allocation11 + $0x2c0] sm:$0xff]
          %v732 = vld [vmem:[#allocation11 + $0x2c8] sm:$0xff]
          %v733 = vld [vmem:[#allocation11 + $0x2d0] sm:$0xff]
          %v734 = vld [vmem:[#allocation11 + $0x2d8] sm:$0xff]
          %v735 = vld [vmem:[#allocation11 + $0x2e0] sm:$0xff]
          %v736 = vld [vmem:[#allocation11 + $0x2e8] sm:$0xff]
          %v737 = vld [vmem:[#allocation11 + $0x2f0] sm:$0xff]
          %v738 = vld [vmem:[#allocation11 + $0x2f8] sm:$0xff]
          %v739 = vld [vmem:[#allocation11 + $0x300] sm:$0xff]
          %v740 = vld [vmem:[#allocation11 + $0x308] sm:$0xff]
          %v741 = vld [vmem:[#allocation11 + $0x310] sm:$0xff]
          %v742 = vld [vmem:[#allocation11 + $0x318] sm:$0xff]
          %v743 = vld [vmem:[#allocation11 + $0x320] sm:$0xff]
          %v744 = vld [vmem:[#allocation11 + $0x328] sm:$0xff]
          %v745 = vld [vmem:[#allocation11 + $0x330] sm:$0xff]
          %v746 = vld [vmem:[#allocation11 + $0x338] sm:$0xff]
          %v747 = vld [vmem:[#allocation11 + $0x340] sm:$0xff]
          %v748 = vld [vmem:[#allocation11 + $0x348] sm:$0xff]
          %v749 = vld [vmem:[#allocation11 + $0x350] sm:$0xff]
          %v750 = vld [vmem:[#allocation11 + $0x358] sm:$0xff]
          %v751 = vld [vmem:[#allocation11 + $0x360] sm:$0xff]
          %v752 = vld [vmem:[#allocation11 + $0x368] sm:$0xff]
          %v753 = vld [vmem:[#allocation11 + $0x370] sm:$0xff]
          %v754 = vld [vmem:[#allocation11 + $0x378] sm:$0xff]
          %v755 = vld [vmem:[#allocation11 + $0x380] sm:$0xff]
          %v756 = vld [vmem:[#allocation11 + $0x388] sm:$0xff]
          %v757 = vld [vmem:[#allocation11 + $0x390] sm:$0xff]
          %v758 = vld [vmem:[#allocation11 + $0x398] sm:$0xff]
          %v759 = vld [vmem:[#allocation11 + $0x3a0] sm:$0xff]
          %v760 = vld [vmem:[#allocation11 + $0x3a8] sm:$0xff]
          %v761 = vld [vmem:[#allocation11 + $0x3b0] sm:$0xff]
          %v762 = vld [vmem:[#allocation11 + $0x3b8] sm:$0xff]
          %v763 = vld [vmem:[#allocation11 + $0x3c0] sm:$0xff]
          %v764 = vld [vmem:[#allocation11 + $0x3c8] sm:$0xff]
          %v765 = vld [vmem:[#allocation11 + $0x3d0] sm:$0xff]
          %v766 = vld [vmem:[#allocation11 + $0x3d8] sm:$0xff]
          %v767 = vld [vmem:[#allocation11 + $0x3e0] sm:$0xff]
          %v768 = vld [vmem:[#allocation11 + $0x3e8] sm:$0xff]
          %v769 = vld [vmem:[#allocation11 + $0x3f0] sm:$0xff]
          %v770 = vld [vmem:[#allocation11 + $0x3f8] sm:$0xff]
          %s771 = scalar_lea.vmem [#allocation12], 1
          %v772 = vld [vmem:[%s771] ss:$4 sm:$0xf]
          %v774 = vlaneseq
          %v775 = vshrl.u32 %v774, 7
          %v776 = vsub.s32 0, %v775
          %v777 = vrot.slane %v772, %v776
          %v778 = vlaneseq
          %v779 = vshrl.u32 %v778, 7
          %v780 = vsub.s32 1, %v779
          %v781 = vrot.slane %v772, %v780
          %v782 = vlaneseq
          %v783 = vshrl.u32 %v782, 7
          %v784 = vsub.s32 2, %v783
          %v785 = vrot.slane %v772, %v784
          %v786 = vlaneseq
          %v787 = vshrl.u32 %v786, 7
          %v788 = vsub.s32 3, %v787
          %v789 = vrot.slane %v772, %v788
          %v922 = vunpack.c.l.b16 %v643
          %v923 = vunpack.c.h.b16 %v643
          %v924 = vunpack.c.l.b16 %v644
          %v925 = vunpack.c.h.b16 %v644
          %v926 = vunpack.c.l.b16 %v645
          %v927 = vunpack.c.h.b16 %v645
          %v928 = vunpack.c.l.b16 %v646
          %v929 = vunpack.c.h.b16 %v646
          %v930 = vunpack.c.l.b16 %v647
          %v931 = vunpack.c.h.b16 %v647
          %v932 = vunpack.c.l.b16 %v648
          %v933 = vunpack.c.h.b16 %v648
          %v934 = vunpack.c.l.b16 %v649
          %v935 = vunpack.c.h.b16 %v649
          %v936 = vunpack.c.l.b16 %v650
          %v937 = vunpack.c.h.b16 %v650
          %v938 = vunpack.c.l.b16 %v651
          %v939 = vunpack.c.h.b16 %v651
          %v940 = vunpack.c.l.b16 %v652
          %v941 = vunpack.c.h.b16 %v652
          %v942 = vunpack.c.l.b16 %v653
          %v943 = vunpack.c.h.b16 %v653
          %v944 = vunpack.c.l.b16 %v654
          %v945 = vunpack.c.h.b16 %v654
          %v946 = vunpack.c.l.b16 %v655
          %v947 = vunpack.c.h.b16 %v655
          %v948 = vunpack.c.l.b16 %v656
          %v949 = vunpack.c.h.b16 %v656
          %v950 = vunpack.c.l.b16 %v657
          %v951 = vunpack.c.h.b16 %v657
          %v952 = vunpack.c.l.b16 %v658
          %v953 = vunpack.c.h.b16 %v658
          %v954 = vunpack.c.l.b16 %v659
          %v955 = vunpack.c.h.b16 %v659
          %v956 = vunpack.c.l.b16 %v660
          %v957 = vunpack.c.h.b16 %v660
          %v958 = vunpack.c.l.b16 %v661
          %v959 = vunpack.c.h.b16 %v661
          %v960 = vunpack.c.l.b16 %v662
          %v961 = vunpack.c.h.b16 %v662
          %v962 = vunpack.c.l.b16 %v663
          %v963 = vunpack.c.h.b16 %v663
          %v964 = vunpack.c.l.b16 %v664
          %v965 = vunpack.c.h.b16 %v664
          %v966 = vunpack.c.l.b16 %v665
          %v967 = vunpack.c.h.b16 %v665
          %v968 = vunpack.c.l.b16 %v666
          %v969 = vunpack.c.h.b16 %v666
          %v970 = vunpack.c.l.b16 %v667
          %v971 = vunpack.c.h.b16 %v667
          %v972 = vunpack.c.l.b16 %v668
          %v973 = vunpack.c.h.b16 %v668
          %v974 = vunpack.c.l.b16 %v669
          %v975 = vunpack.c.h.b16 %v669
          %v976 = vunpack.c.l.b16 %v670
          %v977 = vunpack.c.h.b16 %v670
          %v978 = vunpack.c.l.b16 %v671
          %v979 = vunpack.c.h.b16 %v671
          %v980 = vunpack.c.l.b16 %v672
          %v981 = vunpack.c.h.b16 %v672
          %v982 = vunpack.c.l.b16 %v673
          %v983 = vunpack.c.h.b16 %v673
          %v984 = vunpack.c.l.b16 %v674
          %v985 = vunpack.c.h.b16 %v674
          %v986 = vunpack.c.l.b16 %v675
          %v987 = vunpack.c.h.b16 %v675
          %v988 = vunpack.c.l.b16 %v676
          %v989 = vunpack.c.h.b16 %v676
          %v990 = vunpack.c.l.b16 %v677
          %v991 = vunpack.c.h.b16 %v677
          %v992 = vunpack.c.l.b16 %v678
          %v993 = vunpack.c.h.b16 %v678
          %v994 = vunpack.c.l.b16 %v679
          %v995 = vunpack.c.h.b16 %v679
          %v996 = vunpack.c.l.b16 %v680
          %v997 = vunpack.c.h.b16 %v680
          %v998 = vunpack.c.l.b16 %v681
          %v999 = vunpack.c.h.b16 %v681
          %v1000 = vunpack.c.l.b16 %v682
          %v1001 = vunpack.c.h.b16 %v682
          %v1002 = vunpack.c.l.b16 %v683
          %v1003 = vunpack.c.h.b16 %v683
          %v1004 = vunpack.c.l.b16 %v684
          %v1005 = vunpack.c.h.b16 %v684
          %v1006 = vunpack.c.l.b16 %v685
          %v1007 = vunpack.c.h.b16 %v685
          %v1008 = vunpack.c.l.b16 %v686
          %v1009 = vunpack.c.h.b16 %v686
          %v1010 = vunpack.c.l.b16 %v687
          %v1011 = vunpack.c.h.b16 %v687
          %v1012 = vunpack.c.l.b16 %v688
          %v1013 = vunpack.c.h.b16 %v688
          %v1014 = vunpack.c.l.b16 %v689
          %v1015 = vunpack.c.h.b16 %v689
          %v1016 = vunpack.c.l.b16 %v690
          %v1017 = vunpack.c.h.b16 %v690
          %v1018 = vunpack.c.l.b16 %v691
          %v1019 = vunpack.c.h.b16 %v691
          %v1020 = vunpack.c.l.b16 %v692
          %v1021 = vunpack.c.h.b16 %v692
          %v1022 = vunpack.c.l.b16 %v693
          %v1023 = vunpack.c.h.b16 %v693
          %v1024 = vunpack.c.l.b16 %v694
          %v1025 = vunpack.c.h.b16 %v694
          %v1026 = vunpack.c.l.b16 %v695
          %v1027 = vunpack.c.h.b16 %v695
          %v1028 = vunpack.c.l.b16 %v696
          %v1029 = vunpack.c.h.b16 %v696
          %v1030 = vunpack.c.l.b16 %v697
          %v1031 = vunpack.c.h.b16 %v697
          %v1032 = vunpack.c.l.b16 %v698
          %v1033 = vunpack.c.h.b16 %v698
          %v1034 = vunpack.c.l.b16 %v699
          %v1035 = vunpack.c.h.b16 %v699
          %v1036 = vunpack.c.l.b16 %v700
          %v1037 = vunpack.c.h.b16 %v700
          %v1038 = vunpack.c.l.b16 %v701
          %v1039 = vunpack.c.h.b16 %v701
          %v1040 = vunpack.c.l.b16 %v702
          %v1041 = vunpack.c.h.b16 %v702
          %v1042 = vunpack.c.l.b16 %v703
          %v1043 = vunpack.c.h.b16 %v703
          %v1044 = vunpack.c.l.b16 %v704
          %v1045 = vunpack.c.h.b16 %v704
          %v1046 = vunpack.c.l.b16 %v705
          %v1047 = vunpack.c.h.b16 %v705
          %v1048 = vunpack.c.l.b16 %v706
          %v1049 = vunpack.c.h.b16 %v706
          %v1050 = vunpack.c.l.b16 %v707
          %v1051 = vunpack.c.h.b16 %v707
          %v1052 = vunpack.c.l.b16 %v708
          %v1053 = vunpack.c.h.b16 %v708
          %v1054 = vunpack.c.l.b16 %v709
          %v1055 = vunpack.c.h.b16 %v709
          %v1056 = vunpack.c.l.b16 %v710
          %v1057 = vunpack.c.h.b16 %v710
          %v1058 = vunpack.c.l.b16 %v711
          %v1059 = vunpack.c.h.b16 %v711
          %v1060 = vunpack.c.l.b16 %v712
          %v1061 = vunpack.c.h.b16 %v712
          %v1062 = vunpack.c.l.b16 %v713
          %v1063 = vunpack.c.h.b16 %v713
          %v1064 = vunpack.c.l.b16 %v714
          %v1065 = vunpack.c.h.b16 %v714
          %v1066 = vunpack.c.l.b16 %v715
          %v1067 = vunpack.c.h.b16 %v715
          %v1068 = vunpack.c.l.b16 %v716
          %v1069 = vunpack.c.h.b16 %v716
          %v1070 = vunpack.c.l.b16 %v717
          %v1071 = vunpack.c.h.b16 %v717
          %v1072 = vunpack.c.l.b16 %v718
          %v1073 = vunpack.c.h.b16 %v718
          %v1074 = vunpack.c.l.b16 %v719
          %v1075 = vunpack.c.h.b16 %v719
          %v1076 = vunpack.c.l.b16 %v720
          %v1077 = vunpack.c.h.b16 %v720
          %v1078 = vunpack.c.l.b16 %v721
          %v1079 = vunpack.c.h.b16 %v721
          %v1080 = vunpack.c.l.b16 %v722
          %v1081 = vunpack.c.h.b16 %v722
          %v1082 = vunpack.c.l.b16 %v723
          %v1083 = vunpack.c.h.b16 %v723
          %v1084 = vunpack.c.l.b16 %v724
          %v1085 = vunpack.c.h.b16 %v724
          %v1086 = vunpack.c.l.b16 %v725
          %v1087 = vunpack.c.h.b16 %v725
          %v1088 = vunpack.c.l.b16 %v726
          %v1089 = vunpack.c.h.b16 %v726
          %v1090 = vunpack.c.l.b16 %v727
          %v1091 = vunpack.c.h.b16 %v727
          %v1092 = vunpack.c.l.b16 %v728
          %v1093 = vunpack.c.h.b16 %v728
          %v1094 = vunpack.c.l.b16 %v729
          %v1095 = vunpack.c.h.b16 %v729
          %v1096 = vunpack.c.l.b16 %v730
          %v1097 = vunpack.c.h.b16 %v730
          %v1098 = vunpack.c.l.b16 %v731
          %v1099 = vunpack.c.h.b16 %v731
          %v1100 = vunpack.c.l.b16 %v732
          %v1101 = vunpack.c.h.b16 %v732
          %v1102 = vunpack.c.l.b16 %v733
          %v1103 = vunpack.c.h.b16 %v733
          %v1104 = vunpack.c.l.b16 %v734
          %v1105 = vunpack.c.h.b16 %v734
          %v1106 = vunpack.c.l.b16 %v735
          %v1107 = vunpack.c.h.b16 %v735
          %v1108 = vunpack.c.l.b16 %v736
          %v1109 = vunpack.c.h.b16 %v736
          %v1110 = vunpack.c.l.b16 %v737
          %v1111 = vunpack.c.h.b16 %v737
          %v1112 = vunpack.c.l.b16 %v738
          %v1113 = vunpack.c.h.b16 %v738
          %v1114 = vunpack.c.l.b16 %v739
          %v1115 = vunpack.c.h.b16 %v739
          %v1116 = vunpack.c.l.b16 %v740
          %v1117 = vunpack.c.h.b16 %v740
          %v1118 = vunpack.c.l.b16 %v741
          %v1119 = vunpack.c.h.b16 %v741
          %v1120 = vunpack.c.l.b16 %v742
          %v1121 = vunpack.c.h.b16 %v742
          %v1122 = vunpack.c.l.b16 %v743
          %v1123 = vunpack.c.h.b16 %v743
          %v1124 = vunpack.c.l.b16 %v744
          %v1125 = vunpack.c.h.b16 %v744
          %v1126 = vunpack.c.l.b16 %v745
          %v1127 = vunpack.c.h.b16 %v745
          %v1128 = vunpack.c.l.b16 %v746
          %v1129 = vunpack.c.h.b16 %v746
          %v1130 = vunpack.c.l.b16 %v747
          %v1131 = vunpack.c.h.b16 %v747
          %v1132 = vunpack.c.l.b16 %v748
          %v1133 = vunpack.c.h.b16 %v748
          %v1134 = vunpack.c.l.b16 %v749
          %v1135 = vunpack.c.h.b16 %v749
          %v1136 = vunpack.c.l.b16 %v750
          %v1137 = vunpack.c.h.b16 %v750
          %v1138 = vunpack.c.l.b16 %v751
          %v1139 = vunpack.c.h.b16 %v751
          %v1140 = vunpack.c.l.b16 %v752
          %v1141 = vunpack.c.h.b16 %v752
          %v1142 = vunpack.c.l.b16 %v753
          %v1143 = vunpack.c.h.b16 %v753
          %v1144 = vunpack.c.l.b16 %v754
          %v1145 = vunpack.c.h.b16 %v754
          %v1146 = vunpack.c.l.b16 %v755
          %v1147 = vunpack.c.h.b16 %v755
          %v1148 = vunpack.c.l.b16 %v756
          %v1149 = vunpack.c.h.b16 %v756
          %v1150 = vunpack.c.l.b16 %v757
          %v1151 = vunpack.c.h.b16 %v757
          %v1152 = vunpack.c.l.b16 %v758
          %v1153 = vunpack.c.h.b16 %v758
          %v1154 = vunpack.c.l.b16 %v759
          %v1155 = vunpack.c.h.b16 %v759
          %v1156 = vunpack.c.l.b16 %v760
          %v1157 = vunpack.c.h.b16 %v760
          %v1158 = vunpack.c.l.b16 %v761
          %v1159 = vunpack.c.h.b16 %v761
          %v1160 = vunpack.c.l.b16 %v762
          %v1161 = vunpack.c.h.b16 %v762
          %v1162 = vunpack.c.l.b16 %v763
          %v1163 = vunpack.c.h.b16 %v763
          %v1164 = vunpack.c.l.b16 %v764
          %v1165 = vunpack.c.h.b16 %v764
          %v1166 = vunpack.c.l.b16 %v765
          %v1167 = vunpack.c.h.b16 %v765
          %v1168 = vunpack.c.l.b16 %v766
          %v1169 = vunpack.c.h.b16 %v766
          %v1170 = vunpack.c.l.b16 %v767
          %v1171 = vunpack.c.h.b16 %v767
          %v1172 = vunpack.c.l.b16 %v768
          %v1173 = vunpack.c.h.b16 %v768
          %v1174 = vunpack.c.l.b16 %v769
          %v1175 = vunpack.c.h.b16 %v769
          %v1176 = vunpack.c.l.b16 %v770
          %v1177 = vunpack.c.h.b16 %v770
          %v1178 = vpack.c.b16 %v926, %v922
          %v1179 = vpack.c.b16 %v927, %v923
          %v1180 = vpack.c.b16 %v928, %v924
          %v1181 = vpack.c.b16 %v929, %v925
          %v1182 = vpack.c.b16 %v934, %v930
          %v1183 = vpack.c.b16 %v935, %v931
          %v1184 = vpack.c.b16 %v936, %v932
          %v1185 = vpack.c.b16 %v937, %v933
          %v1186 = vpack.c.b16 %v942, %v938
          %v1187 = vpack.c.b16 %v943, %v939
          %v1188 = vpack.c.b16 %v944, %v940
          %v1189 = vpack.c.b16 %v945, %v941
          %v1190 = vpack.c.b16 %v950, %v946
          %v1191 = vpack.c.b16 %v951, %v947
          %v1192 = vpack.c.b16 %v952, %v948
          %v1193 = vpack.c.b16 %v953, %v949
          %v1194 = vpack.c.b16 %v958, %v954
          %v1195 = vpack.c.b16 %v959, %v955
          %v1196 = vpack.c.b16 %v960, %v956
          %v1197 = vpack.c.b16 %v961, %v957
          %v1198 = vpack.c.b16 %v966, %v962
          %v1199 = vpack.c.b16 %v967, %v963
          %v1200 = vpack.c.b16 %v968, %v964
          %v1201 = vpack.c.b16 %v969, %v965
          %v1202 = vpack.c.b16 %v974, %v970
          %v1203 = vpack.c.b16 %v975, %v971
          %v1204 = vpack.c.b16 %v976, %v972
          %v1205 = vpack.c.b16 %v977, %v973
          %v1206 = vpack.c.b16 %v982, %v978
          %v1207 = vpack.c.b16 %v983, %v979
          %v1208 = vpack.c.b16 %v984, %v980
          %v1209 = vpack.c.b16 %v985, %v981
          %v1210 = vpack.c.b16 %v990, %v986
          %v1211 = vpack.c.b16 %v991, %v987
          %v1212 = vpack.c.b16 %v992, %v988
          %v1213 = vpack.c.b16 %v993, %v989
          %v1214 = vpack.c.b16 %v998, %v994
          %v1215 = vpack.c.b16 %v999, %v995
          %v1216 = vpack.c.b16 %v1000, %v996
          %v1217 = vpack.c.b16 %v1001, %v997
          %v1218 = vpack.c.b16 %v1006, %v1002
          %v1219 = vpack.c.b16 %v1007, %v1003
          %v1220 = vpack.c.b16 %v1008, %v1004
          %v1221 = vpack.c.b16 %v1009, %v1005
          %v1222 = vpack.c.b16 %v1014, %v1010
          %v1223 = vpack.c.b16 %v1015, %v1011
          %v1224 = vpack.c.b16 %v1016, %v1012
          %v1225 = vpack.c.b16 %v1017, %v1013
          %v1226 = vpack.c.b16 %v1022, %v1018
          %v1227 = vpack.c.b16 %v1023, %v1019
          %v1228 = vpack.c.b16 %v1024, %v1020
          %v1229 = vpack.c.b16 %v1025, %v1021
          %v1230 = vpack.c.b16 %v1030, %v1026
          %v1231 = vpack.c.b16 %v1031, %v1027
          %v1232 = vpack.c.b16 %v1032, %v1028
          %v1233 = vpack.c.b16 %v1033, %v1029
          %v1234 = vpack.c.b16 %v1038, %v1034
          %v1235 = vpack.c.b16 %v1039, %v1035
          %v1236 = vpack.c.b16 %v1040, %v1036
          %v1237 = vpack.c.b16 %v1041, %v1037
          %v1238 = vpack.c.b16 %v1046, %v1042
          %v1239 = vpack.c.b16 %v1047, %v1043
          %v1240 = vpack.c.b16 %v1048, %v1044
          %v1241 = vpack.c.b16 %v1049, %v1045
          %v1242 = vpack.c.b16 %v1054, %v1050
          %v1243 = vpack.c.b16 %v1055, %v1051
          %v1244 = vpack.c.b16 %v1056, %v1052
          %v1245 = vpack.c.b16 %v1057, %v1053
          %v1246 = vpack.c.b16 %v1062, %v1058
          %v1247 = vpack.c.b16 %v1063, %v1059
          %v1248 = vpack.c.b16 %v1064, %v1060
          %v1249 = vpack.c.b16 %v1065, %v1061
          %v1250 = vpack.c.b16 %v1070, %v1066
          %v1251 = vpack.c.b16 %v1071, %v1067
          %v1252 = vpack.c.b16 %v1072, %v1068
          %v1253 = vpack.c.b16 %v1073, %v1069
          %v1254 = vpack.c.b16 %v1078, %v1074
          %v1255 = vpack.c.b16 %v1079, %v1075
          %v1256 = vpack.c.b16 %v1080, %v1076
          %v1257 = vpack.c.b16 %v1081, %v1077
          %v1258 = vpack.c.b16 %v1086, %v1082
          %v1259 = vpack.c.b16 %v1087, %v1083
          %v1260 = vpack.c.b16 %v1088, %v1084
          %v1261 = vpack.c.b16 %v1089, %v1085
          %v1262 = vpack.c.b16 %v1094, %v1090
          %v1263 = vpack.c.b16 %v1095, %v1091
          %v1264 = vpack.c.b16 %v1096, %v1092
          %v1265 = vpack.c.b16 %v1097, %v1093
          %v1266 = vpack.c.b16 %v1102, %v1098
          %v1267 = vpack.c.b16 %v1103, %v1099
          %v1268 = vpack.c.b16 %v1104, %v1100
          %v1269 = vpack.c.b16 %v1105, %v1101
          %v1270 = vpack.c.b16 %v1110, %v1106
          %v1271 = vpack.c.b16 %v1111, %v1107
          %v1272 = vpack.c.b16 %v1112, %v1108
          %v1273 = vpack.c.b16 %v1113, %v1109
          %v1274 = vpack.c.b16 %v1118, %v1114
          %v1275 = vpack.c.b16 %v1119, %v1115
          %v1276 = vpack.c.b16 %v1120, %v1116
          %v1277 = vpack.c.b16 %v1121, %v1117
          %v1278 = vpack.c.b16 %v1126, %v1122
          %v1279 = vpack.c.b16 %v1127, %v1123
          %v1280 = vpack.c.b16 %v1128, %v1124
          %v1281 = vpack.c.b16 %v1129, %v1125
          %v1282 = vpack.c.b16 %v1134, %v1130
          %v1283 = vpack.c.b16 %v1135, %v1131
          %v1284 = vpack.c.b16 %v1136, %v1132
          %v1285 = vpack.c.b16 %v1137, %v1133
          %v1286 = vpack.c.b16 %v1142, %v1138
          %v1287 = vpack.c.b16 %v1143, %v1139
          %v1288 = vpack.c.b16 %v1144, %v1140
          %v1289 = vpack.c.b16 %v1145, %v1141
          %v1290 = vpack.c.b16 %v1150, %v1146
          %v1291 = vpack.c.b16 %v1151, %v1147
          %v1292 = vpack.c.b16 %v1152, %v1148
          %v1293 = vpack.c.b16 %v1153, %v1149
          %v1294 = vpack.c.b16 %v1158, %v1154
          %v1295 = vpack.c.b16 %v1159, %v1155
          %v1296 = vpack.c.b16 %v1160, %v1156
          %v1297 = vpack.c.b16 %v1161, %v1157
          %v1298 = vpack.c.b16 %v1166, %v1162
          %v1299 = vpack.c.b16 %v1167, %v1163
          %v1300 = vpack.c.b16 %v1168, %v1164
          %v1301 = vpack.c.b16 %v1169, %v1165
          %v1302 = vpack.c.b16 %v1174, %v1170
          %v1303 = vpack.c.b16 %v1175, %v1171
          %v1304 = vpack.c.b16 %v1176, %v1172
          %v1305 = vpack.c.b16 %v1177, %v1173
          %1434 = vmatprep.subr.bf16.mxu0 %v1179
          %1435 = vmatpush1.bf16.msra.mxu0 %v1178
          %1436 = vmatprep.subr.bf16.mxu0 %v1183
          %1437 = vmatpush1.bf16.msra.mxu0 %v1182
          %1438 = vmatprep.subr.bf16.mxu0 %v1187
          %1439 = vmatpush1.bf16.msra.mxu0 %v1186
          %1440 = vmatprep.subr.bf16.mxu0 %v1191
          %1441 = vmatpush1.bf16.msra.mxu0 %v1190
          %1442 = vmatprep.subr.bf16.mxu0 %v1195
          %1443 = vmatpush1.bf16.msra.mxu0 %v1194
          %1444 = vmatprep.subr.bf16.mxu0 %v1199
          %1445 = vmatpush1.bf16.msra.mxu0 %v1198
          %1446 = vmatprep.subr.bf16.mxu0 %v1203
          %1447 = vmatpush1.bf16.msra.mxu0 %v1202
          %1448 = vmatprep.subr.bf16.mxu0 %v1207
          %1449 = vmatpush1.bf16.msra.mxu0 %v1206
          %1450 = vmatprep.subr.bf16.mxu0 %v1211
          %1451 = vmatpush1.bf16.msra.mxu0 %v1210
          %1452 = vmatprep.subr.bf16.mxu0 %v1215
          %1453 = vmatpush1.bf16.msra.mxu0 %v1214
          %1454 = vmatprep.subr.bf16.mxu0 %v1219
          %1455 = vmatpush1.bf16.msra.mxu0 %v1218
          %1456 = vmatprep.subr.bf16.mxu0 %v1223
          %1457 = vmatpush1.bf16.msra.mxu0 %v1222
          %1458 = vmatprep.subr.bf16.mxu0 %v1227
          %1459 = vmatpush1.bf16.msra.mxu0 %v1226
          %1460 = vmatprep.subr.bf16.mxu0 %v1231
          %1461 = vmatpush1.bf16.msra.mxu0 %v1230
          %1462 = vmatprep.subr.bf16.mxu0 %v1235
          %1463 = vmatpush1.bf16.msra.mxu0 %v1234
          %1464 = vmatprep.subr.bf16.mxu0 %v1239
          %1465 = vmatpush1.bf16.msra.mxu0 %v1238
          %1466 = vmatprep.mubr.bf16.mxu0 %v640
          %1467 = vmatmul.mubr.bf16.gmra.mrb[0].mxu0 %v639
          %v1468 = vpop.f32.mrb[0].mxu0
          %v1469 = vadd.f32 %v777, %v1468
          %v1470 = vpop.f32.mrb[0].mxu0
          %v1471 = vadd.f32 %v781, %v1470
          %v1472 = vpop.f32.mrb[0].mxu0
          %v1473 = vpop.f32.mrb[0].mxu0
          %1474 = vdwg.mxu0
          %1475 = vmatprep.subr.bf16.mxu0 %v1243
          %1476 = vmatpush1.bf16.msra.mxu0 %v1242
          %1477 = vmatprep.subr.bf16.mxu0 %v1247
          %1478 = vmatpush1.bf16.msra.mxu0 %v1246
          %1479 = vmatprep.subr.bf16.mxu0 %v1251
          %1480 = vmatpush1.bf16.msra.mxu0 %v1250
          %1481 = vmatprep.subr.bf16.mxu0 %v1255
          %1482 = vmatpush1.bf16.msra.mxu0 %v1254
          %1483 = vmatprep.subr.bf16.mxu0 %v1259
          %1484 = vmatpush1.bf16.msra.mxu0 %v1258
          %1485 = vmatprep.subr.bf16.mxu0 %v1263
          %1486 = vmatpush1.bf16.msra.mxu0 %v1262
          %1487 = vmatprep.subr.bf16.mxu0 %v1267
          %1488 = vmatpush1.bf16.msra.mxu0 %v1266
          %1489 = vmatprep.subr.bf16.mxu0 %v1271
          %1490 = vmatpush1.bf16.msra.mxu0 %v1270
          %1491 = vmatprep.subr.bf16.mxu0 %v1275
          %1492 = vmatpush1.bf16.msra.mxu0 %v1274
          %1493 = vmatprep.subr.bf16.mxu0 %v1279
          %1494 = vmatpush1.bf16.msra.mxu0 %v1278
          %1495 = vmatprep.subr.bf16.mxu0 %v1283
          %1496 = vmatpush1.bf16.msra.mxu0 %v1282
          %1497 = vmatprep.subr.bf16.mxu0 %v1287
          %1498 = vmatpush1.bf16.msra.mxu0 %v1286
          %1499 = vmatprep.subr.bf16.mxu0 %v1291
          %1500 = vmatpush1.bf16.msra.mxu0 %v1290
          %1501 = vmatprep.subr.bf16.mxu0 %v1295
          %1502 = vmatpush1.bf16.msra.mxu0 %v1294
          %1503 = vmatprep.subr.bf16.mxu0 %v1299
          %1504 = vmatpush1.bf16.msra.mxu0 %v1298
          %1505 = vmatprep.subr.bf16.mxu0 %v1303
          %1506 = vmatpush1.bf16.msra.mxu0 %v1302
          %1507 = vmatprep.mubr.bf16.mxu0 %v642
          %1508 = vmatmul.mubr.bf16.gmra.mrb[0].mxu0 %v641
          %v1509 = vpop.f32.mrb[0].mxu0
          %v1510 = vadd.f32 %v1469, %v1509
          %v1511 = vpop.f32.mrb[0].mxu0
          %v1512 = vadd.f32 %v1471, %v1511
          %v1513 = vpop.f32.mrb[0].mxu0
          %v1514 = vpop.f32.mrb[0].mxu0
          %1515 = vdwg.mxu0
          %1516 = vmatprep.subr.bf16.mxu0 %v1181
          %1517 = vmatpush1.bf16.msra.mxu0 %v1180
          %1518 = vmatprep.subr.bf16.mxu0 %v1185
          %1519 = vmatpush1.bf16.msra.mxu0 %v1184
          %1520 = vmatprep.subr.bf16.mxu0 %v1189
          %1521 = vmatpush1.bf16.msra.mxu0 %v1188
          %1522 = vmatprep.subr.bf16.mxu0 %v1193
          %1523 = vmatpush1.bf16.msra.mxu0 %v1192
          %1524 = vmatprep.subr.bf16.mxu0 %v1197
          %1525 = vmatpush1.bf16.msra.mxu0 %v1196
          %1526 = vmatprep.subr.bf16.mxu0 %v1201
          %1527 = vmatpush1.bf16.msra.mxu0 %v1200
          %1528 = vmatprep.subr.bf16.mxu0 %v1205
          %1529 = vmatpush1.bf16.msra.mxu0 %v1204
          %1530 = vmatprep.subr.bf16.mxu0 %v1209
          %1531 = vmatpush1.bf16.msra.mxu0 %v1208
          %1532 = vmatprep.subr.bf16.mxu0 %v1213
          %1533 = vmatpush1.bf16.msra.mxu0 %v1212
          %1534 = vmatprep.subr.bf16.mxu0 %v1217
          %1535 = vmatpush1.bf16.msra.mxu0 %v1216
          %1536 = vmatprep.subr.bf16.mxu0 %v1221
          %1537 = vmatpush1.bf16.msra.mxu0 %v1220
          %1538 = vmatprep.subr.bf16.mxu0 %v1225
          %1539 = vmatpush1.bf16.msra.mxu0 %v1224
          %1540 = vmatprep.subr.bf16.mxu0 %v1229
          %1541 = vmatpush1.bf16.msra.mxu0 %v1228
          %1542 = vmatprep.subr.bf16.mxu0 %v1233
          %1543 = vmatpush1.bf16.msra.mxu0 %v1232
          %1544 = vmatprep.subr.bf16.mxu0 %v1237
          %1545 = vmatpush1.bf16.msra.mxu0 %v1236
          %1546 = vmatprep.subr.bf16.mxu0 %v1241
          %1547 = vmatpush1.bf16.msra.mxu0 %v1240
          %1548 = vmatprep.mubr.bf16.mxu0 %v640
          %1549 = vmatmul.mubr.bf16.gmra.mrb[0].mxu0 %v639
          %v1550 = vpop.f32.mrb[0].mxu0
          %v1551 = vadd.f32 %v785, %v1550
          %v1552 = vpop.f32.mrb[0].mxu0
          %v1553 = vadd.f32 %v789, %v1552
          %v1554 = vpop.f32.mrb[0].mxu0
          %v1555 = vpop.f32.mrb[0].mxu0
          %1556 = vdwg.mxu0
          %1557 = vmatprep.subr.bf16.mxu0 %v1245
          %1558 = vmatpush1.bf16.msra.mxu0 %v1244
          %1559 = vmatprep.subr.bf16.mxu0 %v1249
          %1560 = vmatpush1.bf16.msra.mxu0 %v1248
          %1561 = vmatprep.subr.bf16.mxu0 %v1253
          %1562 = vmatpush1.bf16.msra.mxu0 %v1252
          %1563 = vmatprep.subr.bf16.mxu0 %v1257
          %1564 = vmatpush1.bf16.msra.mxu0 %v1256
          %1565 = vmatprep.subr.bf16.mxu0 %v1261
          %1566 = vmatpush1.bf16.msra.mxu0 %v1260
          %1567 = vmatprep.subr.bf16.mxu0 %v1265
          %1568 = vmatpush1.bf16.msra.mxu0 %v1264
          %1569 = vmatprep.subr.bf16.mxu0 %v1269
          %1570 = vmatpush1.bf16.msra.mxu0 %v1268
          %1571 = vmatprep.subr.bf16.mxu0 %v1273
          %1572 = vmatpush1.bf16.msra.mxu0 %v1272
          %1573 = vmatprep.subr.bf16.mxu0 %v1277
          %1574 = vmatpush1.bf16.msra.mxu0 %v1276
          %1575 = vmatprep.subr.bf16.mxu0 %v1281
          %1576 = vmatpush1.bf16.msra.mxu0 %v1280
          %1577 = vmatprep.subr.bf16.mxu0 %v1285
          %1578 = vmatpush1.bf16.msra.mxu0 %v1284
          %1579 = vmatprep.subr.bf16.mxu0 %v1289
          %1580 = vmatpush1.bf16.msra.mxu0 %v1288
          %1581 = vmatprep.subr.bf16.mxu0 %v1293
          %1582 = vmatpush1.bf16.msra.mxu0 %v1292
          %1583 = vmatprep.subr.bf16.mxu0 %v1297
          %1584 = vmatpush1.bf16.msra.mxu0 %v1296
          %1585 = vmatprep.subr.bf16.mxu0 %v1301
          %1586 = vmatpush1.bf16.msra.mxu0 %v1300
          %1587 = vmatprep.subr.bf16.mxu0 %v1305
          %1588 = vmatpush1.bf16.msra.mxu0 %v1304
          %1589 = vmatprep.mubr.bf16.mxu0 %v642
          %1590 = vmatmul.mubr.bf16.gmra.mrb[0].mxu0 %v641
          %v1591 = vpop.f32.mrb[0].mxu0
          %v1592 = vadd.f32 %v1551, %v1591
          %v1593 = vpop.f32.mrb[0].mxu0
          %v1594 = vadd.f32 %v1553, %v1593
          %v1595 = vpop.f32.mrb[0].mxu0
          %v1596 = vpop.f32.mrb[0].mxu0
          %1597 = vdwg.mxu0
          %v1598 = vmax.f32 %v1510, 0.0
          %v1599 = vmax.f32 %v1512, 0.0
          %v1600 = vmax.f32 %v1592, 0.0
          %v1601 = vmax.f32 %v1594, 0.0
          %v1602 = vpack.c.bf16 %v1598, %v1598
          %v1603 = vpack.c.bf16 %v1599, %v1599
          %v1604 = vpack.c.bf16 %v1600, %v1600
          %v1605 = vpack.c.bf16 %v1601, %v1601
          %s1606 = scalar_lea.vmem [#allocation11], 1024
          %v1607 = vld [vmem:[%s1606] sm:$0xff]
          %v1608 = vld [vmem:[%s1606 + $0x8] sm:$0xff]
          %v1609 = vld [vmem:[%s1606 + $0x10] sm:$0xff]
          %v1610 = vld [vmem:[%s1606 + $0x18] sm:$0xff]
          %v1611 = vld [vmem:[%s1606 + $0x20] sm:$0xff]
          %v1612 = vld [vmem:[%s1606 + $0x28] sm:$0xff]
          %v1613 = vld [vmem:[%s1606 + $0x30] sm:$0xff]
          %v1614 = vld [vmem:[%s1606 + $0x38] sm:$0xff]
          %v1615 = vld [vmem:[%s1606 + $0x40] sm:$0xff]
          %v1616 = vld [vmem:[%s1606 + $0x48] sm:$0xff]
          %v1617 = vld [vmem:[%s1606 + $0x50] sm:$0xff]
          %v1618 = vld [vmem:[%s1606 + $0x58] sm:$0xff]
          %v1619 = vld [vmem:[%s1606 + $0x60] sm:$0xff]
          %v1620 = vld [vmem:[%s1606 + $0x68] sm:$0xff]
          %v1621 = vld [vmem:[%s1606 + $0x70] sm:$0xff]
          %v1622 = vld [vmem:[%s1606 + $0x78] sm:$0xff]
          %v1623 = vld [vmem:[%s1606 + $0x80] sm:$0xff]
          %v1624 = vld [vmem:[%s1606 + $0x88] sm:$0xff]
          %v1625 = vld [vmem:[%s1606 + $0x90] sm:$0xff]
          %v1626 = vld [vmem:[%s1606 + $0x98] sm:$0xff]
          %v1627 = vld [vmem:[%s1606 + $0xa0] sm:$0xff]
          %v1628 = vld [vmem:[%s1606 + $0xa8] sm:$0xff]
          %v1629 = vld [vmem:[%s1606 + $0xb0] sm:$0xff]
          %v1630 = vld [vmem:[%s1606 + $0xb8] sm:$0xff]
          %v1631 = vld [vmem:[%s1606 + $0xc0] sm:$0xff]
          %v1632 = vld [vmem:[%s1606 + $0xc8] sm:$0xff]
          %v1633 = vld [vmem:[%s1606 + $0xd0] sm:$0xff]
          %v1634 = vld [vmem:[%s1606 + $0xd8] sm:$0xff]
          %v1635 = vld [vmem:[%s1606 + $0xe0] sm:$0xff]
          %v1636 = vld [vmem:[%s1606 + $0xe8] sm:$0xff]
          %v1637 = vld [vmem:[%s1606 + $0xf0] sm:$0xff]
          %v1638 = vld [vmem:[%s1606 + $0xf8] sm:$0xff]
          %v1639 = vld [vmem:[%s1606 + $0x100] sm:$0xff]
          %v1640 = vld [vmem:[%s1606 + $0x108] sm:$0xff]
          %v1641 = vld [vmem:[%s1606 + $0x110] sm:$0xff]
          %v1642 = vld [vmem:[%s1606 + $0x118] sm:$0xff]
          %v1643 = vld [vmem:[%s1606 + $0x120] sm:$0xff]
          %v1644 = vld [vmem:[%s1606 + $0x128] sm:$0xff]
          %v1645 = vld [vmem:[%s1606 + $0x130] sm:$0xff]
          %v1646 = vld [vmem:[%s1606 + $0x138] sm:$0xff]
          %v1647 = vld [vmem:[%s1606 + $0x140] sm:$0xff]
          %v1648 = vld [vmem:[%s1606 + $0x148] sm:$0xff]
          %v1649 = vld [vmem:[%s1606 + $0x150] sm:$0xff]
          %v1650 = vld [vmem:[%s1606 + $0x158] sm:$0xff]
          %v1651 = vld [vmem:[%s1606 + $0x160] sm:$0xff]
          %v1652 = vld [vmem:[%s1606 + $0x168] sm:$0xff]
          %v1653 = vld [vmem:[%s1606 + $0x170] sm:$0xff]
          %v1654 = vld [vmem:[%s1606 + $0x178] sm:$0xff]
          %v1655 = vld [vmem:[%s1606 + $0x180] sm:$0xff]
          %v1656 = vld [vmem:[%s1606 + $0x188] sm:$0xff]
          %v1657 = vld [vmem:[%s1606 + $0x190] sm:$0xff]
          %v1658 = vld [vmem:[%s1606 + $0x198] sm:$0xff]
          %v1659 = vld [vmem:[%s1606 + $0x1a0] sm:$0xff]
          %v1660 = vld [vmem:[%s1606 + $0x1a8] sm:$0xff]
          %v1661 = vld [vmem:[%s1606 + $0x1b0] sm:$0xff]
          %v1662 = vld [vmem:[%s1606 + $0x1b8] sm:$0xff]
          %v1663 = vld [vmem:[%s1606 + $0x1c0] sm:$0xff]
          %v1664 = vld [vmem:[%s1606 + $0x1c8] sm:$0xff]
          %v1665 = vld [vmem:[%s1606 + $0x1d0] sm:$0xff]
          %v1666 = vld [vmem:[%s1606 + $0x1d8] sm:$0xff]
          %v1667 = vld [vmem:[%s1606 + $0x1e0] sm:$0xff]
          %v1668 = vld [vmem:[%s1606 + $0x1e8] sm:$0xff]
          %v1669 = vld [vmem:[%s1606 + $0x1f0] sm:$0xff]
          %v1670 = vld [vmem:[%s1606 + $0x1f8] sm:$0xff]
          %v1671 = vld [vmem:[%s1606 + $0x200] sm:$0xff]
          %v1672 = vld [vmem:[%s1606 + $0x208] sm:$0xff]
          %v1673 = vld [vmem:[%s1606 + $0x210] sm:$0xff]
          %v1674 = vld [vmem:[%s1606 + $0x218] sm:$0xff]
          %v1675 = vld [vmem:[%s1606 + $0x220] sm:$0xff]
          %v1676 = vld [vmem:[%s1606 + $0x228] sm:$0xff]
          %v1677 = vld [vmem:[%s1606 + $0x230] sm:$0xff]
          %v1678 = vld [vmem:[%s1606 + $0x238] sm:$0xff]
          %v1679 = vld [vmem:[%s1606 + $0x240] sm:$0xff]
          %v1680 = vld [vmem:[%s1606 + $0x248] sm:$0xff]
          %v1681 = vld [vmem:[%s1606 + $0x250] sm:$0xff]
          %v1682 = vld [vmem:[%s1606 + $0x258] sm:$0xff]
          %v1683 = vld [vmem:[%s1606 + $0x260] sm:$0xff]
          %v1684 = vld [vmem:[%s1606 + $0x268] sm:$0xff]
          %v1685 = vld [vmem:[%s1606 + $0x270] sm:$0xff]
          %v1686 = vld [vmem:[%s1606 + $0x278] sm:$0xff]
          %v1687 = vld [vmem:[%s1606 + $0x280] sm:$0xff]
          %v1688 = vld [vmem:[%s1606 + $0x288] sm:$0xff]
          %v1689 = vld [vmem:[%s1606 + $0x290] sm:$0xff]
          %v1690 = vld [vmem:[%s1606 + $0x298] sm:$0xff]
          %v1691 = vld [vmem:[%s1606 + $0x2a0] sm:$0xff]
          %v1692 = vld [vmem:[%s1606 + $0x2a8] sm:$0xff]
          %v1693 = vld [vmem:[%s1606 + $0x2b0] sm:$0xff]
          %v1694 = vld [vmem:[%s1606 + $0x2b8] sm:$0xff]
          %v1695 = vld [vmem:[%s1606 + $0x2c0] sm:$0xff]
          %v1696 = vld [vmem:[%s1606 + $0x2c8] sm:$0xff]
          %v1697 = vld [vmem:[%s1606 + $0x2d0] sm:$0xff]
          %v1698 = vld [vmem:[%s1606 + $0x2d8] sm:$0xff]
          %v1699 = vld [vmem:[%s1606 + $0x2e0] sm:$0xff]
          %v1700 = vld [vmem:[%s1606 + $0x2e8] sm:$0xff]
          %v1701 = vld [vmem:[%s1606 + $0x2f0] sm:$0xff]
          %v1702 = vld [vmem:[%s1606 + $0x2f8] sm:$0xff]
          %v1703 = vld [vmem:[%s1606 + $0x300] sm:$0xff]
          %v1704 = vld [vmem:[%s1606 + $0x308] sm:$0xff]
          %v1705 = vld [vmem:[%s1606 + $0x310] sm:$0xff]
          %v1706 = vld [vmem:[%s1606 + $0x318] sm:$0xff]
          %v1707 = vld [vmem:[%s1606 + $0x320] sm:$0xff]
          %v1708 = vld [vmem:[%s1606 + $0x328] sm:$0xff]
          %v1709 = vld [vmem:[%s1606 + $0x330] sm:$0xff]
          %v1710 = vld [vmem:[%s1606 + $0x338] sm:$0xff]
          %v1711 = vld [vmem:[%s1606 + $0x340] sm:$0xff]
          %v1712 = vld [vmem:[%s1606 + $0x348] sm:$0xff]
          %v1713 = vld [vmem:[%s1606 + $0x350] sm:$0xff]
          %v1714 = vld [vmem:[%s1606 + $0x358] sm:$0xff]
          %v1715 = vld [vmem:[%s1606 + $0x360] sm:$0xff]
          %v1716 = vld [vmem:[%s1606 + $0x368] sm:$0xff]
          %v1717 = vld [vmem:[%s1606 + $0x370] sm:$0xff]
          %v1718 = vld [vmem:[%s1606 + $0x378] sm:$0xff]
          %v1719 = vld [vmem:[%s1606 + $0x380] sm:$0xff]
          %v1720 = vld [vmem:[%s1606 + $0x388] sm:$0xff]
          %v1721 = vld [vmem:[%s1606 + $0x390] sm:$0xff]
          %v1722 = vld [vmem:[%s1606 + $0x398] sm:$0xff]
          %v1723 = vld [vmem:[%s1606 + $0x3a0] sm:$0xff]
          %v1724 = vld [vmem:[%s1606 + $0x3a8] sm:$0xff]
          %v1725 = vld [vmem:[%s1606 + $0x3b0] sm:$0xff]
          %v1726 = vld [vmem:[%s1606 + $0x3b8] sm:$0xff]
          %v1727 = vld [vmem:[%s1606 + $0x3c0] sm:$0xff]
          %v1728 = vld [vmem:[%s1606 + $0x3c8] sm:$0xff]
          %v1729 = vld [vmem:[%s1606 + $0x3d0] sm:$0xff]
          %v1730 = vld [vmem:[%s1606 + $0x3d8] sm:$0xff]
          %v1731 = vld [vmem:[%s1606 + $0x3e0] sm:$0xff]
          %v1732 = vld [vmem:[%s1606 + $0x3e8] sm:$0xff]
          %v1733 = vld [vmem:[%s1606 + $0x3f0] sm:$0xff]
          %v1734 = vld [vmem:[%s1606 + $0x3f8] sm:$0xff]
          %s1735 = scalar_lea.vmem [#allocation12], 2
          %v1736 = vld [vmem:[%s1735] ss:$4 sm:$0xf]
          %v1738 = vlaneseq
          %v1739 = vshrl.u32 %v1738, 7
          %v1740 = vsub.s32 0, %v1739
          %v1741 = vrot.slane %v1736, %v1740
          %v1742 = vlaneseq
          %v1743 = vshrl.u32 %v1742, 7
          %v1744 = vsub.s32 1, %v1743
          %v1745 = vrot.slane %v1736, %v1744
          %v1746 = vlaneseq
          %v1747 = vshrl.u32 %v1746, 7
          %v1748 = vsub.s32 2, %v1747
          %v1749 = vrot.slane %v1736, %v1748
          %v1750 = vlaneseq
          %v1751 = vshrl.u32 %v1750, 7
          %v1752 = vsub.s32 3, %v1751
          %v1753 = vrot.slane %v1736, %v1752
          %v1886 = vunpack.c.l.b16 %v1607
          %v1887 = vunpack.c.h.b16 %v1607
          %v1888 = vunpack.c.l.b16 %v1608
          %v1889 = vunpack.c.h.b16 %v1608
          %v1890 = vunpack.c.l.b16 %v1609
          %v1891 = vunpack.c.h.b16 %v1609
          %v1892 = vunpack.c.l.b16 %v1610
          %v1893 = vunpack.c.h.b16 %v1610
          %v1894 = vunpack.c.l.b16 %v1611
          %v1895 = vunpack.c.h.b16 %v1611
          %v1896 = vunpack.c.l.b16 %v1612
          %v1897 = vunpack.c.h.b16 %v1612
          %v1898 = vunpack.c.l.b16 %v1613
          %v1899 = vunpack.c.h.b16 %v1613
          %v1900 = vunpack.c.l.b16 %v1614
          %v1901 = vunpack.c.h.b16 %v1614
          %v1902 = vunpack.c.l.b16 %v1615
          %v1903 = vunpack.c.h.b16 %v1615
          %v1904 = vunpack.c.l.b16 %v1616
          %v1905 = vunpack.c.h.b16 %v1616
          %v1906 = vunpack.c.l.b16 %v1617
          %v1907 = vunpack.c.h.b16 %v1617
          %v1908 = vunpack.c.l.b16 %v1618
          %v1909 = vunpack.c.h.b16 %v1618
          %v1910 = vunpack.c.l.b16 %v1619
          %v1911 = vunpack.c.h.b16 %v1619
          %v1912 = vunpack.c.l.b16 %v1620
          %v1913 = vunpack.c.h.b16 %v1620
          %v1914 = vunpack.c.l.b16 %v1621
          %v1915 = vunpack.c.h.b16 %v1621
          %v1916 = vunpack.c.l.b16 %v1622
          %v1917 = vunpack.c.h.b16 %v1622
          %v1918 = vunpack.c.l.b16 %v1623
          %v1919 = vunpack.c.h.b16 %v1623
          %v1920 = vunpack.c.l.b16 %v1624
          %v1921 = vunpack.c.h.b16 %v1624
          %v1922 = vunpack.c.l.b16 %v1625
          %v1923 = vunpack.c.h.b16 %v1625
          %v1924 = vunpack.c.l.b16 %v1626
          %v1925 = vunpack.c.h.b16 %v1626
          %v1926 = vunpack.c.l.b16 %v1627
          %v1927 = vunpack.c.h.b16 %v1627
          %v1928 = vunpack.c.l.b16 %v1628
          %v1929 = vunpack.c.h.b16 %v1628
          %v1930 = vunpack.c.l.b16 %v1629
          %v1931 = vunpack.c.h.b16 %v1629
          %v1932 = vunpack.c.l.b16 %v1630
          %v1933 = vunpack.c.h.b16 %v1630
          %v1934 = vunpack.c.l.b16 %v1631
          %v1935 = vunpack.c.h.b16 %v1631
          %v1936 = vunpack.c.l.b16 %v1632
          %v1937 = vunpack.c.h.b16 %v1632
          %v1938 = vunpack.c.l.b16 %v1633
          %v1939 = vunpack.c.h.b16 %v1633
          %v1940 = vunpack.c.l.b16 %v1634
          %v1941 = vunpack.c.h.b16 %v1634
          %v1942 = vunpack.c.l.b16 %v1635
          %v1943 = vunpack.c.h.b16 %v1635
          %v1944 = vunpack.c.l.b16 %v1636
          %v1945 = vunpack.c.h.b16 %v1636
          %v1946 = vunpack.c.l.b16 %v1637
          %v1947 = vunpack.c.h.b16 %v1637
          %v1948 = vunpack.c.l.b16 %v1638
          %v1949 = vunpack.c.h.b16 %v1638
          %v1950 = vunpack.c.l.b16 %v1639
          %v1951 = vunpack.c.h.b16 %v1639
          %v1952 = vunpack.c.l.b16 %v1640
          %v1953 = vunpack.c.h.b16 %v1640
          %v1954 = vunpack.c.l.b16 %v1641
          %v1955 = vunpack.c.h.b16 %v1641
          %v1956 = vunpack.c.l.b16 %v1642
          %v1957 = vunpack.c.h.b16 %v1642
          %v1958 = vunpack.c.l.b16 %v1643
          %v1959 = vunpack.c.h.b16 %v1643
          %v1960 = vunpack.c.l.b16 %v1644
          %v1961 = vunpack.c.h.b16 %v1644
          %v1962 = vunpack.c.l.b16 %v1645
          %v1963 = vunpack.c.h.b16 %v1645
          %v1964 = vunpack.c.l.b16 %v1646
          %v1965 = vunpack.c.h.b16 %v1646
          %v1966 = vunpack.c.l.b16 %v1647
          %v1967 = vunpack.c.h.b16 %v1647
          %v1968 = vunpack.c.l.b16 %v1648
          %v1969 = vunpack.c.h.b16 %v1648
          %v1970 = vunpack.c.l.b16 %v1649
          %v1971 = vunpack.c.h.b16 %v1649
          %v1972 = vunpack.c.l.b16 %v1650
          %v1973 = vunpack.c.h.b16 %v1650
          %v1974 = vunpack.c.l.b16 %v1651
          %v1975 = vunpack.c.h.b16 %v1651
          %v1976 = vunpack.c.l.b16 %v1652
          %v1977 = vunpack.c.h.b16 %v1652
          %v1978 = vunpack.c.l.b16 %v1653
          %v1979 = vunpack.c.h.b16 %v1653
          %v1980 = vunpack.c.l.b16 %v1654
          %v1981 = vunpack.c.h.b16 %v1654
          %v1982 = vunpack.c.l.b16 %v1655
          %v1983 = vunpack.c.h.b16 %v1655
          %v1984 = vunpack.c.l.b16 %v1656
          %v1985 = vunpack.c.h.b16 %v1656
          %v1986 = vunpack.c.l.b16 %v1657
          %v1987 = vunpack.c.h.b16 %v1657
          %v1988 = vunpack.c.l.b16 %v1658
          %v1989 = vunpack.c.h.b16 %v1658
          %v1990 = vunpack.c.l.b16 %v1659
          %v1991 = vunpack.c.h.b16 %v1659
          %v1992 = vunpack.c.l.b16 %v1660
          %v1993 = vunpack.c.h.b16 %v1660
          %v1994 = vunpack.c.l.b16 %v1661
          %v1995 = vunpack.c.h.b16 %v1661
          %v1996 = vunpack.c.l.b16 %v1662
          %v1997 = vunpack.c.h.b16 %v1662
          %v1998 = vunpack.c.l.b16 %v1663
          %v1999 = vunpack.c.h.b16 %v1663
          %v2000 = vunpack.c.l.b16 %v1664
          %v2001 = vunpack.c.h.b16 %v1664
          %v2002 = vunpack.c.l.b16 %v1665
          %v2003 = vunpack.c.h.b16 %v1665
          %v2004 = vunpack.c.l.b16 %v1666
          %v2005 = vunpack.c.h.b16 %v1666
          %v2006 = vunpack.c.l.b16 %v1667
          %v2007 = vunpack.c.h.b16 %v1667
          %v2008 = vunpack.c.l.b16 %v1668
          %v2009 = vunpack.c.h.b16 %v1668
          %v2010 = vunpack.c.l.b16 %v1669
          %v2011 = vunpack.c.h.b16 %v1669
          %v2012 = vunpack.c.l.b16 %v1670
          %v2013 = vunpack.c.h.b16 %v1670
          %v2014 = vunpack.c.l.b16 %v1671
          %v2015 = vunpack.c.h.b16 %v1671
          %v2016 = vunpack.c.l.b16 %v1672
          %v2017 = vunpack.c.h.b16 %v1672
          %v2018 = vunpack.c.l.b16 %v1673
          %v2019 = vunpack.c.h.b16 %v1673
          %v2020 = vunpack.c.l.b16 %v1674
          %v2021 = vunpack.c.h.b16 %v1674
          %v2022 = vunpack.c.l.b16 %v1675
          %v2023 = vunpack.c.h.b16 %v1675
          %v2024 = vunpack.c.l.b16 %v1676
          %v2025 = vunpack.c.h.b16 %v1676
          %v2026 = vunpack.c.l.b16 %v1677
          %v2027 = vunpack.c.h.b16 %v1677
          %v2028 = vunpack.c.l.b16 %v1678
          %v2029 = vunpack.c.h.b16 %v1678
          %v2030 = vunpack.c.l.b16 %v1679
          %v2031 = vunpack.c.h.b16 %v1679
          %v2032 = vunpack.c.l.b16 %v1680
          %v2033 = vunpack.c.h.b16 %v1680
          %v2034 = vunpack.c.l.b16 %v1681
          %v2035 = vunpack.c.h.b16 %v1681
          %v2036 = vunpack.c.l.b16 %v1682
          %v2037 = vunpack.c.h.b16 %v1682
          %v2038 = vunpack.c.l.b16 %v1683
          %v2039 = vunpack.c.h.b16 %v1683
          %v2040 = vunpack.c.l.b16 %v1684
          %v2041 = vunpack.c.h.b16 %v1684
          %v2042 = vunpack.c.l.b16 %v1685
          %v2043 = vunpack.c.h.b16 %v1685
          %v2044 = vunpack.c.l.b16 %v1686
          %v2045 = vunpack.c.h.b16 %v1686
          %v2046 = vunpack.c.l.b16 %v1687
          %v2047 = vunpack.c.h.b16 %v1687
          %v2048 = vunpack.c.l.b16 %v1688
          %v2049 = vunpack.c.h.b16 %v1688
          %v2050 = vunpack.c.l.b16 %v1689
          %v2051 = vunpack.c.h.b16 %v1689
          %v2052 = vunpack.c.l.b16 %v1690
          %v2053 = vunpack.c.h.b16 %v1690
          %v2054 = vunpack.c.l.b16 %v1691
          %v2055 = vunpack.c.h.b16 %v1691
          %v2056 = vunpack.c.l.b16 %v1692
          %v2057 = vunpack.c.h.b16 %v1692
          %v2058 = vunpack.c.l.b16 %v1693
          %v2059 = vunpack.c.h.b16 %v1693
          %v2060 = vunpack.c.l.b16 %v1694
          %v2061 = vunpack.c.h.b16 %v1694
          %v2062 = vunpack.c.l.b16 %v1695
          %v2063 = vunpack.c.h.b16 %v1695
          %v2064 = vunpack.c.l.b16 %v1696
          %v2065 = vunpack.c.h.b16 %v1696
          %v2066 = vunpack.c.l.b16 %v1697
          %v2067 = vunpack.c.h.b16 %v1697
          %v2068 = vunpack.c.l.b16 %v1698
          %v2069 = vunpack.c.h.b16 %v1698
          %v2070 = vunpack.c.l.b16 %v1699
          %v2071 = vunpack.c.h.b16 %v1699
          %v2072 = vunpack.c.l.b16 %v1700
          %v2073 = vunpack.c.h.b16 %v1700
          %v2074 = vunpack.c.l.b16 %v1701
          %v2075 = vunpack.c.h.b16 %v1701
          %v2076 = vunpack.c.l.b16 %v1702
          %v2077 = vunpack.c.h.b16 %v1702
          %v2078 = vunpack.c.l.b16 %v1703
          %v2079 = vunpack.c.h.b16 %v1703
          %v2080 = vunpack.c.l.b16 %v1704
          %v2081 = vunpack.c.h.b16 %v1704
          %v2082 = vunpack.c.l.b16 %v1705
          %v2083 = vunpack.c.h.b16 %v1705
          %v2084 = vunpack.c.l.b16 %v1706
          %v2085 = vunpack.c.h.b16 %v1706
          %v2086 = vunpack.c.l.b16 %v1707
          %v2087 = vunpack.c.h.b16 %v1707
          %v2088 = vunpack.c.l.b16 %v1708
          %v2089 = vunpack.c.h.b16 %v1708
          %v2090 = vunpack.c.l.b16 %v1709
          %v2091 = vunpack.c.h.b16 %v1709
          %v2092 = vunpack.c.l.b16 %v1710
          %v2093 = vunpack.c.h.b16 %v1710
          %v2094 = vunpack.c.l.b16 %v1711
          %v2095 = vunpack.c.h.b16 %v1711
          %v2096 = vunpack.c.l.b16 %v1712
          %v2097 = vunpack.c.h.b16 %v1712
          %v2098 = vunpack.c.l.b16 %v1713
          %v2099 = vunpack.c.h.b16 %v1713
          %v2100 = vunpack.c.l.b16 %v1714
          %v2101 = vunpack.c.h.b16 %v1714
          %v2102 = vunpack.c.l.b16 %v1715
          %v2103 = vunpack.c.h.b16 %v1715
          %v2104 = vunpack.c.l.b16 %v1716
          %v2105 = vunpack.c.h.b16 %v1716
          %v2106 = vunpack.c.l.b16 %v1717
          %v2107 = vunpack.c.h.b16 %v1717
          %v2108 = vunpack.c.l.b16 %v1718
          %v2109 = vunpack.c.h.b16 %v1718
          %v2110 = vunpack.c.l.b16 %v1719
          %v2111 = vunpack.c.h.b16 %v1719
          %v2112 = vunpack.c.l.b16 %v1720
          %v2113 = vunpack.c.h.b16 %v1720
          %v2114 = vunpack.c.l.b16 %v1721
          %v2115 = vunpack.c.h.b16 %v1721
          %v2116 = vunpack.c.l.b16 %v1722
          %v2117 = vunpack.c.h.b16 %v1722
          %v2118 = vunpack.c.l.b16 %v1723
          %v2119 = vunpack.c.h.b16 %v1723
          %v2120 = vunpack.c.l.b16 %v1724
          %v2121 = vunpack.c.h.b16 %v1724
          %v2122 = vunpack.c.l.b16 %v1725
          %v2123 = vunpack.c.h.b16 %v1725
          %v2124 = vunpack.c.l.b16 %v1726
          %v2125 = vunpack.c.h.b16 %v1726
          %v2126 = vunpack.c.l.b16 %v1727
          %v2127 = vunpack.c.h.b16 %v1727
          %v2128 = vunpack.c.l.b16 %v1728
          %v2129 = vunpack.c.h.b16 %v1728
          %v2130 = vunpack.c.l.b16 %v1729
          %v2131 = vunpack.c.h.b16 %v1729
          %v2132 = vunpack.c.l.b16 %v1730
          %v2133 = vunpack.c.h.b16 %v1730
          %v2134 = vunpack.c.l.b16 %v1731
          %v2135 = vunpack.c.h.b16 %v1731
          %v2136 = vunpack.c.l.b16 %v1732
          %v2137 = vunpack.c.h.b16 %v1732
          %v2138 = vunpack.c.l.b16 %v1733
          %v2139 = vunpack.c.h.b16 %v1733
          %v2140 = vunpack.c.l.b16 %v1734
          %v2141 = vunpack.c.h.b16 %v1734
          %v2142 = vpack.c.b16 %v1890, %v1886
          %v2143 = vpack.c.b16 %v1891, %v1887
          %v2144 = vpack.c.b16 %v1892, %v1888
          %v2145 = vpack.c.b16 %v1893, %v1889
          %v2146 = vpack.c.b16 %v1898, %v1894
          %v2147 = vpack.c.b16 %v1899, %v1895
          %v2148 = vpack.c.b16 %v1900, %v1896
          %v2149 = vpack.c.b16 %v1901, %v1897
          %v2150 = vpack.c.b16 %v1906, %v1902
          %v2151 = vpack.c.b16 %v1907, %v1903
          %v2152 = vpack.c.b16 %v1908, %v1904
          %v2153 = vpack.c.b16 %v1909, %v1905
          %v2154 = vpack.c.b16 %v1914, %v1910
          %v2155 = vpack.c.b16 %v1915, %v1911
          %v2156 = vpack.c.b16 %v1916, %v1912
          %v2157 = vpack.c.b16 %v1917, %v1913
          %v2158 = vpack.c.b16 %v1922, %v1918
          %v2159 = vpack.c.b16 %v1923, %v1919
          %v2160 = vpack.c.b16 %v1924, %v1920
          %v2161 = vpack.c.b16 %v1925, %v1921
          %v2162 = vpack.c.b16 %v1930, %v1926
          %v2163 = vpack.c.b16 %v1931, %v1927
          %v2164 = vpack.c.b16 %v1932, %v1928
          %v2165 = vpack.c.b16 %v1933, %v1929
          %v2166 = vpack.c.b16 %v1938, %v1934
          %v2167 = vpack.c.b16 %v1939, %v1935
          %v2168 = vpack.c.b16 %v1940, %v1936
          %v2169 = vpack.c.b16 %v1941, %v1937
          %v2170 = vpack.c.b16 %v1946, %v1942
          %v2171 = vpack.c.b16 %v1947, %v1943
          %v2172 = vpack.c.b16 %v1948, %v1944
          %v2173 = vpack.c.b16 %v1949, %v1945
          %v2174 = vpack.c.b16 %v1954, %v1950
          %v2175 = vpack.c.b16 %v1955, %v1951
          %v2176 = vpack.c.b16 %v1956, %v1952
          %v2177 = vpack.c.b16 %v1957, %v1953
          %v2178 = vpack.c.b16 %v1962, %v1958
          %v2179 = vpack.c.b16 %v1963, %v1959
          %v2180 = vpack.c.b16 %v1964, %v1960
          %v2181 = vpack.c.b16 %v1965, %v1961
          %v2182 = vpack.c.b16 %v1970, %v1966
          %v2183 = vpack.c.b16 %v1971, %v1967
          %v2184 = vpack.c.b16 %v1972, %v1968
          %v2185 = vpack.c.b16 %v1973, %v1969
          %v2186 = vpack.c.b16 %v1978, %v1974
          %v2187 = vpack.c.b16 %v1979, %v1975
          %v2188 = vpack.c.b16 %v1980, %v1976
          %v2189 = vpack.c.b16 %v1981, %v1977
          %v2190 = vpack.c.b16 %v1986, %v1982
          %v2191 = vpack.c.b16 %v1987, %v1983
          %v2192 = vpack.c.b16 %v1988, %v1984
          %v2193 = vpack.c.b16 %v1989, %v1985
          %v2194 = vpack.c.b16 %v1994, %v1990
          %v2195 = vpack.c.b16 %v1995, %v1991
          %v2196 = vpack.c.b16 %v1996, %v1992
          %v2197 = vpack.c.b16 %v1997, %v1993
          %v2198 = vpack.c.b16 %v2002, %v1998
          %v2199 = vpack.c.b16 %v2003, %v1999
          %v2200 = vpack.c.b16 %v2004, %v2000
          %v2201 = vpack.c.b16 %v2005, %v2001
          %v2202 = vpack.c.b16 %v2010, %v2006
          %v2203 = vpack.c.b16 %v2011, %v2007
          %v2204 = vpack.c.b16 %v2012, %v2008
          %v2205 = vpack.c.b16 %v2013, %v2009
          %v2206 = vpack.c.b16 %v2018, %v2014
          %v2207 = vpack.c.b16 %v2019, %v2015
          %v2208 = vpack.c.b16 %v2020, %v2016
          %v2209 = vpack.c.b16 %v2021, %v2017
          %v2210 = vpack.c.b16 %v2026, %v2022
          %v2211 = vpack.c.b16 %v2027, %v2023
          %v2212 = vpack.c.b16 %v2028, %v2024
          %v2213 = vpack.c.b16 %v2029, %v2025
          %v2214 = vpack.c.b16 %v2034, %v2030
          %v2215 = vpack.c.b16 %v2035, %v2031
          %v2216 = vpack.c.b16 %v2036, %v2032
          %v2217 = vpack.c.b16 %v2037, %v2033
          %v2218 = vpack.c.b16 %v2042, %v2038
          %v2219 = vpack.c.b16 %v2043, %v2039
          %v2220 = vpack.c.b16 %v2044, %v2040
          %v2221 = vpack.c.b16 %v2045, %v2041
          %v2222 = vpack.c.b16 %v2050, %v2046
          %v2223 = vpack.c.b16 %v2051, %v2047
          %v2224 = vpack.c.b16 %v2052, %v2048
          %v2225 = vpack.c.b16 %v2053, %v2049
          %v2226 = vpack.c.b16 %v2058, %v2054
          %v2227 = vpack.c.b16 %v2059, %v2055
          %v2228 = vpack.c.b16 %v2060, %v2056
          %v2229 = vpack.c.b16 %v2061, %v2057
          %v2230 = vpack.c.b16 %v2066, %v2062
          %v2231 = vpack.c.b16 %v2067, %v2063
          %v2232 = vpack.c.b16 %v2068, %v2064
          %v2233 = vpack.c.b16 %v2069, %v2065
          %v2234 = vpack.c.b16 %v2074, %v2070
          %v2235 = vpack.c.b16 %v2075, %v2071
          %v2236 = vpack.c.b16 %v2076, %v2072
          %v2237 = vpack.c.b16 %v2077, %v2073
          %v2238 = vpack.c.b16 %v2082, %v2078
          %v2239 = vpack.c.b16 %v2083, %v2079
          %v2240 = vpack.c.b16 %v2084, %v2080
          %v2241 = vpack.c.b16 %v2085, %v2081
          %v2242 = vpack.c.b16 %v2090, %v2086
          %v2243 = vpack.c.b16 %v2091, %v2087
          %v2244 = vpack.c.b16 %v2092, %v2088
          %v2245 = vpack.c.b16 %v2093, %v2089
          %v2246 = vpack.c.b16 %v2098, %v2094
          %v2247 = vpack.c.b16 %v2099, %v2095
          %v2248 = vpack.c.b16 %v2100, %v2096
          %v2249 = vpack.c.b16 %v2101, %v2097
          %v2250 = vpack.c.b16 %v2106, %v2102
          %v2251 = vpack.c.b16 %v2107, %v2103
          %v2252 = vpack.c.b16 %v2108, %v2104
          %v2253 = vpack.c.b16 %v2109, %v2105
          %v2254 = vpack.c.b16 %v2114, %v2110
          %v2255 = vpack.c.b16 %v2115, %v2111
          %v2256 = vpack.c.b16 %v2116, %v2112
          %v2257 = vpack.c.b16 %v2117, %v2113
          %v2258 = vpack.c.b16 %v2122, %v2118
          %v2259 = vpack.c.b16 %v2123, %v2119
          %v2260 = vpack.c.b16 %v2124, %v2120
          %v2261 = vpack.c.b16 %v2125, %v2121
          %v2262 = vpack.c.b16 %v2130, %v2126
          %v2263 = vpack.c.b16 %v2131, %v2127
          %v2264 = vpack.c.b16 %v2132, %v2128
          %v2265 = vpack.c.b16 %v2133, %v2129
          %v2266 = vpack.c.b16 %v2138, %v2134
          %v2267 = vpack.c.b16 %v2139, %v2135
          %v2268 = vpack.c.b16 %v2140, %v2136
          %v2269 = vpack.c.b16 %v2141, %v2137
          %2398 = vmatprep.subr.bf16.mxu0 %v2143
          %2399 = vmatpush1.bf16.msra.mxu0 %v2142
          %2400 = vmatprep.subr.bf16.mxu0 %v2147
          %2401 = vmatpush1.bf16.msra.mxu0 %v2146
          %2402 = vmatprep.subr.bf16.mxu0 %v2151
          %2403 = vmatpush1.bf16.msra.mxu0 %v2150
          %2404 = vmatprep.subr.bf16.mxu0 %v2155
          %2405 = vmatpush1.bf16.msra.mxu0 %v2154
          %2406 = vmatprep.subr.bf16.mxu0 %v2159
          %2407 = vmatpush1.bf16.msra.mxu0 %v2158
          %2408 = vmatprep.subr.bf16.mxu0 %v2163
          %2409 = vmatpush1.bf16.msra.mxu0 %v2162
          %2410 = vmatprep.subr.bf16.mxu0 %v2167
          %2411 = vmatpush1.bf16.msra.mxu0 %v2166
          %2412 = vmatprep.subr.bf16.mxu0 %v2171
          %2413 = vmatpush1.bf16.msra.mxu0 %v2170
          %2414 = vmatprep.subr.bf16.mxu0 %v2175
          %2415 = vmatpush1.bf16.msra.mxu0 %v2174
          %2416 = vmatprep.subr.bf16.mxu0 %v2179
          %2417 = vmatpush1.bf16.msra.mxu0 %v2178
          %2418 = vmatprep.subr.bf16.mxu0 %v2183
          %2419 = vmatpush1.bf16.msra.mxu0 %v2182
          %2420 = vmatprep.subr.bf16.mxu0 %v2187
          %2421 = vmatpush1.bf16.msra.mxu0 %v2186
          %2422 = vmatprep.subr.bf16.mxu0 %v2191
          %2423 = vmatpush1.bf16.msra.mxu0 %v2190
          %2424 = vmatprep.subr.bf16.mxu0 %v2195
          %2425 = vmatpush1.bf16.msra.mxu0 %v2194
          %2426 = vmatprep.subr.bf16.mxu0 %v2199
          %2427 = vmatpush1.bf16.msra.mxu0 %v2198
          %2428 = vmatprep.subr.bf16.mxu0 %v2203
          %2429 = vmatpush1.bf16.msra.mxu0 %v2202
          %2430 = vmatprep.mubr.bf16.mxu0 %v1603
          %2431 = vmatmul.mubr.bf16.gmra.mrb[0].mxu0 %v1602
          %v2432 = vpop.f32.mrb[0].mxu0
          %v2433 = vadd.f32 %v1741, %v2432
          %v2434 = vpop.f32.mrb[0].mxu0
          %v2435 = vadd.f32 %v1745, %v2434
          %v2436 = vpop.f32.mrb[0].mxu0
          %v2437 = vpop.f32.mrb[0].mxu0
          %2438 = vdwg.mxu0
          %2439 = vmatprep.subr.bf16.mxu0 %v2207
          %2440 = vmatpush1.bf16.msra.mxu0 %v2206
          %2441 = vmatprep.subr.bf16.mxu0 %v2211
          %2442 = vmatpush1.bf16.msra.mxu0 %v2210
          %2443 = vmatprep.subr.bf16.mxu0 %v2215
          %2444 = vmatpush1.bf16.msra.mxu0 %v2214
          %2445 = vmatprep.subr.bf16.mxu0 %v2219
          %2446 = vmatpush1.bf16.msra.mxu0 %v2218
          %2447 = vmatprep.subr.bf16.mxu0 %v2223
          %2448 = vmatpush1.bf16.msra.mxu0 %v2222
          %2449 = vmatprep.subr.bf16.mxu0 %v2227
          %2450 = vmatpush1.bf16.msra.mxu0 %v2226
          %2451 = vmatprep.subr.bf16.mxu0 %v2231
          %2452 = vmatpush1.bf16.msra.mxu0 %v2230
          %2453 = vmatprep.subr.bf16.mxu0 %v2235
          %2454 = vmatpush1.bf16.msra.mxu0 %v2234
          %2455 = vmatprep.subr.bf16.mxu0 %v2239
          %2456 = vmatpush1.bf16.msra.mxu0 %v2238
          %2457 = vmatprep.subr.bf16.mxu0 %v2243
          %2458 = vmatpush1.bf16.msra.mxu0 %v2242
          %2459 = vmatprep.subr.bf16.mxu0 %v2247
          %2460 = vmatpush1.bf16.msra.mxu0 %v2246
          %2461 = vmatprep.subr.bf16.mxu0 %v2251
          %2462 = vmatpush1.bf16.msra.mxu0 %v2250
          %2463 = vmatprep.subr.bf16.mxu0 %v2255
          %2464 = vmatpush1.bf16.msra.mxu0 %v2254
          %2465 = vmatprep.subr.bf16.mxu0 %v2259
          %2466 = vmatpush1.bf16.msra.mxu0 %v2258
          %2467 = vmatprep.subr.bf16.mxu0 %v2263
          %2468 = vmatpush1.bf16.msra.mxu0 %v2262
          %2469 = vmatprep.subr.bf16.mxu0 %v2267
          %2470 = vmatpush1.bf16.msra.mxu0 %v2266
          %2471 = vmatprep.mubr.bf16.mxu0 %v1605
          %2472 = vmatmul.mubr.bf16.gmra.mrb[0].mxu0 %v1604
          %v2473 = vpop.f32.mrb[0].mxu0
          %v2474 = vadd.f32 %v2433, %v2473
          %v2475 = vpop.f32.mrb[0].mxu0
          %v2476 = vadd.f32 %v2435, %v2475
          %v2477 = vpop.f32.mrb[0].mxu0
          %v2478 = vpop.f32.mrb[0].mxu0
          %2479 = vdwg.mxu0
          %2480 = vmatprep.subr.bf16.mxu0 %v2145
          %2481 = vmatpush1.bf16.msra.mxu0 %v2144
          %2482 = vmatprep.subr.bf16.mxu0 %v2149
          %2483 = vmatpush1.bf16.msra.mxu0 %v2148
          %2484 = vmatprep.subr.bf16.mxu0 %v2153
          %2485 = vmatpush1.bf16.msra.mxu0 %v2152
          %2486 = vmatprep.subr.bf16.mxu0 %v2157
          %2487 = vmatpush1.bf16.msra.mxu0 %v2156
          %2488 = vmatprep.subr.bf16.mxu0 %v2161
          %2489 = vmatpush1.bf16.msra.mxu0 %v2160
          %2490 = vmatprep.subr.bf16.mxu0 %v2165
          %2491 = vmatpush1.bf16.msra.mxu0 %v2164
          %2492 = vmatprep.subr.bf16.mxu0 %v2169
          %2493 = vmatpush1.bf16.msra.mxu0 %v2168
          %2494 = vmatprep.subr.bf16.mxu0 %v2173
          %2495 = vmatpush1.bf16.msra.mxu0 %v2172
          %2496 = vmatprep.subr.bf16.mxu0 %v2177
          %2497 = vmatpush1.bf16.msra.mxu0 %v2176
          %2498 = vmatprep.subr.bf16.mxu0 %v2181
          %2499 = vmatpush1.bf16.msra.mxu0 %v2180
          %2500 = vmatprep.subr.bf16.mxu0 %v2185
          %2501 = vmatpush1.bf16.msra.mxu0 %v2184
          %2502 = vmatprep.subr.bf16.mxu0 %v2189
          %2503 = vmatpush1.bf16.msra.mxu0 %v2188
          %2504 = vmatprep.subr.bf16.mxu0 %v2193
          %2505 = vmatpush1.bf16.msra.mxu0 %v2192
          %2506 = vmatprep.subr.bf16.mxu0 %v2197
          %2507 = vmatpush1.bf16.msra.mxu0 %v2196
          %2508 = vmatprep.subr.bf16.mxu0 %v2201
          %2509 = vmatpush1.bf16.msra.mxu0 %v2200
          %2510 = vmatprep.subr.bf16.mxu0 %v2205
          %2511 = vmatpush1.bf16.msra.mxu0 %v2204
          %2512 = vmatprep.mubr.bf16.mxu0 %v1603
          %2513 = vmatmul.mubr.bf16.gmra.mrb[0].mxu0 %v1602
          %v2514 = vpop.f32.mrb[0].mxu0
          %v2515 = vadd.f32 %v1749, %v2514
          %v2516 = vpop.f32.mrb[0].mxu0
          %v2517 = vadd.f32 %v1753, %v2516
          %v2518 = vpop.f32.mrb[0].mxu0
          %v2519 = vpop.f32.mrb[0].mxu0
          %2520 = vdwg.mxu0
          %2521 = vmatprep.subr.bf16.mxu0 %v2209
          %2522 = vmatpush1.bf16.msra.mxu0 %v2208
          %2523 = vmatprep.subr.bf16.mxu0 %v2213
          %2524 = vmatpush1.bf16.msra.mxu0 %v2212
          %2525 = vmatprep.subr.bf16.mxu0 %v2217
          %2526 = vmatpush1.bf16.msra.mxu0 %v2216
          %2527 = vmatprep.subr.bf16.mxu0 %v2221
          %2528 = vmatpush1.bf16.msra.mxu0 %v2220
          %2529 = vmatprep.subr.bf16.mxu0 %v2225
          %2530 = vmatpush1.bf16.msra.mxu0 %v2224
          %2531 = vmatprep.subr.bf16.mxu0 %v2229
          %2532 = vmatpush1.bf16.msra.mxu0 %v2228
          %2533 = vmatprep.subr.bf16.mxu0 %v2233
          %2534 = vmatpush1.bf16.msra.mxu0 %v2232
          %2535 = vmatprep.subr.bf16.mxu0 %v2237
          %2536 = vmatpush1.bf16.msra.mxu0 %v2236
          %2537 = vmatprep.subr.bf16.mxu0 %v2241
          %2538 = vmatpush1.bf16.msra.mxu0 %v2240
          %2539 = vmatprep.subr.bf16.mxu0 %v2245
          %2540 = vmatpush1.bf16.msra.mxu0 %v2244
          %2541 = vmatprep.subr.bf16.mxu0 %v2249
          %2542 = vmatpush1.bf16.msra.mxu0 %v2248
          %2543 = vmatprep.subr.bf16.mxu0 %v2253
          %2544 = vmatpush1.bf16.msra.mxu0 %v2252
          %2545 = vmatprep.subr.bf16.mxu0 %v2257
          %2546 = vmatpush1.bf16.msra.mxu0 %v2256
          %2547 = vmatprep.subr.bf16.mxu0 %v2261
          %2548 = vmatpush1.bf16.msra.mxu0 %v2260
          %2549 = vmatprep.subr.bf16.mxu0 %v2265
          %2550 = vmatpush1.bf16.msra.mxu0 %v2264
          %2551 = vmatprep.subr.bf16.mxu0 %v2269
          %2552 = vmatpush1.bf16.msra.mxu0 %v2268
          %2553 = vmatprep.mubr.bf16.mxu0 %v1605
          %2554 = vmatmul.mubr.bf16.gmra.mrb[0].mxu0 %v1604
          %v2555 = vpop.f32.mrb[0].mxu0
          %v2556 = vadd.f32 %v2515, %v2555
          %v2557 = vpop.f32.mrb[0].mxu0
          %v2558 = vadd.f32 %v2517, %v2557
          %v2559 = vpop.f32.mrb[0].mxu0
          %v2560 = vpop.f32.mrb[0].mxu0
          %2561 = vdwg.mxu0
          %v2562 = vmax.f32 %v2474, 0.0
          %v2563 = vmax.f32 %v2476, 0.0
          %v2564 = vmax.f32 %v2556, 0.0
          %v2565 = vmax.f32 %v2558, 0.0
          %v2566 = vpack.c.bf16 %v2562, %v2562
          %v2567 = vpack.c.bf16 %v2563, %v2563
          %v2568 = vpack.c.bf16 %v2564, %v2564
          %v2569 = vpack.c.bf16 %v2565, %v2565
          %s2570 = scalar_lea.vmem [#allocation11], 2048
          %v2571 = vld [vmem:[%s2570] sm:$0xff]
          %v2572 = vld [vmem:[%s2570 + $0x8] sm:$0xff]
          %v2573 = vld [vmem:[%s2570 + $0x10] sm:$0xff]
          %v2574 = vld [vmem:[%s2570 + $0x18] sm:$0xff]
          %v2575 = vld [vmem:[%s2570 + $0x20] sm:$0xff]
          %v2576 = vld [vmem:[%s2570 + $0x28] sm:$0xff]
          %v2577 = vld [vmem:[%s2570 + $0x30] sm:$0xff]
          %v2578 = vld [vmem:[%s2570 + $0x38] sm:$0xff]
          %v2579 = vld [vmem:[%s2570 + $0x40] sm:$0xff]
          %v2580 = vld [vmem:[%s2570 + $0x48] sm:$0xff]
          %v2581 = vld [vmem:[%s2570 + $0x50] sm:$0xff]
          %v2582 = vld [vmem:[%s2570 + $0x58] sm:$0xff]
          %v2583 = vld [vmem:[%s2570 + $0x60] sm:$0xff]
          %v2584 = vld [vmem:[%s2570 + $0x68] sm:$0xff]
          %v2585 = vld [vmem:[%s2570 + $0x70] sm:$0xff]
          %v2586 = vld [vmem:[%s2570 + $0x78] sm:$0xff]
          %v2587 = vld [vmem:[%s2570 + $0x80] sm:$0xff]
          %v2588 = vld [vmem:[%s2570 + $0x88] sm:$0xff]
          %v2589 = vld [vmem:[%s2570 + $0x90] sm:$0xff]
          %v2590 = vld [vmem:[%s2570 + $0x98] sm:$0xff]
          %v2591 = vld [vmem:[%s2570 + $0xa0] sm:$0xff]
          %v2592 = vld [vmem:[%s2570 + $0xa8] sm:$0xff]
          %v2593 = vld [vmem:[%s2570 + $0xb0] sm:$0xff]
          %v2594 = vld [vmem:[%s2570 + $0xb8] sm:$0xff]
          %v2595 = vld [vmem:[%s2570 + $0xc0] sm:$0xff]
          %v2596 = vld [vmem:[%s2570 + $0xc8] sm:$0xff]
          %v2597 = vld [vmem:[%s2570 + $0xd0] sm:$0xff]
          %v2598 = vld [vmem:[%s2570 + $0xd8] sm:$0xff]
          %v2599 = vld [vmem:[%s2570 + $0xe0] sm:$0xff]
          %v2600 = vld [vmem:[%s2570 + $0xe8] sm:$0xff]
          %v2601 = vld [vmem:[%s2570 + $0xf0] sm:$0xff]
          %v2602 = vld [vmem:[%s2570 + $0xf8] sm:$0xff]
          %v2603 = vld [vmem:[%s2570 + $0x100] sm:$0xff]
          %v2604 = vld [vmem:[%s2570 + $0x108] sm:$0xff]
          %v2605 = vld [vmem:[%s2570 + $0x110] sm:$0xff]
          %v2606 = vld [vmem:[%s2570 + $0x118] sm:$0xff]
          %v2607 = vld [vmem:[%s2570 + $0x120] sm:$0xff]
          %v2608 = vld [vmem:[%s2570 + $0x128] sm:$0xff]
          %v2609 = vld [vmem:[%s2570 + $0x130] sm:$0xff]
          %v2610 = vld [vmem:[%s2570 + $0x138] sm:$0xff]
          %v2611 = vld [vmem:[%s2570 + $0x140] sm:$0xff]
          %v2612 = vld [vmem:[%s2570 + $0x148] sm:$0xff]
          %v2613 = vld [vmem:[%s2570 + $0x150] sm:$0xff]
          %v2614 = vld [vmem:[%s2570 + $0x158] sm:$0xff]
          %v2615 = vld [vmem:[%s2570 + $0x160] sm:$0xff]
          %v2616 = vld [vmem:[%s2570 + $0x168] sm:$0xff]
          %v2617 = vld [vmem:[%s2570 + $0x170] sm:$0xff]
          %v2618 = vld [vmem:[%s2570 + $0x178] sm:$0xff]
          %v2619 = vld [vmem:[%s2570 + $0x180] sm:$0xff]
          %v2620 = vld [vmem:[%s2570 + $0x188] sm:$0xff]
          %v2621 = vld [vmem:[%s2570 + $0x190] sm:$0xff]
          %v2622 = vld [vmem:[%s2570 + $0x198] sm:$0xff]
          %v2623 = vld [vmem:[%s2570 + $0x1a0] sm:$0xff]
          %v2624 = vld [vmem:[%s2570 + $0x1a8] sm:$0xff]
          %v2625 = vld [vmem:[%s2570 + $0x1b0] sm:$0xff]
          %v2626 = vld [vmem:[%s2570 + $0x1b8] sm:$0xff]
          %v2627 = vld [vmem:[%s2570 + $0x1c0] sm:$0xff]
          %v2628 = vld [vmem:[%s2570 + $0x1c8] sm:$0xff]
          %v2629 = vld [vmem:[%s2570 + $0x1d0] sm:$0xff]
          %v2630 = vld [vmem:[%s2570 + $0x1d8] sm:$0xff]
          %v2631 = vld [vmem:[%s2570 + $0x1e0] sm:$0xff]
          %v2632 = vld [vmem:[%s2570 + $0x1e8] sm:$0xff]
          %v2633 = vld [vmem:[%s2570 + $0x1f0] sm:$0xff]
          %v2634 = vld [vmem:[%s2570 + $0x1f8] sm:$0xff]
          %v2635 = vld [vmem:[%s2570 + $0x200] sm:$0xff]
          %v2636 = vld [vmem:[%s2570 + $0x208] sm:$0xff]
          %v2637 = vld [vmem:[%s2570 + $0x210] sm:$0xff]
          %v2638 = vld [vmem:[%s2570 + $0x218] sm:$0xff]
          %v2639 = vld [vmem:[%s2570 + $0x220] sm:$0xff]
          %v2640 = vld [vmem:[%s2570 + $0x228] sm:$0xff]
          %v2641 = vld [vmem:[%s2570 + $0x230] sm:$0xff]
          %v2642 = vld [vmem:[%s2570 + $0x238] sm:$0xff]
          %v2643 = vld [vmem:[%s2570 + $0x240] sm:$0xff]
          %v2644 = vld [vmem:[%s2570 + $0x248] sm:$0xff]
          %v2645 = vld [vmem:[%s2570 + $0x250] sm:$0xff]
          %v2646 = vld [vmem:[%s2570 + $0x258] sm:$0xff]
          %v2647 = vld [vmem:[%s2570 + $0x260] sm:$0xff]
          %v2648 = vld [vmem:[%s2570 + $0x268] sm:$0xff]
          %v2649 = vld [vmem:[%s2570 + $0x270] sm:$0xff]
          %v2650 = vld [vmem:[%s2570 + $0x278] sm:$0xff]
          %v2651 = vld [vmem:[%s2570 + $0x280] sm:$0xff]
          %v2652 = vld [vmem:[%s2570 + $0x288] sm:$0xff]
          %v2653 = vld [vmem:[%s2570 + $0x290] sm:$0xff]
          %v2654 = vld [vmem:[%s2570 + $0x298] sm:$0xff]
          %v2655 = vld [vmem:[%s2570 + $0x2a0] sm:$0xff]
          %v2656 = vld [vmem:[%s2570 + $0x2a8] sm:$0xff]
          %v2657 = vld [vmem:[%s2570 + $0x2b0] sm:$0xff]
          %v2658 = vld [vmem:[%s2570 + $0x2b8] sm:$0xff]
          %v2659 = vld [vmem:[%s2570 + $0x2c0] sm:$0xff]
          %v2660 = vld [vmem:[%s2570 + $0x2c8] sm:$0xff]
          %v2661 = vld [vmem:[%s2570 + $0x2d0] sm:$0xff]
          %v2662 = vld [vmem:[%s2570 + $0x2d8] sm:$0xff]
          %v2663 = vld [vmem:[%s2570 + $0x2e0] sm:$0xff]
          %v2664 = vld [vmem:[%s2570 + $0x2e8] sm:$0xff]
          %v2665 = vld [vmem:[%s2570 + $0x2f0] sm:$0xff]
          %v2666 = vld [vmem:[%s2570 + $0x2f8] sm:$0xff]
          %v2667 = vld [vmem:[%s2570 + $0x300] sm:$0xff]
          %v2668 = vld [vmem:[%s2570 + $0x308] sm:$0xff]
          %v2669 = vld [vmem:[%s2570 + $0x310] sm:$0xff]
          %v2670 = vld [vmem:[%s2570 + $0x318] sm:$0xff]
          %v2671 = vld [vmem:[%s2570 + $0x320] sm:$0xff]
          %v2672 = vld [vmem:[%s2570 + $0x328] sm:$0xff]
          %v2673 = vld [vmem:[%s2570 + $0x330] sm:$0xff]
          %v2674 = vld [vmem:[%s2570 + $0x338] sm:$0xff]
          %v2675 = vld [vmem:[%s2570 + $0x340] sm:$0xff]
          %v2676 = vld [vmem:[%s2570 + $0x348] sm:$0xff]
          %v2677 = vld [vmem:[%s2570 + $0x350] sm:$0xff]
          %v2678 = vld [vmem:[%s2570 + $0x358] sm:$0xff]
          %v2679 = vld [vmem:[%s2570 + $0x360] sm:$0xff]
          %v2680 = vld [vmem:[%s2570 + $0x368] sm:$0xff]
          %v2681 = vld [vmem:[%s2570 + $0x370] sm:$0xff]
          %v2682 = vld [vmem:[%s2570 + $0x378] sm:$0xff]
          %v2683 = vld [vmem:[%s2570 + $0x380] sm:$0xff]
          %v2684 = vld [vmem:[%s2570 + $0x388] sm:$0xff]
          %v2685 = vld [vmem:[%s2570 + $0x390] sm:$0xff]
          %v2686 = vld [vmem:[%s2570 + $0x398] sm:$0xff]
          %v2687 = vld [vmem:[%s2570 + $0x3a0] sm:$0xff]
          %v2688 = vld [vmem:[%s2570 + $0x3a8] sm:$0xff]
          %v2689 = vld [vmem:[%s2570 + $0x3b0] sm:$0xff]
          %v2690 = vld [vmem:[%s2570 + $0x3b8] sm:$0xff]
          %v2691 = vld [vmem:[%s2570 + $0x3c0] sm:$0xff]
          %v2692 = vld [vmem:[%s2570 + $0x3c8] sm:$0xff]
          %v2693 = vld [vmem:[%s2570 + $0x3d0] sm:$0xff]
          %v2694 = vld [vmem:[%s2570 + $0x3d8] sm:$0xff]
          %v2695 = vld [vmem:[%s2570 + $0x3e0] sm:$0xff]
          %v2696 = vld [vmem:[%s2570 + $0x3e8] sm:$0xff]
          %v2697 = vld [vmem:[%s2570 + $0x3f0] sm:$0xff]
          %v2698 = vld [vmem:[%s2570 + $0x3f8] sm:$0xff]
          %s2699 = scalar_lea.vmem [#allocation12], 3
          %v2700 = vld [vmem:[%s2699] ss:$4 sm:$0xf]
          %v2702 = vlaneseq
          %v2703 = vshrl.u32 %v2702, 7
          %v2704 = vsub.s32 0, %v2703
          %v2705 = vrot.slane %v2700, %v2704
          %v2706 = vlaneseq
          %v2707 = vshrl.u32 %v2706, 7
          %v2708 = vsub.s32 1, %v2707
          %v2709 = vrot.slane %v2700, %v2708
          %v2710 = vlaneseq
          %v2711 = vshrl.u32 %v2710, 7
          %v2712 = vsub.s32 2, %v2711
          %v2713 = vrot.slane %v2700, %v2712
          %v2714 = vlaneseq
          %v2715 = vshrl.u32 %v2714, 7
          %v2716 = vsub.s32 3, %v2715
          %v2717 = vrot.slane %v2700, %v2716
          %v2850 = vunpack.c.l.b16 %v2571
          %v2851 = vunpack.c.h.b16 %v2571
          %v2852 = vunpack.c.l.b16 %v2572
          %v2853 = vunpack.c.h.b16 %v2572
          %v2854 = vunpack.c.l.b16 %v2573
          %v2855 = vunpack.c.h.b16 %v2573
          %v2856 = vunpack.c.l.b16 %v2574
          %v2857 = vunpack.c.h.b16 %v2574
          %v2858 = vunpack.c.l.b16 %v2575
          %v2859 = vunpack.c.h.b16 %v2575
          %v2860 = vunpack.c.l.b16 %v2576
          %v2861 = vunpack.c.h.b16 %v2576
          %v2862 = vunpack.c.l.b16 %v2577
          %v2863 = vunpack.c.h.b16 %v2577
          %v2864 = vunpack.c.l.b16 %v2578
          %v2865 = vunpack.c.h.b16 %v2578
          %v2866 = vunpack.c.l.b16 %v2579
          %v2867 = vunpack.c.h.b16 %v2579
          %v2868 = vunpack.c.l.b16 %v2580
          %v2869 = vunpack.c.h.b16 %v2580
          %v2870 = vunpack.c.l.b16 %v2581
          %v2871 = vunpack.c.h.b16 %v2581
          %v2872 = vunpack.c.l.b16 %v2582
          %v2873 = vunpack.c.h.b16 %v2582
          %v2874 = vunpack.c.l.b16 %v2583
          %v2875 = vunpack.c.h.b16 %v2583
          %v2876 = vunpack.c.l.b16 %v2584
          %v2877 = vunpack.c.h.b16 %v2584
          %v2878 = vunpack.c.l.b16 %v2585
          %v2879 = vunpack.c.h.b16 %v2585
          %v2880 = vunpack.c.l.b16 %v2586
          %v2881 = vunpack.c.h.b16 %v2586
          %v2882 = vunpack.c.l.b16 %v2587
          %v2883 = vunpack.c.h.b16 %v2587
          %v2884 = vunpack.c.l.b16 %v2588
          %v2885 = vunpack.c.h.b16 %v2588
          %v2886 = vunpack.c.l.b16 %v2589
          %v2887 = vunpack.c.h.b16 %v2589
          %v2888 = vunpack.c.l.b16 %v2590
          %v2889 = vunpack.c.h.b16 %v2590
          %v2890 = vunpack.c.l.b16 %v2591
          %v2891 = vunpack.c.h.b16 %v2591
          %v2892 = vunpack.c.l.b16 %v2592
          %v2893 = vunpack.c.h.b16 %v2592
          %v2894 = vunpack.c.l.b16 %v2593
          %v2895 = vunpack.c.h.b16 %v2593
          %v2896 = vunpack.c.l.b16 %v2594
          %v2897 = vunpack.c.h.b16 %v2594
          %v2898 = vunpack.c.l.b16 %v2595
          %v2899 = vunpack.c.h.b16 %v2595
          %v2900 = vunpack.c.l.b16 %v2596
          %v2901 = vunpack.c.h.b16 %v2596
          %v2902 = vunpack.c.l.b16 %v2597
          %v2903 = vunpack.c.h.b16 %v2597
          %v2904 = vunpack.c.l.b16 %v2598
          %v2905 = vunpack.c.h.b16 %v2598
          %v2906 = vunpack.c.l.b16 %v2599
          %v2907 = vunpack.c.h.b16 %v2599
          %v2908 = vunpack.c.l.b16 %v2600
          %v2909 = vunpack.c.h.b16 %v2600
          %v2910 = vunpack.c.l.b16 %v2601
          %v2911 = vunpack.c.h.b16 %v2601
          %v2912 = vunpack.c.l.b16 %v2602
          %v2913 = vunpack.c.h.b16 %v2602
          %v2914 = vunpack.c.l.b16 %v2603
          %v2915 = vunpack.c.h.b16 %v2603
          %v2916 = vunpack.c.l.b16 %v2604
          %v2917 = vunpack.c.h.b16 %v2604
          %v2918 = vunpack.c.l.b16 %v2605
          %v2919 = vunpack.c.h.b16 %v2605
          %v2920 = vunpack.c.l.b16 %v2606
          %v2921 = vunpack.c.h.b16 %v2606
          %v2922 = vunpack.c.l.b16 %v2607
          %v2923 = vunpack.c.h.b16 %v2607
          %v2924 = vunpack.c.l.b16 %v2608
          %v2925 = vunpack.c.h.b16 %v2608
          %v2926 = vunpack.c.l.b16 %v2609
          %v2927 = vunpack.c.h.b16 %v2609
          %v2928 = vunpack.c.l.b16 %v2610
          %v2929 = vunpack.c.h.b16 %v2610
          %v2930 = vunpack.c.l.b16 %v2611
          %v2931 = vunpack.c.h.b16 %v2611
          %v2932 = vunpack.c.l.b16 %v2612
          %v2933 = vunpack.c.h.b16 %v2612
          %v2934 = vunpack.c.l.b16 %v2613
          %v2935 = vunpack.c.h.b16 %v2613
          %v2936 = vunpack.c.l.b16 %v2614
          %v2937 = vunpack.c.h.b16 %v2614
          %v2938 = vunpack.c.l.b16 %v2615
          %v2939 = vunpack.c.h.b16 %v2615
          %v2940 = vunpack.c.l.b16 %v2616
          %v2941 = vunpack.c.h.b16 %v2616
          %v2942 = vunpack.c.l.b16 %v2617
          %v2943 = vunpack.c.h.b16 %v2617
          %v2944 = vunpack.c.l.b16 %v2618
          %v2945 = vunpack.c.h.b16 %v2618
          %v2946 = vunpack.c.l.b16 %v2619
          %v2947 = vunpack.c.h.b16 %v2619
          %v2948 = vunpack.c.l.b16 %v2620
          %v2949 = vunpack.c.h.b16 %v2620
          %v2950 = vunpack.c.l.b16 %v2621
          %v2951 = vunpack.c.h.b16 %v2621
          %v2952 = vunpack.c.l.b16 %v2622
          %v2953 = vunpack.c.h.b16 %v2622
          %v2954 = vunpack.c.l.b16 %v2623
          %v2955 = vunpack.c.h.b16 %v2623
          %v2956 = vunpack.c.l.b16 %v2624
          %v2957 = vunpack.c.h.b16 %v2624
          %v2958 = vunpack.c.l.b16 %v2625
          %v2959 = vunpack.c.h.b16 %v2625
          %v2960 = vunpack.c.l.b16 %v2626
          %v2961 = vunpack.c.h.b16 %v2626
          %v2962 = vunpack.c.l.b16 %v2627
          %v2963 = vunpack.c.h.b16 %v2627
          %v2964 = vunpack.c.l.b16 %v2628
          %v2965 = vunpack.c.h.b16 %v2628
          %v2966 = vunpack.c.l.b16 %v2629
          %v2967 = vunpack.c.h.b16 %v2629
          %v2968 = vunpack.c.l.b16 %v2630
          %v2969 = vunpack.c.h.b16 %v2630
          %v2970 = vunpack.c.l.b16 %v2631
          %v2971 = vunpack.c.h.b16 %v2631
          %v2972 = vunpack.c.l.b16 %v2632
          %v2973 = vunpack.c.h.b16 %v2632
          %v2974 = vunpack.c.l.b16 %v2633
          %v2975 = vunpack.c.h.b16 %v2633
          %v2976 = vunpack.c.l.b16 %v2634
          %v2977 = vunpack.c.h.b16 %v2634
          %v2978 = vunpack.c.l.b16 %v2635
          %v2979 = vunpack.c.h.b16 %v2635
          %v2980 = vunpack.c.l.b16 %v2636
          %v2981 = vunpack.c.h.b16 %v2636
          %v2982 = vunpack.c.l.b16 %v2637
          %v2983 = vunpack.c.h.b16 %v2637
          %v2984 = vunpack.c.l.b16 %v2638
          %v2985 = vunpack.c.h.b16 %v2638
          %v2986 = vunpack.c.l.b16 %v2639
          %v2987 = vunpack.c.h.b16 %v2639
          %v2988 = vunpack.c.l.b16 %v2640
          %v2989 = vunpack.c.h.b16 %v2640
          %v2990 = vunpack.c.l.b16 %v2641
          %v2991 = vunpack.c.h.b16 %v2641
          %v2992 = vunpack.c.l.b16 %v2642
          %v2993 = vunpack.c.h.b16 %v2642
          %v2994 = vunpack.c.l.b16 %v2643
          %v2995 = vunpack.c.h.b16 %v2643
          %v2996 = vunpack.c.l.b16 %v2644
          %v2997 = vunpack.c.h.b16 %v2644
          %v2998 = vunpack.c.l.b16 %v2645
          %v2999 = vunpack.c.h.b16 %v2645
          %v3000 = vunpack.c.l.b16 %v2646
          %v3001 = vunpack.c.h.b16 %v2646
          %v3002 = vunpack.c.l.b16 %v2647
          %v3003 = vunpack.c.h.b16 %v2647
          %v3004 = vunpack.c.l.b16 %v2648
          %v3005 = vunpack.c.h.b16 %v2648
          %v3006 = vunpack.c.l.b16 %v2649
          %v3007 = vunpack.c.h.b16 %v2649
          %v3008 = vunpack.c.l.b16 %v2650
          %v3009 = vunpack.c.h.b16 %v2650
          %v3010 = vunpack.c.l.b16 %v2651
          %v3011 = vunpack.c.h.b16 %v2651
          %v3012 = vunpack.c.l.b16 %v2652
          %v3013 = vunpack.c.h.b16 %v2652
          %v3014 = vunpack.c.l.b16 %v2653
          %v3015 = vunpack.c.h.b16 %v2653
          %v3016 = vunpack.c.l.b16 %v2654
          %v3017 = vunpack.c.h.b16 %v2654
          %v3018 = vunpack.c.l.b16 %v2655
          %v3019 = vunpack.c.h.b16 %v2655
          %v3020 = vunpack.c.l.b16 %v2656
          %v3021 = vunpack.c.h.b16 %v2656
          %v3022 = vunpack.c.l.b16 %v2657
          %v3023 = vunpack.c.h.b16 %v2657
          %v3024 = vunpack.c.l.b16 %v2658
          %v3025 = vunpack.c.h.b16 %v2658
          %v3026 = vunpack.c.l.b16 %v2659
          %v3027 = vunpack.c.h.b16 %v2659
          %v3028 = vunpack.c.l.b16 %v2660
          %v3029 = vunpack.c.h.b16 %v2660
          %v3030 = vunpack.c.l.b16 %v2661
          %v3031 = vunpack.c.h.b16 %v2661
          %v3032 = vunpack.c.l.b16 %v2662
          %v3033 = vunpack.c.h.b16 %v2662
          %v3034 = vunpack.c.l.b16 %v2663
          %v3035 = vunpack.c.h.b16 %v2663
          %v3036 = vunpack.c.l.b16 %v2664
          %v3037 = vunpack.c.h.b16 %v2664
          %v3038 = vunpack.c.l.b16 %v2665
          %v3039 = vunpack.c.h.b16 %v2665
          %v3040 = vunpack.c.l.b16 %v2666
          %v3041 = vunpack.c.h.b16 %v2666
          %v3042 = vunpack.c.l.b16 %v2667
          %v3043 = vunpack.c.h.b16 %v2667
          %v3044 = vunpack.c.l.b16 %v2668
          %v3045 = vunpack.c.h.b16 %v2668
          %v3046 = vunpack.c.l.b16 %v2669
          %v3047 = vunpack.c.h.b16 %v2669
          %v3048 = vunpack.c.l.b16 %v2670
          %v3049 = vunpack.c.h.b16 %v2670
          %v3050 = vunpack.c.l.b16 %v2671
          %v3051 = vunpack.c.h.b16 %v2671
          %v3052 = vunpack.c.l.b16 %v2672
          %v3053 = vunpack.c.h.b16 %v2672
          %v3054 = vunpack.c.l.b16 %v2673
          %v3055 = vunpack.c.h.b16 %v2673
          %v3056 = vunpack.c.l.b16 %v2674
          %v3057 = vunpack.c.h.b16 %v2674
          %v3058 = vunpack.c.l.b16 %v2675
          %v3059 = vunpack.c.h.b16 %v2675
          %v3060 = vunpack.c.l.b16 %v2676
          %v3061 = vunpack.c.h.b16 %v2676
          %v3062 = vunpack.c.l.b16 %v2677
          %v3063 = vunpack.c.h.b16 %v2677
          %v3064 = vunpack.c.l.b16 %v2678
          %v3065 = vunpack.c.h.b16 %v2678
          %v3066 = vunpack.c.l.b16 %v2679
          %v3067 = vunpack.c.h.b16 %v2679
          %v3068 = vunpack.c.l.b16 %v2680
          %v3069 = vunpack.c.h.b16 %v2680
          %v3070 = vunpack.c.l.b16 %v2681
          %v3071 = vunpack.c.h.b16 %v2681
          %v3072 = vunpack.c.l.b16 %v2682
          %v3073 = vunpack.c.h.b16 %v2682
          %v3074 = vunpack.c.l.b16 %v2683
          %v3075 = vunpack.c.h.b16 %v2683
          %v3076 = vunpack.c.l.b16 %v2684
          %v3077 = vunpack.c.h.b16 %v2684
          %v3078 = vunpack.c.l.b16 %v2685
          %v3079 = vunpack.c.h.b16 %v2685
          %v3080 = vunpack.c.l.b16 %v2686
          %v3081 = vunpack.c.h.b16 %v2686
          %v3082 = vunpack.c.l.b16 %v2687
          %v3083 = vunpack.c.h.b16 %v2687
          %v3084 = vunpack.c.l.b16 %v2688
          %v3085 = vunpack.c.h.b16 %v2688
          %v3086 = vunpack.c.l.b16 %v2689
          %v3087 = vunpack.c.h.b16 %v2689
          %v3088 = vunpack.c.l.b16 %v2690
          %v3089 = vunpack.c.h.b16 %v2690
          %v3090 = vunpack.c.l.b16 %v2691
          %v3091 = vunpack.c.h.b16 %v2691
          %v3092 = vunpack.c.l.b16 %v2692
          %v3093 = vunpack.c.h.b16 %v2692
          %v3094 = vunpack.c.l.b16 %v2693
          %v3095 = vunpack.c.h.b16 %v2693
          %v3096 = vunpack.c.l.b16 %v2694
          %v3097 = vunpack.c.h.b16 %v2694
          %v3098 = vunpack.c.l.b16 %v2695
          %v3099 = vunpack.c.h.b16 %v2695
          %v3100 = vunpack.c.l.b16 %v2696
          %v3101 = vunpack.c.h.b16 %v2696
          %v3102 = vunpack.c.l.b16 %v2697
          %v3103 = vunpack.c.h.b16 %v2697
          %v3104 = vunpack.c.l.b16 %v2698
          %v3105 = vunpack.c.h.b16 %v2698
          %v3106 = vpack.c.b16 %v2854, %v2850
          %v3107 = vpack.c.b16 %v2855, %v2851
          %v3108 = vpack.c.b16 %v2856, %v2852
          %v3109 = vpack.c.b16 %v2857, %v2853
          %v3110 = vpack.c.b16 %v2862, %v2858
          %v3111 = vpack.c.b16 %v2863, %v2859
          %v3112 = vpack.c.b16 %v2864, %v2860
          %v3113 = vpack.c.b16 %v2865, %v2861
          %v3114 = vpack.c.b16 %v2870, %v2866
          %v3115 = vpack.c.b16 %v2871, %v2867
          %v3116 = vpack.c.b16 %v2872, %v2868
          %v3117 = vpack.c.b16 %v2873, %v2869
          %v3118 = vpack.c.b16 %v2878, %v2874
          %v3119 = vpack.c.b16 %v2879, %v2875
          %v3120 = vpack.c.b16 %v2880, %v2876
          %v3121 = vpack.c.b16 %v2881, %v2877
          %v3122 = vpack.c.b16 %v2886, %v2882
          %v3123 = vpack.c.b16 %v2887, %v2883
          %v3124 = vpack.c.b16 %v2888, %v2884
          %v3125 = vpack.c.b16 %v2889, %v2885
          %v3126 = vpack.c.b16 %v2894, %v2890
          %v3127 = vpack.c.b16 %v2895, %v2891
          %v3128 = vpack.c.b16 %v2896, %v2892
          %v3129 = vpack.c.b16 %v2897, %v2893
          %v3130 = vpack.c.b16 %v2902, %v2898
          %v3131 = vpack.c.b16 %v2903, %v2899
          %v3132 = vpack.c.b16 %v2904, %v2900
          %v3133 = vpack.c.b16 %v2905, %v2901
          %v3134 = vpack.c.b16 %v2910, %v2906
          %v3135 = vpack.c.b16 %v2911, %v2907
          %v3136 = vpack.c.b16 %v2912, %v2908
          %v3137 = vpack.c.b16 %v2913, %v2909
          %v3138 = vpack.c.b16 %v2918, %v2914
          %v3139 = vpack.c.b16 %v2919, %v2915
          %v3140 = vpack.c.b16 %v2920, %v2916
          %v3141 = vpack.c.b16 %v2921, %v2917
          %v3142 = vpack.c.b16 %v2926, %v2922
          %v3143 = vpack.c.b16 %v2927, %v2923
          %v3144 = vpack.c.b16 %v2928, %v2924
          %v3145 = vpack.c.b16 %v2929, %v2925
          %v3146 = vpack.c.b16 %v2934, %v2930
          %v3147 = vpack.c.b16 %v2935, %v2931
          %v3148 = vpack.c.b16 %v2936, %v2932
          %v3149 = vpack.c.b16 %v2937, %v2933
          %v3150 = vpack.c.b16 %v2942, %v2938
          %v3151 = vpack.c.b16 %v2943, %v2939
          %v3152 = vpack.c.b16 %v2944, %v2940
          %v3153 = vpack.c.b16 %v2945, %v2941
          %v3154 = vpack.c.b16 %v2950, %v2946
          %v3155 = vpack.c.b16 %v2951, %v2947
          %v3156 = vpack.c.b16 %v2952, %v2948
          %v3157 = vpack.c.b16 %v2953, %v2949
          %v3158 = vpack.c.b16 %v2958, %v2954
          %v3159 = vpack.c.b16 %v2959, %v2955
          %v3160 = vpack.c.b16 %v2960, %v2956
          %v3161 = vpack.c.b16 %v2961, %v2957
          %v3162 = vpack.c.b16 %v2966, %v2962
          %v3163 = vpack.c.b16 %v2967, %v2963
          %v3164 = vpack.c.b16 %v2968, %v2964
          %v3165 = vpack.c.b16 %v2969, %v2965
          %v3166 = vpack.c.b16 %v2974, %v2970
          %v3167 = vpack.c.b16 %v2975, %v2971
          %v3168 = vpack.c.b16 %v2976, %v2972
          %v3169 = vpack.c.b16 %v2977, %v2973
          %v3170 = vpack.c.b16 %v2982, %v2978
          %v3171 = vpack.c.b16 %v2983, %v2979
          %v3172 = vpack.c.b16 %v2984, %v2980
          %v3173 = vpack.c.b16 %v2985, %v2981
          %v3174 = vpack.c.b16 %v2990, %v2986
          %v3175 = vpack.c.b16 %v2991, %v2987
          %v3176 = vpack.c.b16 %v2992, %v2988
          %v3177 = vpack.c.b16 %v2993, %v2989
          %v3178 = vpack.c.b16 %v2998, %v2994
          %v3179 = vpack.c.b16 %v2999, %v2995
          %v3180 = vpack.c.b16 %v3000, %v2996
          %v3181 = vpack.c.b16 %v3001, %v2997
          %v3182 = vpack.c.b16 %v3006, %v3002
          %v3183 = vpack.c.b16 %v3007, %v3003
          %v3184 = vpack.c.b16 %v3008, %v3004
          %v3185 = vpack.c.b16 %v3009, %v3005
          %v3186 = vpack.c.b16 %v3014, %v3010
          %v3187 = vpack.c.b16 %v3015, %v3011
          %v3188 = vpack.c.b16 %v3016, %v3012
          %v3189 = vpack.c.b16 %v3017, %v3013
          %v3190 = vpack.c.b16 %v3022, %v3018
          %v3191 = vpack.c.b16 %v3023, %v3019
          %v3192 = vpack.c.b16 %v3024, %v3020
          %v3193 = vpack.c.b16 %v3025, %v3021
          %v3194 = vpack.c.b16 %v3030, %v3026
          %v3195 = vpack.c.b16 %v3031, %v3027
          %v3196 = vpack.c.b16 %v3032, %v3028
          %v3197 = vpack.c.b16 %v3033, %v3029
          %v3198 = vpack.c.b16 %v3038, %v3034
          %v3199 = vpack.c.b16 %v3039, %v3035
          %v3200 = vpack.c.b16 %v3040, %v3036
          %v3201 = vpack.c.b16 %v3041, %v3037
          %v3202 = vpack.c.b16 %v3046, %v3042
          %v3203 = vpack.c.b16 %v3047, %v3043
          %v3204 = vpack.c.b16 %v3048, %v3044
          %v3205 = vpack.c.b16 %v3049, %v3045
          %v3206 = vpack.c.b16 %v3054, %v3050
          %v3207 = vpack.c.b16 %v3055, %v3051
          %v3208 = vpack.c.b16 %v3056, %v3052
          %v3209 = vpack.c.b16 %v3057, %v3053
          %v3210 = vpack.c.b16 %v3062, %v3058
          %v3211 = vpack.c.b16 %v3063, %v3059
          %v3212 = vpack.c.b16 %v3064, %v3060
          %v3213 = vpack.c.b16 %v3065, %v3061
          %v3214 = vpack.c.b16 %v3070, %v3066
          %v3215 = vpack.c.b16 %v3071, %v3067
          %v3216 = vpack.c.b16 %v3072, %v3068
          %v3217 = vpack.c.b16 %v3073, %v3069
          %v3218 = vpack.c.b16 %v3078, %v3074
          %v3219 = vpack.c.b16 %v3079, %v3075
          %v3220 = vpack.c.b16 %v3080, %v3076
          %v3221 = vpack.c.b16 %v3081, %v3077
          %v3222 = vpack.c.b16 %v3086, %v3082
          %v3223 = vpack.c.b16 %v3087, %v3083
          %v3224 = vpack.c.b16 %v3088, %v3084
          %v3225 = vpack.c.b16 %v3089, %v3085
          %v3226 = vpack.c.b16 %v3094, %v3090
          %v3227 = vpack.c.b16 %v3095, %v3091
          %v3228 = vpack.c.b16 %v3096, %v3092
          %v3229 = vpack.c.b16 %v3097, %v3093
          %v3230 = vpack.c.b16 %v3102, %v3098
          %v3231 = vpack.c.b16 %v3103, %v3099
          %v3232 = vpack.c.b16 %v3104, %v3100
          %v3233 = vpack.c.b16 %v3105, %v3101
          %3362 = vmatprep.subr.bf16.mxu0 %v3107
          %3363 = vmatpush1.bf16.msra.mxu0 %v3106
          %3364 = vmatprep.subr.bf16.mxu0 %v3111
          %3365 = vmatpush1.bf16.msra.mxu0 %v3110
          %3366 = vmatprep.subr.bf16.mxu0 %v3115
          %3367 = vmatpush1.bf16.msra.mxu0 %v3114
          %3368 = vmatprep.subr.bf16.mxu0 %v3119
          %3369 = vmatpush1.bf16.msra.mxu0 %v3118
          %3370 = vmatprep.subr.bf16.mxu0 %v3123
          %3371 = vmatpush1.bf16.msra.mxu0 %v3122
          %3372 = vmatprep.subr.bf16.mxu0 %v3127
          %3373 = vmatpush1.bf16.msra.mxu0 %v3126
          %3374 = vmatprep.subr.bf16.mxu0 %v3131
          %3375 = vmatpush1.bf16.msra.mxu0 %v3130
          %3376 = vmatprep.subr.bf16.mxu0 %v3135
          %3377 = vmatpush1.bf16.msra.mxu0 %v3134
          %3378 = vmatprep.subr.bf16.mxu0 %v3139
          %3379 = vmatpush1.bf16.msra.mxu0 %v3138
          %3380 = vmatprep.subr.bf16.mxu0 %v3143
          %3381 = vmatpush1.bf16.msra.mxu0 %v3142
          %3382 = vmatprep.subr.bf16.mxu0 %v3147
          %3383 = vmatpush1.bf16.msra.mxu0 %v3146
          %3384 = vmatprep.subr.bf16.mxu0 %v3151
          %3385 = vmatpush1.bf16.msra.mxu0 %v3150
          %3386 = vmatprep.subr.bf16.mxu0 %v3155
          %3387 = vmatpush1.bf16.msra.mxu0 %v3154
          %3388 = vmatprep.subr.bf16.mxu0 %v3159
          %3389 = vmatpush1.bf16.msra.mxu0 %v3158
          %3390 = vmatprep.subr.bf16.mxu0 %v3163
          %3391 = vmatpush1.bf16.msra.mxu0 %v3162
          %3392 = vmatprep.subr.bf16.mxu0 %v3167
          %3393 = vmatpush1.bf16.msra.mxu0 %v3166
          %3394 = vmatprep.mubr.bf16.mxu0 %v2567
          %3395 = vmatmul.mubr.bf16.gmra.mrb[0].mxu0 %v2566
          %v3396 = vpop.f32.mrb[0].mxu0
          %v3397 = vadd.f32 %v2705, %v3396
          %v3398 = vpop.f32.mrb[0].mxu0
          %v3399 = vadd.f32 %v2709, %v3398
          %v3400 = vpop.f32.mrb[0].mxu0
          %v3401 = vpop.f32.mrb[0].mxu0
          %3402 = vdwg.mxu0
          %3403 = vmatprep.subr.bf16.mxu0 %v3171
          %3404 = vmatpush1.bf16.msra.mxu0 %v3170
          %3405 = vmatprep.subr.bf16.mxu0 %v3175
          %3406 = vmatpush1.bf16.msra.mxu0 %v3174
          %3407 = vmatprep.subr.bf16.mxu0 %v3179
          %3408 = vmatpush1.bf16.msra.mxu0 %v3178
          %3409 = vmatprep.subr.bf16.mxu0 %v3183
          %3410 = vmatpush1.bf16.msra.mxu0 %v3182
          %3411 = vmatprep.subr.bf16.mxu0 %v3187
          %3412 = vmatpush1.bf16.msra.mxu0 %v3186
          %3413 = vmatprep.subr.bf16.mxu0 %v3191
          %3414 = vmatpush1.bf16.msra.mxu0 %v3190
          %3415 = vmatprep.subr.bf16.mxu0 %v3195
          %3416 = vmatpush1.bf16.msra.mxu0 %v3194
          %3417 = vmatprep.subr.bf16.mxu0 %v3199
          %3418 = vmatpush1.bf16.msra.mxu0 %v3198
          %3419 = vmatprep.subr.bf16.mxu0 %v3203
          %3420 = vmatpush1.bf16.msra.mxu0 %v3202
          %3421 = vmatprep.subr.bf16.mxu0 %v3207
          %3422 = vmatpush1.bf16.msra.mxu0 %v3206
          %3423 = vmatprep.subr.bf16.mxu0 %v3211
          %3424 = vmatpush1.bf16.msra.mxu0 %v3210
          %3425 = vmatprep.subr.bf16.mxu0 %v3215
          %3426 = vmatpush1.bf16.msra.mxu0 %v3214
          %3427 = vmatprep.subr.bf16.mxu0 %v3219
          %3428 = vmatpush1.bf16.msra.mxu0 %v3218
          %3429 = vmatprep.subr.bf16.mxu0 %v3223
          %3430 = vmatpush1.bf16.msra.mxu0 %v3222
          %3431 = vmatprep.subr.bf16.mxu0 %v3227
          %3432 = vmatpush1.bf16.msra.mxu0 %v3226
          %3433 = vmatprep.subr.bf16.mxu0 %v3231
          %3434 = vmatpush1.bf16.msra.mxu0 %v3230
          %3435 = vmatprep.mubr.bf16.mxu0 %v2569
          %3436 = vmatmul.mubr.bf16.gmra.mrb[0].mxu0 %v2568
          %v3437 = vpop.f32.mrb[0].mxu0
          %v3438 = vadd.f32 %v3397, %v3437
          %v3439 = vpop.f32.mrb[0].mxu0
          %v3440 = vadd.f32 %v3399, %v3439
          %v3441 = vpop.f32.mrb[0].mxu0
          %v3442 = vpop.f32.mrb[0].mxu0
          %3443 = vdwg.mxu0
          %3444 = vmatprep.subr.bf16.mxu0 %v3109
          %3445 = vmatpush1.bf16.msra.mxu0 %v3108
          %3446 = vmatprep.subr.bf16.mxu0 %v3113
          %3447 = vmatpush1.bf16.msra.mxu0 %v3112
          %3448 = vmatprep.subr.bf16.mxu0 %v3117
          %3449 = vmatpush1.bf16.msra.mxu0 %v3116
          %3450 = vmatprep.subr.bf16.mxu0 %v3121
          %3451 = vmatpush1.bf16.msra.mxu0 %v3120
          %3452 = vmatprep.subr.bf16.mxu0 %v3125
          %3453 = vmatpush1.bf16.msra.mxu0 %v3124
          %3454 = vmatprep.subr.bf16.mxu0 %v3129
          %3455 = vmatpush1.bf16.msra.mxu0 %v3128
          %3456 = vmatprep.subr.bf16.mxu0 %v3133
          %3457 = vmatpush1.bf16.msra.mxu0 %v3132
          %3458 = vmatprep.subr.bf16.mxu0 %v3137
          %3459 = vmatpush1.bf16.msra.mxu0 %v3136
          %3460 = vmatprep.subr.bf16.mxu0 %v3141
          %3461 = vmatpush1.bf16.msra.mxu0 %v3140
          %3462 = vmatprep.subr.bf16.mxu0 %v3145
          %3463 = vmatpush1.bf16.msra.mxu0 %v3144
          %3464 = vmatprep.subr.bf16.mxu0 %v3149
          %3465 = vmatpush1.bf16.msra.mxu0 %v3148
          %3466 = vmatprep.subr.bf16.mxu0 %v3153
          %3467 = vmatpush1.bf16.msra.mxu0 %v3152
          %3468 = vmatprep.subr.bf16.mxu0 %v3157
          %3469 = vmatpush1.bf16.msra.mxu0 %v3156
          %3470 = vmatprep.subr.bf16.mxu0 %v3161
          %3471 = vmatpush1.bf16.msra.mxu0 %v3160
          %3472 = vmatprep.subr.bf16.mxu0 %v3165
          %3473 = vmatpush1.bf16.msra.mxu0 %v3164
          %3474 = vmatprep.subr.bf16.mxu0 %v3169
          %3475 = vmatpush1.bf16.msra.mxu0 %v3168
          %3476 = vmatprep.mubr.bf16.mxu0 %v2567
          %3477 = vmatmul.mubr.bf16.gmra.mrb[0].mxu0 %v2566
          %v3478 = vpop.f32.mrb[0].mxu0
          %v3479 = vadd.f32 %v2713, %v3478
          %v3480 = vpop.f32.mrb[0].mxu0
          %v3481 = vadd.f32 %v2717, %v3480
          %v3482 = vpop.f32.mrb[0].mxu0
          %v3483 = vpop.f32.mrb[0].mxu0
          %3484 = vdwg.mxu0
          %3485 = vmatprep.subr.bf16.mxu0 %v3173
          %3486 = vmatpush1.bf16.msra.mxu0 %v3172
          %3487 = vmatprep.subr.bf16.mxu0 %v3177
          %3488 = vmatpush1.bf16.msra.mxu0 %v3176
          %3489 = vmatprep.subr.bf16.mxu0 %v3181
          %3490 = vmatpush1.bf16.msra.mxu0 %v3180
          %3491 = vmatprep.subr.bf16.mxu0 %v3185
          %3492 = vmatpush1.bf16.msra.mxu0 %v3184
          %3493 = vmatprep.subr.bf16.mxu0 %v3189
          %3494 = vmatpush1.bf16.msra.mxu0 %v3188
          %3495 = vmatprep.subr.bf16.mxu0 %v3193
          %3496 = vmatpush1.bf16.msra.mxu0 %v3192
          %3497 = vmatprep.subr.bf16.mxu0 %v3197
          %3498 = vmatpush1.bf16.msra.mxu0 %v3196
          %3499 = vmatprep.subr.bf16.mxu0 %v3201
          %3500 = vmatpush1.bf16.msra.mxu0 %v3200
          %3501 = vmatprep.subr.bf16.mxu0 %v3205
          %3502 = vmatpush1.bf16.msra.mxu0 %v3204
          %3503 = vmatprep.subr.bf16.mxu0 %v3209
          %3504 = vmatpush1.bf16.msra.mxu0 %v3208
          %3505 = vmatprep.subr.bf16.mxu0 %v3213
          %3506 = vmatpush1.bf16.msra.mxu0 %v3212
          %3507 = vmatprep.subr.bf16.mxu0 %v3217
          %3508 = vmatpush1.bf16.msra.mxu0 %v3216
          %3509 = vmatprep.subr.bf16.mxu0 %v3221
          %3510 = vmatpush1.bf16.msra.mxu0 %v3220
          %3511 = vmatprep.subr.bf16.mxu0 %v3225
          %3512 = vmatpush1.bf16.msra.mxu0 %v3224
          %3513 = vmatprep.subr.bf16.mxu0 %v3229
          %3514 = vmatpush1.bf16.msra.mxu0 %v3228
          %3515 = vmatprep.subr.bf16.mxu0 %v3233
          %3516 = vmatpush1.bf16.msra.mxu0 %v3232
          %3517 = vmatprep.mubr.bf16.mxu0 %v2569
          %3518 = vmatmul.mubr.bf16.gmra.mrb[0].mxu0 %v2568
          %v3519 = vpop.f32.mrb[0].mxu0
          %v3520 = vadd.f32 %v3479, %v3519
          %v3521 = vpop.f32.mrb[0].mxu0
          %v3522 = vadd.f32 %v3481, %v3521
          %v3523 = vpop.f32.mrb[0].mxu0
          %v3524 = vpop.f32.mrb[0].mxu0
          %3525 = vdwg.mxu0
          %v3526 = vmax.f32 %v3438, 0.0
          %v3527 = vmax.f32 %v3440, 0.0
          %v3528 = vmax.f32 %v3520, 0.0
          %v3529 = vmax.f32 %v3522, 0.0
          %v3530 = vpack.c.bf16 %v3526, %v3526
          %v3531 = vpack.c.bf16 %v3527, %v3527
          %v3532 = vpack.c.bf16 %v3528, %v3528
          %v3533 = vpack.c.bf16 %v3529, %v3529
          %v3538 = vcombine.low %v3530, %v3531
          %v3539 = vcombine.low %v3532, %v3533
          %v3541 = vunpack.c.l.s4 1966171168
          %v3542 = vunpack.c.0.s8 %v3541
          %v3543 = vlaneseq
          %v3544 = vshrl.u32 %v3543, 7
          %v3545 = vsub.s32 %v3542, %v3544
          %v3546 = vrot.slane %v3538, %v3545
          %v3548 = vunpack.c.l.s4 1966171168
          %v3549 = vunpack.c.0.s8 %v3548
          %v3550 = vlaneseq
          %v3551 = vshrl.u32 %v3550, 7
          %v3552 = vsub.s32 %v3549, %v3551
          %v3553 = vrot.slane %v3539, %v3552
          %v3554 = vcombine.low %v3546, %v3553
          %v3556 = vunpack.c.l.s4 1966171168
          %v3557 = vunpack.c.0.s8 %v3556
          %v3558 = vlaneseq
          %v3559 = vshrl.u32 %v3558, 7
          %v3560 = vsub.s32 %v3557, %v3559
          %v3561 = vrot.slane %v3554, %v3560
          %3563 = vst [vmem:[#allocation2] sm:$0xf] %v3561
          %vm3564 = vcmask 517120
          %3565 = vst.msk [vmem:[#allocation16] sm:$0x3] %vm3564, 0.0
        $region84: #{mapping_forward.1} parent=55 // pred_fallthru
          _
        %s3566 = sld [smem:[#allocation5 + %s36]]
        %p3567 = scmp.gt.s32.totalorder %s3566, 0
        // Predicated region
        $region85: #{mapping_forward.1} parent=55 // pred_check
          %p3568 = pneg %p3567
        $region86: #{mapping_forward.1} parent=55 // pred_check_branch
          %3570 = sbr.rel (%p3568) target = $region88
        $region87: #{mapping_forward.1} parent=55 // pred_region
          %v3571 = vld [vmem:[#allocation2] sm:$0xf]
          %v3572 = vld [vmem:[%s426] sm:$0xff]
          %v3573 = vld [vmem:[%s426 + $0x8] sm:$0xff]
          %v3574 = vld [vmem:[%s426 + $0x10] sm:$0xff]
          %v3575 = vld [vmem:[%s426 + $0x18] sm:$0xff]
          %v3576 = vld [vmem:[%s426 + $0x20] sm:$0xff]
          %v3577 = vld [vmem:[%s426 + $0x28] sm:$0xff]
          %v3578 = vld [vmem:[%s426 + $0x30] sm:$0xff]
          %v3579 = vld [vmem:[%s426 + $0x38] sm:$0xff]
          %v3580 = vld [vmem:[%s426 + $0x40] sm:$0xff]
          %v3581 = vld [vmem:[%s426 + $0x48] sm:$0xff]
          %v3582 = vld [vmem:[%s426 + $0x50] sm:$0xff]
          %v3583 = vld [vmem:[%s426 + $0x58] sm:$0xff]
          %v3584 = vld [vmem:[%s426 + $0x60] sm:$0xff]
          %v3585 = vld [vmem:[%s426 + $0x68] sm:$0xff]
          %v3586 = vld [vmem:[%s426 + $0x70] sm:$0xff]
          %v3587 = vld [vmem:[%s426 + $0x78] sm:$0xff]
          %v3588 = vld [vmem:[%s426 + $0x80] sm:$0xff]
          %v3589 = vld [vmem:[%s426 + $0x88] sm:$0xff]
          %v3590 = vld [vmem:[%s426 + $0x90] sm:$0xff]
          %v3591 = vld [vmem:[%s426 + $0x98] sm:$0xff]
          %v3592 = vld [vmem:[%s426 + $0xa0] sm:$0xff]
          %v3593 = vld [vmem:[%s426 + $0xa8] sm:$0xff]
          %v3594 = vld [vmem:[%s426 + $0xb0] sm:$0xff]
          %v3595 = vld [vmem:[%s426 + $0xb8] sm:$0xff]
          %v3596 = vld [vmem:[%s426 + $0xc0] sm:$0xff]
          %v3597 = vld [vmem:[%s426 + $0xc8] sm:$0xff]
          %v3598 = vld [vmem:[%s426 + $0xd0] sm:$0xff]
          %v3599 = vld [vmem:[%s426 + $0xd8] sm:$0xff]
          %v3600 = vld [vmem:[%s426 + $0xe0] sm:$0xff]
          %v3601 = vld [vmem:[%s426 + $0xe8] sm:$0xff]
          %v3602 = vld [vmem:[%s426 + $0xf0] sm:$0xff]
          %v3603 = vld [vmem:[%s426 + $0xf8] sm:$0xff]
          %v3604 = vld [vmem:[%s426 + $0x100] sm:$0xff]
          %v3605 = vld [vmem:[%s426 + $0x108] sm:$0xff]
          %v3606 = vld [vmem:[%s426 + $0x110] sm:$0xff]
          %v3607 = vld [vmem:[%s426 + $0x118] sm:$0xff]
          %v3608 = vld [vmem:[%s426 + $0x120] sm:$0xff]
          %v3609 = vld [vmem:[%s426 + $0x128] sm:$0xff]
          %v3610 = vld [vmem:[%s426 + $0x130] sm:$0xff]
          %v3611 = vld [vmem:[%s426 + $0x138] sm:$0xff]
          %v3612 = vld [vmem:[%s426 + $0x140] sm:$0xff]
          %v3613 = vld [vmem:[%s426 + $0x148] sm:$0xff]
          %v3614 = vld [vmem:[%s426 + $0x150] sm:$0xff]
          %v3615 = vld [vmem:[%s426 + $0x158] sm:$0xff]
          %v3616 = vld [vmem:[%s426 + $0x160] sm:$0xff]
          %v3617 = vld [vmem:[%s426 + $0x168] sm:$0xff]
          %v3618 = vld [vmem:[%s426 + $0x170] sm:$0xff]
          %v3619 = vld [vmem:[%s426 + $0x178] sm:$0xff]
          %v3620 = vld [vmem:[%s426 + $0x180] sm:$0xff]
          %v3621 = vld [vmem:[%s426 + $0x188] sm:$0xff]
          %v3622 = vld [vmem:[%s426 + $0x190] sm:$0xff]
          %v3623 = vld [vmem:[%s426 + $0x198] sm:$0xff]
          %v3624 = vld [vmem:[%s426 + $0x1a0] sm:$0xff]
          %v3625 = vld [vmem:[%s426 + $0x1a8] sm:$0xff]
          %v3626 = vld [vmem:[%s426 + $0x1b0] sm:$0xff]
          %v3627 = vld [vmem:[%s426 + $0x1b8] sm:$0xff]
          %v3628 = vld [vmem:[%s426 + $0x1c0] sm:$0xff]
          %v3629 = vld [vmem:[%s426 + $0x1c8] sm:$0xff]
          %v3630 = vld [vmem:[%s426 + $0x1d0] sm:$0xff]
          %v3631 = vld [vmem:[%s426 + $0x1d8] sm:$0xff]
          %v3632 = vld [vmem:[%s426 + $0x1e0] sm:$0xff]
          %v3633 = vld [vmem:[%s426 + $0x1e8] sm:$0xff]
          %v3634 = vld [vmem:[%s426 + $0x1f0] sm:$0xff]
          %v3635 = vld [vmem:[%s426 + $0x1f8] sm:$0xff]
          %v3636 = vld [vmem:[%s426 + $0x200] sm:$0xff]
          %v3637 = vld [vmem:[%s426 + $0x208] sm:$0xff]
          %v3638 = vld [vmem:[%s426 + $0x210] sm:$0xff]
          %v3639 = vld [vmem:[%s426 + $0x218] sm:$0xff]
          %v3640 = vld [vmem:[%s426 + $0x220] sm:$0xff]
          %v3641 = vld [vmem:[%s426 + $0x228] sm:$0xff]
          %v3642 = vld [vmem:[%s426 + $0x230] sm:$0xff]
          %v3643 = vld [vmem:[%s426 + $0x238] sm:$0xff]
          %v3644 = vld [vmem:[%s426 + $0x240] sm:$0xff]
          %v3645 = vld [vmem:[%s426 + $0x248] sm:$0xff]
          %v3646 = vld [vmem:[%s426 + $0x250] sm:$0xff]
          %v3647 = vld [vmem:[%s426 + $0x258] sm:$0xff]
          %v3648 = vld [vmem:[%s426 + $0x260] sm:$0xff]
          %v3649 = vld [vmem:[%s426 + $0x268] sm:$0xff]
          %v3650 = vld [vmem:[%s426 + $0x270] sm:$0xff]
          %v3651 = vld [vmem:[%s426 + $0x278] sm:$0xff]
          %v3652 = vld [vmem:[%s426 + $0x280] sm:$0xff]
          %v3653 = vld [vmem:[%s426 + $0x288] sm:$0xff]
          %v3654 = vld [vmem:[%s426 + $0x290] sm:$0xff]
          %v3655 = vld [vmem:[%s426 + $0x298] sm:$0xff]
          %v3656 = vld [vmem:[%s426 + $0x2a0] sm:$0xff]
          %v3657 = vld [vmem:[%s426 + $0x2a8] sm:$0xff]
          %v3658 = vld [vmem:[%s426 + $0x2b0] sm:$0xff]
          %v3659 = vld [vmem:[%s426 + $0x2b8] sm:$0xff]
          %v3660 = vld [vmem:[%s426 + $0x2c0] sm:$0xff]
          %v3661 = vld [vmem:[%s426 + $0x2c8] sm:$0xff]
          %v3662 = vld [vmem:[%s426 + $0x2d0] sm:$0xff]
          %v3663 = vld [vmem:[%s426 + $0x2d8] sm:$0xff]
          %v3664 = vld [vmem:[%s426 + $0x2e0] sm:$0xff]
          %v3665 = vld [vmem:[%s426 + $0x2e8] sm:$0xff]
          %v3666 = vld [vmem:[%s426 + $0x2f0] sm:$0xff]
          %v3667 = vld [vmem:[%s426 + $0x2f8] sm:$0xff]
          %v3668 = vld [vmem:[%s426 + $0x300] sm:$0xff]
          %v3669 = vld [vmem:[%s426 + $0x308] sm:$0xff]
          %v3670 = vld [vmem:[%s426 + $0x310] sm:$0xff]
          %v3671 = vld [vmem:[%s426 + $0x318] sm:$0xff]
          %v3672 = vld [vmem:[%s426 + $0x320] sm:$0xff]
          %v3673 = vld [vmem:[%s426 + $0x328] sm:$0xff]
          %v3674 = vld [vmem:[%s426 + $0x330] sm:$0xff]
          %v3675 = vld [vmem:[%s426 + $0x338] sm:$0xff]
          %v3676 = vld [vmem:[%s426 + $0x340] sm:$0xff]
          %v3677 = vld [vmem:[%s426 + $0x348] sm:$0xff]
          %v3678 = vld [vmem:[%s426 + $0x350] sm:$0xff]
          %v3679 = vld [vmem:[%s426 + $0x358] sm:$0xff]
          %v3680 = vld [vmem:[%s426 + $0x360] sm:$0xff]
          %v3681 = vld [vmem:[%s426 + $0x368] sm:$0xff]
          %v3682 = vld [vmem:[%s426 + $0x370] sm:$0xff]
          %v3683 = vld [vmem:[%s426 + $0x378] sm:$0xff]
          %v3684 = vld [vmem:[%s426 + $0x380] sm:$0xff]
          %v3685 = vld [vmem:[%s426 + $0x388] sm:$0xff]
          %v3686 = vld [vmem:[%s426 + $0x390] sm:$0xff]
          %v3687 = vld [vmem:[%s426 + $0x398] sm:$0xff]
          %v3688 = vld [vmem:[%s426 + $0x3a0] sm:$0xff]
          %v3689 = vld [vmem:[%s426 + $0x3a8] sm:$0xff]
          %v3690 = vld [vmem:[%s426 + $0x3b0] sm:$0xff]
          %v3691 = vld [vmem:[%s426 + $0x3b8] sm:$0xff]
          %v3692 = vld [vmem:[%s426 + $0x3c0] sm:$0xff]
          %v3693 = vld [vmem:[%s426 + $0x3c8] sm:$0xff]
          %v3694 = vld [vmem:[%s426 + $0x3d0] sm:$0xff]
          %v3695 = vld [vmem:[%s426 + $0x3d8] sm:$0xff]
          %v3696 = vld [vmem:[%s426 + $0x3e0] sm:$0xff]
          %v3697 = vld [vmem:[%s426 + $0x3e8] sm:$0xff]
          %v3698 = vld [vmem:[%s426 + $0x3f0] sm:$0xff]
          %v3699 = vld [vmem:[%s426 + $0x3f8] sm:$0xff]
          %v3700 = vld [vmem:[%s486] ss:$4 sm:$0xf]
          %v3702 = vlaneseq
          %v3703 = vshrl.u32 %v3702, 7
          %v3704 = vsub.s32 0, %v3703
          %v3705 = vrot.slane %v3700, %v3704
          %v3706 = vlaneseq
          %v3707 = vshrl.u32 %v3706, 7
          %v3708 = vsub.s32 1, %v3707
          %v3709 = vrot.slane %v3700, %v3708
          %v3710 = vlaneseq
          %v3711 = vshrl.u32 %v3710, 7
          %v3712 = vsub.s32 2, %v3711
          %v3713 = vrot.slane %v3700, %v3712
          %v3714 = vlaneseq
          %v3715 = vshrl.u32 %v3714, 7
          %v3716 = vsub.s32 3, %v3715
          %v3717 = vrot.slane %v3700, %v3716
          %v3724 = vunpack.c.l.s4 1966171168
          %v3725 = vunpack.c.0.s8 %v3724
          %v3726 = vlaneseq
          %v3727 = vshrl.u32 %v3726, 7
          %v3728 = vsub.s32 %v3725, %v3727
          %v3729 = vrot.slane %v3571, %v3728
          %v3730 = vcombine.high %v3729, %v3729
          %v3732 = vunpack.c.l.s4 1966171168
          %v3733 = vunpack.c.0.s8 %v3732
          %v3734 = vlaneseq
          %v3735 = vshrl.u32 %v3734, 7
          %v3736 = vsub.s32 %v3733, %v3735
          %v3737 = vrot.slane %v3729, %v3736
          %v3739 = vunpack.c.l.s4 1966171168
          %v3740 = vunpack.c.0.s8 %v3739
          %v3741 = vlaneseq
          %v3742 = vshrl.u32 %v3741, 7
          %v3743 = vsub.s32 %v3740, %v3742
          %v3744 = vrot.slane %v3730, %v3743
          %v3745 = vcombine.high %v3737, %v3737
          %v3746 = vcombine.high %v3744, %v3744
          %v3879 = vunpack.c.l.b16 %v3572
          %v3880 = vunpack.c.h.b16 %v3572
          %v3881 = vunpack.c.l.b16 %v3573
          %v3882 = vunpack.c.h.b16 %v3573
          %v3883 = vunpack.c.l.b16 %v3574
          %v3884 = vunpack.c.h.b16 %v3574
          %v3885 = vunpack.c.l.b16 %v3575
          %v3886 = vunpack.c.h.b16 %v3575
          %v3887 = vunpack.c.l.b16 %v3576
          %v3888 = vunpack.c.h.b16 %v3576
          %v3889 = vunpack.c.l.b16 %v3577
          %v3890 = vunpack.c.h.b16 %v3577
          %v3891 = vunpack.c.l.b16 %v3578
          %v3892 = vunpack.c.h.b16 %v3578
          %v3893 = vunpack.c.l.b16 %v3579
          %v3894 = vunpack.c.h.b16 %v3579
          %v3895 = vunpack.c.l.b16 %v3580
          %v3896 = vunpack.c.h.b16 %v3580
          %v3897 = vunpack.c.l.b16 %v3581
          %v3898 = vunpack.c.h.b16 %v3581
          %v3899 = vunpack.c.l.b16 %v3582
          %v3900 = vunpack.c.h.b16 %v3582
          %v3901 = vunpack.c.l.b16 %v3583
          %v3902 = vunpack.c.h.b16 %v3583
          %v3903 = vunpack.c.l.b16 %v3584
          %v3904 = vunpack.c.h.b16 %v3584
          %v3905 = vunpack.c.l.b16 %v3585
          %v3906 = vunpack.c.h.b16 %v3585
          %v3907 = vunpack.c.l.b16 %v3586
          %v3908 = vunpack.c.h.b16 %v3586
          %v3909 = vunpack.c.l.b16 %v3587
          %v3910 = vunpack.c.h.b16 %v3587
          %v3911 = vunpack.c.l.b16 %v3588
          %v3912 = vunpack.c.h.b16 %v3588
          %v3913 = vunpack.c.l.b16 %v3589
          %v3914 = vunpack.c.h.b16 %v3589
          %v3915 = vunpack.c.l.b16 %v3590
          %v3916 = vunpack.c.h.b16 %v3590
          %v3917 = vunpack.c.l.b16 %v3591
          %v3918 = vunpack.c.h.b16 %v3591
          %v3919 = vunpack.c.l.b16 %v3592
          %v3920 = vunpack.c.h.b16 %v3592
          %v3921 = vunpack.c.l.b16 %v3593
          %v3922 = vunpack.c.h.b16 %v3593
          %v3923 = vunpack.c.l.b16 %v3594
          %v3924 = vunpack.c.h.b16 %v3594
          %v3925 = vunpack.c.l.b16 %v3595
          %v3926 = vunpack.c.h.b16 %v3595
          %v3927 = vunpack.c.l.b16 %v3596
          %v3928 = vunpack.c.h.b16 %v3596
          %v3929 = vunpack.c.l.b16 %v3597
          %v3930 = vunpack.c.h.b16 %v3597
          %v3931 = vunpack.c.l.b16 %v3598
          %v3932 = vunpack.c.h.b16 %v3598
          %v3933 = vunpack.c.l.b16 %v3599
          %v3934 = vunpack.c.h.b16 %v3599
          %v3935 = vunpack.c.l.b16 %v3600
          %v3936 = vunpack.c.h.b16 %v3600
          %v3937 = vunpack.c.l.b16 %v3601
          %v3938 = vunpack.c.h.b16 %v3601
          %v3939 = vunpack.c.l.b16 %v3602
          %v3940 = vunpack.c.h.b16 %v3602
          %v3941 = vunpack.c.l.b16 %v3603
          %v3942 = vunpack.c.h.b16 %v3603
          %v3943 = vunpack.c.l.b16 %v3604
          %v3944 = vunpack.c.h.b16 %v3604
          %v3945 = vunpack.c.l.b16 %v3605
          %v3946 = vunpack.c.h.b16 %v3605
          %v3947 = vunpack.c.l.b16 %v3606
          %v3948 = vunpack.c.h.b16 %v3606
          %v3949 = vunpack.c.l.b16 %v3607
          %v3950 = vunpack.c.h.b16 %v3607
          %v3951 = vunpack.c.l.b16 %v3608
          %v3952 = vunpack.c.h.b16 %v3608
          %v3953 = vunpack.c.l.b16 %v3609
          %v3954 = vunpack.c.h.b16 %v3609
          %v3955 = vunpack.c.l.b16 %v3610
          %v3956 = vunpack.c.h.b16 %v3610
          %v3957 = vunpack.c.l.b16 %v3611
          %v3958 = vunpack.c.h.b16 %v3611
          %v3959 = vunpack.c.l.b16 %v3612
          %v3960 = vunpack.c.h.b16 %v3612
          %v3961 = vunpack.c.l.b16 %v3613
          %v3962 = vunpack.c.h.b16 %v3613
          %v3963 = vunpack.c.l.b16 %v3614
          %v3964 = vunpack.c.h.b16 %v3614
          %v3965 = vunpack.c.l.b16 %v3615
          %v3966 = vunpack.c.h.b16 %v3615
          %v3967 = vunpack.c.l.b16 %v3616
          %v3968 = vunpack.c.h.b16 %v3616
          %v3969 = vunpack.c.l.b16 %v3617
          %v3970 = vunpack.c.h.b16 %v3617
          %v3971 = vunpack.c.l.b16 %v3618
          %v3972 = vunpack.c.h.b16 %v3618
          %v3973 = vunpack.c.l.b16 %v3619
          %v3974 = vunpack.c.h.b16 %v3619
          %v3975 = vunpack.c.l.b16 %v3620
          %v3976 = vunpack.c.h.b16 %v3620
          %v3977 = vunpack.c.l.b16 %v3621
          %v3978 = vunpack.c.h.b16 %v3621
          %v3979 = vunpack.c.l.b16 %v3622
          %v3980 = vunpack.c.h.b16 %v3622
          %v3981 = vunpack.c.l.b16 %v3623
          %v3982 = vunpack.c.h.b16 %v3623
          %v3983 = vunpack.c.l.b16 %v3624
          %v3984 = vunpack.c.h.b16 %v3624
          %v3985 = vunpack.c.l.b16 %v3625
          %v3986 = vunpack.c.h.b16 %v3625
          %v3987 = vunpack.c.l.b16 %v3626
          %v3988 = vunpack.c.h.b16 %v3626
          %v3989 = vunpack.c.l.b16 %v3627
          %v3990 = vunpack.c.h.b16 %v3627
          %v3991 = vunpack.c.l.b16 %v3628
          %v3992 = vunpack.c.h.b16 %v3628
          %v3993 = vunpack.c.l.b16 %v3629
          %v3994 = vunpack.c.h.b16 %v3629
          %v3995 = vunpack.c.l.b16 %v3630
          %v3996 = vunpack.c.h.b16 %v3630
          %v3997 = vunpack.c.l.b16 %v3631
          %v3998 = vunpack.c.h.b16 %v3631
          %v3999 = vunpack.c.l.b16 %v3632
          %v4000 = vunpack.c.h.b16 %v3632
          %v4001 = vunpack.c.l.b16 %v3633
          %v4002 = vunpack.c.h.b16 %v3633
          %v4003 = vunpack.c.l.b16 %v3634
          %v4004 = vunpack.c.h.b16 %v3634
          %v4005 = vunpack.c.l.b16 %v3635
          %v4006 = vunpack.c.h.b16 %v3635
          %v4007 = vunpack.c.l.b16 %v3636
          %v4008 = vunpack.c.h.b16 %v3636
          %v4009 = vunpack.c.l.b16 %v3637
          %v4010 = vunpack.c.h.b16 %v3637
          %v4011 = vunpack.c.l.b16 %v3638
          %v4012 = vunpack.c.h.b16 %v3638
          %v4013 = vunpack.c.l.b16 %v3639
          %v4014 = vunpack.c.h.b16 %v3639
          %v4015 = vunpack.c.l.b16 %v3640
          %v4016 = vunpack.c.h.b16 %v3640
          %v4017 = vunpack.c.l.b16 %v3641
          %v4018 = vunpack.c.h.b16 %v3641
          %v4019 = vunpack.c.l.b16 %v3642
          %v4020 = vunpack.c.h.b16 %v3642
          %v4021 = vunpack.c.l.b16 %v3643
          %v4022 = vunpack.c.h.b16 %v3643
          %v4023 = vunpack.c.l.b16 %v3644
          %v4024 = vunpack.c.h.b16 %v3644
          %v4025 = vunpack.c.l.b16 %v3645
          %v4026 = vunpack.c.h.b16 %v3645
          %v4027 = vunpack.c.l.b16 %v3646
          %v4028 = vunpack.c.h.b16 %v3646
          %v4029 = vunpack.c.l.b16 %v3647
          %v4030 = vunpack.c.h.b16 %v3647
          %v4031 = vunpack.c.l.b16 %v3648
          %v4032 = vunpack.c.h.b16 %v3648
          %v4033 = vunpack.c.l.b16 %v3649
          %v4034 = vunpack.c.h.b16 %v3649
          %v4035 = vunpack.c.l.b16 %v3650
          %v4036 = vunpack.c.h.b16 %v3650
          %v4037 = vunpack.c.l.b16 %v3651
          %v4038 = vunpack.c.h.b16 %v3651
          %v4039 = vunpack.c.l.b16 %v3652
          %v4040 = vunpack.c.h.b16 %v3652
          %v4041 = vunpack.c.l.b16 %v3653
          %v4042 = vunpack.c.h.b16 %v3653
          %v4043 = vunpack.c.l.b16 %v3654
          %v4044 = vunpack.c.h.b16 %v3654
          %v4045 = vunpack.c.l.b16 %v3655
          %v4046 = vunpack.c.h.b16 %v3655
          %v4047 = vunpack.c.l.b16 %v3656
          %v4048 = vunpack.c.h.b16 %v3656
          %v4049 = vunpack.c.l.b16 %v3657
          %v4050 = vunpack.c.h.b16 %v3657
          %v4051 = vunpack.c.l.b16 %v3658
          %v4052 = vunpack.c.h.b16 %v3658
          %v4053 = vunpack.c.l.b16 %v3659
          %v4054 = vunpack.c.h.b16 %v3659
          %v4055 = vunpack.c.l.b16 %v3660
          %v4056 = vunpack.c.h.b16 %v3660
          %v4057 = vunpack.c.l.b16 %v3661
          %v4058 = vunpack.c.h.b16 %v3661
          %v4059 = vunpack.c.l.b16 %v3662
          %v4060 = vunpack.c.h.b16 %v3662
          %v4061 = vunpack.c.l.b16 %v3663
          %v4062 = vunpack.c.h.b16 %v3663
          %v4063 = vunpack.c.l.b16 %v3664
          %v4064 = vunpack.c.h.b16 %v3664
          %v4065 = vunpack.c.l.b16 %v3665
          %v4066 = vunpack.c.h.b16 %v3665
          %v4067 = vunpack.c.l.b16 %v3666
          %v4068 = vunpack.c.h.b16 %v3666
          %v4069 = vunpack.c.l.b16 %v3667
          %v4070 = vunpack.c.h.b16 %v3667
          %v4071 = vunpack.c.l.b16 %v3668
          %v4072 = vunpack.c.h.b16 %v3668
          %v4073 = vunpack.c.l.b16 %v3669
          %v4074 = vunpack.c.h.b16 %v3669
          %v4075 = vunpack.c.l.b16 %v3670
          %v4076 = vunpack.c.h.b16 %v3670
          %v4077 = vunpack.c.l.b16 %v3671
          %v4078 = vunpack.c.h.b16 %v3671
          %v4079 = vunpack.c.l.b16 %v3672
          %v4080 = vunpack.c.h.b16 %v3672
          %v4081 = vunpack.c.l.b16 %v3673
          %v4082 = vunpack.c.h.b16 %v3673
          %v4083 = vunpack.c.l.b16 %v3674
          %v4084 = vunpack.c.h.b16 %v3674
          %v4085 = vunpack.c.l.b16 %v3675
          %v4086 = vunpack.c.h.b16 %v3675
          %v4087 = vunpack.c.l.b16 %v3676
          %v4088 = vunpack.c.h.b16 %v3676
          %v4089 = vunpack.c.l.b16 %v3677
          %v4090 = vunpack.c.h.b16 %v3677
          %v4091 = vunpack.c.l.b16 %v3678
          %v4092 = vunpack.c.h.b16 %v3678
          %v4093 = vunpack.c.l.b16 %v3679
          %v4094 = vunpack.c.h.b16 %v3679
          %v4095 = vunpack.c.l.b16 %v3680
          %v4096 = vunpack.c.h.b16 %v3680
          %v4097 = vunpack.c.l.b16 %v3681
          %v4098 = vunpack.c.h.b16 %v3681
          %v4099 = vunpack.c.l.b16 %v3682
          %v4100 = vunpack.c.h.b16 %v3682
          %v4101 = vunpack.c.l.b16 %v3683
          %v4102 = vunpack.c.h.b16 %v3683
          %v4103 = vunpack.c.l.b16 %v3684
          %v4104 = vunpack.c.h.b16 %v3684
          %v4105 = vunpack.c.l.b16 %v3685
          %v4106 = vunpack.c.h.b16 %v3685
          %v4107 = vunpack.c.l.b16 %v3686
          %v4108 = vunpack.c.h.b16 %v3686
          %v4109 = vunpack.c.l.b16 %v3687
          %v4110 = vunpack.c.h.b16 %v3687
          %v4111 = vunpack.c.l.b16 %v3688
          %v4112 = vunpack.c.h.b16 %v3688
          %v4113 = vunpack.c.l.b16 %v3689
          %v4114 = vunpack.c.h.b16 %v3689
          %v4115 = vunpack.c.l.b16 %v3690
          %v4116 = vunpack.c.h.b16 %v3690
          %v4117 = vunpack.c.l.b16 %v3691
          %v4118 = vunpack.c.h.b16 %v3691
          %v4119 = vunpack.c.l.b16 %v3692
          %v4120 = vunpack.c.h.b16 %v3692
          %v4121 = vunpack.c.l.b16 %v3693
          %v4122 = vunpack.c.h.b16 %v3693
          %v4123 = vunpack.c.l.b16 %v3694
          %v4124 = vunpack.c.h.b16 %v3694
          %v4125 = vunpack.c.l.b16 %v3695
          %v4126 = vunpack.c.h.b16 %v3695
          %v4127 = vunpack.c.l.b16 %v3696
          %v4128 = vunpack.c.h.b16 %v3696
          %v4129 = vunpack.c.l.b16 %v3697
          %v4130 = vunpack.c.h.b16 %v3697
          %v4131 = vunpack.c.l.b16 %v3698
          %v4132 = vunpack.c.h.b16 %v3698
          %v4133 = vunpack.c.l.b16 %v3699
          %v4134 = vunpack.c.h.b16 %v3699
          %v4135 = vpack.c.b16 %v3883, %v3879
          %v4136 = vpack.c.b16 %v3884, %v3880
          %v4137 = vpack.c.b16 %v3885, %v3881
          %v4138 = vpack.c.b16 %v3886, %v3882
          %v4139 = vpack.c.b16 %v3891, %v3887
          %v4140 = vpack.c.b16 %v3892, %v3888
          %v4141 = vpack.c.b16 %v3893, %v3889
          %v4142 = vpack.c.b16 %v3894, %v3890
          %v4143 = vpack.c.b16 %v3899, %v3895
          %v4144 = vpack.c.b16 %v3900, %v3896
          %v4145 = vpack.c.b16 %v3901, %v3897
          %v4146 = vpack.c.b16 %v3902, %v3898
          %v4147 = vpack.c.b16 %v3907, %v3903
          %v4148 = vpack.c.b16 %v3908, %v3904
          %v4149 = vpack.c.b16 %v3909, %v3905
          %v4150 = vpack.c.b16 %v3910, %v3906
          %v4151 = vpack.c.b16 %v3915, %v3911
          %v4152 = vpack.c.b16 %v3916, %v3912
          %v4153 = vpack.c.b16 %v3917, %v3913
          %v4154 = vpack.c.b16 %v3918, %v3914
          %v4155 = vpack.c.b16 %v3923, %v3919
          %v4156 = vpack.c.b16 %v3924, %v3920
          %v4157 = vpack.c.b16 %v3925, %v3921
          %v4158 = vpack.c.b16 %v3926, %v3922
          %v4159 = vpack.c.b16 %v3931, %v3927
          %v4160 = vpack.c.b16 %v3932, %v3928
          %v4161 = vpack.c.b16 %v3933, %v3929
          %v4162 = vpack.c.b16 %v3934, %v3930
          %v4163 = vpack.c.b16 %v3939, %v3935
          %v4164 = vpack.c.b16 %v3940, %v3936
          %v4165 = vpack.c.b16 %v3941, %v3937
          %v4166 = vpack.c.b16 %v3942, %v3938
          %v4167 = vpack.c.b16 %v3947, %v3943
          %v4168 = vpack.c.b16 %v3948, %v3944
          %v4169 = vpack.c.b16 %v3949, %v3945
          %v4170 = vpack.c.b16 %v3950, %v3946
          %v4171 = vpack.c.b16 %v3955, %v3951
          %v4172 = vpack.c.b16 %v3956, %v3952
          %v4173 = vpack.c.b16 %v3957, %v3953
          %v4174 = vpack.c.b16 %v3958, %v3954
          %v4175 = vpack.c.b16 %v3963, %v3959
          %v4176 = vpack.c.b16 %v3964, %v3960
          %v4177 = vpack.c.b16 %v3965, %v3961
          %v4178 = vpack.c.b16 %v3966, %v3962
          %v4179 = vpack.c.b16 %v3971, %v3967
          %v4180 = vpack.c.b16 %v3972, %v3968
          %v4181 = vpack.c.b16 %v3973, %v3969
          %v4182 = vpack.c.b16 %v3974, %v3970
          %v4183 = vpack.c.b16 %v3979, %v3975
          %v4184 = vpack.c.b16 %v3980, %v3976
          %v4185 = vpack.c.b16 %v3981, %v3977
          %v4186 = vpack.c.b16 %v3982, %v3978
          %v4187 = vpack.c.b16 %v3987, %v3983
          %v4188 = vpack.c.b16 %v3988, %v3984
          %v4189 = vpack.c.b16 %v3989, %v3985
          %v4190 = vpack.c.b16 %v3990, %v3986
          %v4191 = vpack.c.b16 %v3995, %v3991
          %v4192 = vpack.c.b16 %v3996, %v3992
          %v4193 = vpack.c.b16 %v3997, %v3993
          %v4194 = vpack.c.b16 %v3998, %v3994
          %v4195 = vpack.c.b16 %v4003, %v3999
          %v4196 = vpack.c.b16 %v4004, %v4000
          %v4197 = vpack.c.b16 %v4005, %v4001
          %v4198 = vpack.c.b16 %v4006, %v4002
          %v4199 = vpack.c.b16 %v4011, %v4007
          %v4200 = vpack.c.b16 %v4012, %v4008
          %v4201 = vpack.c.b16 %v4013, %v4009
          %v4202 = vpack.c.b16 %v4014, %v4010
          %v4203 = vpack.c.b16 %v4019, %v4015
          %v4204 = vpack.c.b16 %v4020, %v4016
          %v4205 = vpack.c.b16 %v4021, %v4017
          %v4206 = vpack.c.b16 %v4022, %v4018
          %v4207 = vpack.c.b16 %v4027, %v4023
          %v4208 = vpack.c.b16 %v4028, %v4024
          %v4209 = vpack.c.b16 %v4029, %v4025
          %v4210 = vpack.c.b16 %v4030, %v4026
          %v4211 = vpack.c.b16 %v4035, %v4031
          %v4212 = vpack.c.b16 %v4036, %v4032
          %v4213 = vpack.c.b16 %v4037, %v4033
          %v4214 = vpack.c.b16 %v4038, %v4034
          %v4215 = vpack.c.b16 %v4043, %v4039
          %v4216 = vpack.c.b16 %v4044, %v4040
          %v4217 = vpack.c.b16 %v4045, %v4041
          %v4218 = vpack.c.b16 %v4046, %v4042
          %v4219 = vpack.c.b16 %v4051, %v4047
          %v4220 = vpack.c.b16 %v4052, %v4048
          %v4221 = vpack.c.b16 %v4053, %v4049
          %v4222 = vpack.c.b16 %v4054, %v4050
          %v4223 = vpack.c.b16 %v4059, %v4055
          %v4224 = vpack.c.b16 %v4060, %v4056
          %v4225 = vpack.c.b16 %v4061, %v4057
          %v4226 = vpack.c.b16 %v4062, %v4058
          %v4227 = vpack.c.b16 %v4067, %v4063
          %v4228 = vpack.c.b16 %v4068, %v4064
          %v4229 = vpack.c.b16 %v4069, %v4065
          %v4230 = vpack.c.b16 %v4070, %v4066
          %v4231 = vpack.c.b16 %v4075, %v4071
          %v4232 = vpack.c.b16 %v4076, %v4072
          %v4233 = vpack.c.b16 %v4077, %v4073
          %v4234 = vpack.c.b16 %v4078, %v4074
          %v4235 = vpack.c.b16 %v4083, %v4079
          %v4236 = vpack.c.b16 %v4084, %v4080
          %v4237 = vpack.c.b16 %v4085, %v4081
          %v4238 = vpack.c.b16 %v4086, %v4082
          %v4239 = vpack.c.b16 %v4091, %v4087
          %v4240 = vpack.c.b16 %v4092, %v4088
          %v4241 = vpack.c.b16 %v4093, %v4089
          %v4242 = vpack.c.b16 %v4094, %v4090
          %v4243 = vpack.c.b16 %v4099, %v4095
          %v4244 = vpack.c.b16 %v4100, %v4096
          %v4245 = vpack.c.b16 %v4101, %v4097
          %v4246 = vpack.c.b16 %v4102, %v4098
          %v4247 = vpack.c.b16 %v4107, %v4103
          %v4248 = vpack.c.b16 %v4108, %v4104
          %v4249 = vpack.c.b16 %v4109, %v4105
          %v4250 = vpack.c.b16 %v4110, %v4106
          %v4251 = vpack.c.b16 %v4115, %v4111
          %v4252 = vpack.c.b16 %v4116, %v4112
          %v4253 = vpack.c.b16 %v4117, %v4113
          %v4254 = vpack.c.b16 %v4118, %v4114
          %v4255 = vpack.c.b16 %v4123, %v4119
          %v4256 = vpack.c.b16 %v4124, %v4120
          %v4257 = vpack.c.b16 %v4125, %v4121
          %v4258 = vpack.c.b16 %v4126, %v4122
          %v4259 = vpack.c.b16 %v4131, %v4127
          %v4260 = vpack.c.b16 %v4132, %v4128
          %v4261 = vpack.c.b16 %v4133, %v4129
          %v4262 = vpack.c.b16 %v4134, %v4130
          %4391 = vmatprep.subr.bf16.mxu0 %v4136
          %4392 = vmatpush1.bf16.msra.mxu0 %v4135
          %4393 = vmatprep.subr.bf16.mxu0 %v4140
          %4394 = vmatpush1.bf16.msra.mxu0 %v4139
          %4395 = vmatprep.subr.bf16.mxu0 %v4144
          %4396 = vmatpush1.bf16.msra.mxu0 %v4143
          %4397 = vmatprep.subr.bf16.mxu0 %v4148
          %4398 = vmatpush1.bf16.msra.mxu0 %v4147
          %4399 = vmatprep.subr.bf16.mxu0 %v4152
          %4400 = vmatpush1.bf16.msra.mxu0 %v4151
          %4401 = vmatprep.subr.bf16.mxu0 %v4156
          %4402 = vmatpush1.bf16.msra.mxu0 %v4155
          %4403 = vmatprep.subr.bf16.mxu0 %v4160
          %4404 = vmatpush1.bf16.msra.mxu0 %v4159
          %4405 = vmatprep.subr.bf16.mxu0 %v4164
          %4406 = vmatpush1.bf16.msra.mxu0 %v4163
          %4407 = vmatprep.subr.bf16.mxu0 %v4168
          %4408 = vmatpush1.bf16.msra.mxu0 %v4167
          %4409 = vmatprep.subr.bf16.mxu0 %v4172
          %4410 = vmatpush1.bf16.msra.mxu0 %v4171
          %4411 = vmatprep.subr.bf16.mxu0 %v4176
          %4412 = vmatpush1.bf16.msra.mxu0 %v4175
          %4413 = vmatprep.subr.bf16.mxu0 %v4180
          %4414 = vmatpush1.bf16.msra.mxu0 %v4179
          %4415 = vmatprep.subr.bf16.mxu0 %v4184
          %4416 = vmatpush1.bf16.msra.mxu0 %v4183
          %4417 = vmatprep.subr.bf16.mxu0 %v4188
          %4418 = vmatpush1.bf16.msra.mxu0 %v4187
          %4419 = vmatprep.subr.bf16.mxu0 %v4192
          %4420 = vmatpush1.bf16.msra.mxu0 %v4191
          %4421 = vmatprep.subr.bf16.mxu0 %v4196
          %4422 = vmatpush1.bf16.msra.mxu0 %v4195
          %4423 = vmatprep.mubr.bf16.mxu0 %v3744
          %4424 = vmatmul.mubr.bf16.gmra.mrb[0].mxu0 %v3737
          %v4425 = vpop.f32.mrb[0].mxu0
          %v4426 = vadd.f32 %v3705, %v4425
          %v4427 = vpop.f32.mrb[0].mxu0
          %v4428 = vadd.f32 %v3709, %v4427
          %v4429 = vpop.f32.mrb[0].mxu0
          %v4430 = vpop.f32.mrb[0].mxu0
          %4431 = vdwg.mxu0
          %4432 = vmatprep.subr.bf16.mxu0 %v4200
          %4433 = vmatpush1.bf16.msra.mxu0 %v4199
          %4434 = vmatprep.subr.bf16.mxu0 %v4204
          %4435 = vmatpush1.bf16.msra.mxu0 %v4203
          %4436 = vmatprep.subr.bf16.mxu0 %v4208
          %4437 = vmatpush1.bf16.msra.mxu0 %v4207
          %4438 = vmatprep.subr.bf16.mxu0 %v4212
          %4439 = vmatpush1.bf16.msra.mxu0 %v4211
          %4440 = vmatprep.subr.bf16.mxu0 %v4216
          %4441 = vmatpush1.bf16.msra.mxu0 %v4215
          %4442 = vmatprep.subr.bf16.mxu0 %v4220
          %4443 = vmatpush1.bf16.msra.mxu0 %v4219
          %4444 = vmatprep.subr.bf16.mxu0 %v4224
          %4445 = vmatpush1.bf16.msra.mxu0 %v4223
          %4446 = vmatprep.subr.bf16.mxu0 %v4228
          %4447 = vmatpush1.bf16.msra.mxu0 %v4227
          %4448 = vmatprep.subr.bf16.mxu0 %v4232
          %4449 = vmatpush1.bf16.msra.mxu0 %v4231
          %4450 = vmatprep.subr.bf16.mxu0 %v4236
          %4451 = vmatpush1.bf16.msra.mxu0 %v4235
          %4452 = vmatprep.subr.bf16.mxu0 %v4240
          %4453 = vmatpush1.bf16.msra.mxu0 %v4239
          %4454 = vmatprep.subr.bf16.mxu0 %v4244
          %4455 = vmatpush1.bf16.msra.mxu0 %v4243
          %4456 = vmatprep.subr.bf16.mxu0 %v4248
          %4457 = vmatpush1.bf16.msra.mxu0 %v4247
          %4458 = vmatprep.subr.bf16.mxu0 %v4252
          %4459 = vmatpush1.bf16.msra.mxu0 %v4251
          %4460 = vmatprep.subr.bf16.mxu0 %v4256
          %4461 = vmatpush1.bf16.msra.mxu0 %v4255
          %4462 = vmatprep.subr.bf16.mxu0 %v4260
          %4463 = vmatpush1.bf16.msra.mxu0 %v4259
          %4464 = vmatprep.mubr.bf16.mxu0 %v3746
          %4465 = vmatmul.mubr.bf16.gmra.mrb[0].mxu0 %v3745
          %v4466 = vpop.f32.mrb[0].mxu0
          %v4467 = vadd.f32 %v4426, %v4466
          %v4468 = vpop.f32.mrb[0].mxu0
          %v4469 = vadd.f32 %v4428, %v4468
          %v4470 = vpop.f32.mrb[0].mxu0
          %v4471 = vpop.f32.mrb[0].mxu0
          %4472 = vdwg.mxu0
          %4473 = vmatprep.subr.bf16.mxu0 %v4138
          %4474 = vmatpush1.bf16.msra.mxu0 %v4137
          %4475 = vmatprep.subr.bf16.mxu0 %v4142
          %4476 = vmatpush1.bf16.msra.mxu0 %v4141
          %4477 = vmatprep.subr.bf16.mxu0 %v4146
          %4478 = vmatpush1.bf16.msra.mxu0 %v4145
          %4479 = vmatprep.subr.bf16.mxu0 %v4150
          %4480 = vmatpush1.bf16.msra.mxu0 %v4149
          %4481 = vmatprep.subr.bf16.mxu0 %v4154
          %4482 = vmatpush1.bf16.msra.mxu0 %v4153
          %4483 = vmatprep.subr.bf16.mxu0 %v4158
          %4484 = vmatpush1.bf16.msra.mxu0 %v4157
          %4485 = vmatprep.subr.bf16.mxu0 %v4162
          %4486 = vmatpush1.bf16.msra.mxu0 %v4161
          %4487 = vmatprep.subr.bf16.mxu0 %v4166
          %4488 = vmatpush1.bf16.msra.mxu0 %v4165
          %4489 = vmatprep.subr.bf16.mxu0 %v4170
          %4490 = vmatpush1.bf16.msra.mxu0 %v4169
          %4491 = vmatprep.subr.bf16.mxu0 %v4174
          %4492 = vmatpush1.bf16.msra.mxu0 %v4173
          %4493 = vmatprep.subr.bf16.mxu0 %v4178
          %4494 = vmatpush1.bf16.msra.mxu0 %v4177
          %4495 = vmatprep.subr.bf16.mxu0 %v4182
          %4496 = vmatpush1.bf16.msra.mxu0 %v4181
          %4497 = vmatprep.subr.bf16.mxu0 %v4186
          %4498 = vmatpush1.bf16.msra.mxu0 %v4185
          %4499 = vmatprep.subr.bf16.mxu0 %v4190
          %4500 = vmatpush1.bf16.msra.mxu0 %v4189
          %4501 = vmatprep.subr.bf16.mxu0 %v4194
          %4502 = vmatpush1.bf16.msra.mxu0 %v4193
          %4503 = vmatprep.subr.bf16.mxu0 %v4198
          %4504 = vmatpush1.bf16.msra.mxu0 %v4197
          %4505 = vmatprep.mubr.bf16.mxu0 %v3744
          %4506 = vmatmul.mubr.bf16.gmra.mrb[0].mxu0 %v3737
          %v4507 = vpop.f32.mrb[0].mxu0
          %v4508 = vadd.f32 %v3713, %v4507
          %v4509 = vpop.f32.mrb[0].mxu0
          %v4510 = vadd.f32 %v3717, %v4509
          %v4511 = vpop.f32.mrb[0].mxu0
          %v4512 = vpop.f32.mrb[0].mxu0
          %4513 = vdwg.mxu0
          %4514 = vmatprep.subr.bf16.mxu0 %v4202
          %4515 = vmatpush1.bf16.msra.mxu0 %v4201
          %4516 = vmatprep.subr.bf16.mxu0 %v4206
          %4517 = vmatpush1.bf16.msra.mxu0 %v4205
          %4518 = vmatprep.subr.bf16.mxu0 %v4210
          %4519 = vmatpush1.bf16.msra.mxu0 %v4209
          %4520 = vmatprep.subr.bf16.mxu0 %v4214
          %4521 = vmatpush1.bf16.msra.mxu0 %v4213
          %4522 = vmatprep.subr.bf16.mxu0 %v4218
          %4523 = vmatpush1.bf16.msra.mxu0 %v4217
          %4524 = vmatprep.subr.bf16.mxu0 %v4222
          %4525 = vmatpush1.bf16.msra.mxu0 %v4221
          %4526 = vmatprep.subr.bf16.mxu0 %v4226
          %4527 = vmatpush1.bf16.msra.mxu0 %v4225
          %4528 = vmatprep.subr.bf16.mxu0 %v4230
          %4529 = vmatpush1.bf16.msra.mxu0 %v4229
          %4530 = vmatprep.subr.bf16.mxu0 %v4234
          %4531 = vmatpush1.bf16.msra.mxu0 %v4233
          %4532 = vmatprep.subr.bf16.mxu0 %v4238
          %4533 = vmatpush1.bf16.msra.mxu0 %v4237
          %4534 = vmatprep.subr.bf16.mxu0 %v4242
          %4535 = vmatpush1.bf16.msra.mxu0 %v4241
          %4536 = vmatprep.subr.bf16.mxu0 %v4246
          %4537 = vmatpush1.bf16.msra.mxu0 %v4245
          %4538 = vmatprep.subr.bf16.mxu0 %v4250
          %4539 = vmatpush1.bf16.msra.mxu0 %v4249
          %4540 = vmatprep.subr.bf16.mxu0 %v4254
          %4541 = vmatpush1.bf16.msra.mxu0 %v4253
          %4542 = vmatprep.subr.bf16.mxu0 %v4258
          %4543 = vmatpush1.bf16.msra.mxu0 %v4257
          %4544 = vmatprep.subr.bf16.mxu0 %v4262
          %4545 = vmatpush1.bf16.msra.mxu0 %v4261
          %4546 = vmatprep.mubr.bf16.mxu0 %v3746
          %4547 = vmatmul.mubr.bf16.gmra.mrb[0].mxu0 %v3745
          %v4548 = vpop.f32.mrb[0].mxu0
          %v4549 = vadd.f32 %v4508, %v4548
          %v4550 = vpop.f32.mrb[0].mxu0
          %v4551 = vadd.f32 %v4510, %v4550
          %v4552 = vpop.f32.mrb[0].mxu0
          %v4553 = vpop.f32.mrb[0].mxu0
          %4554 = vdwg.mxu0
          %v4555 = vmax.f32 %v4467, 0.0
          %v4556 = vmax.f32 %v4469, 0.0
          %v4557 = vmax.f32 %v4549, 0.0
          %v4558 = vmax.f32 %v4551, 0.0
          %v4559 = vpack.c.bf16 %v4555, %v4555
          %v4560 = vpack.c.bf16 %v4556, %v4556
          %v4561 = vpack.c.bf16 %v4557, %v4557
          %v4562 = vpack.c.bf16 %v4558, %v4558
          %s4563 = scalar_lea.vmem %s426, 1024 [#allocation14]
          %v4564 = vld [vmem:[%s4563] sm:$0xff]
          %v4565 = vld [vmem:[%s4563 + $0x8] sm:$0xff]
          %v4566 = vld [vmem:[%s4563 + $0x10] sm:$0xff]
          %v4567 = vld [vmem:[%s4563 + $0x18] sm:$0xff]
          %v4568 = vld [vmem:[%s4563 + $0x20] sm:$0xff]
          %v4569 = vld [vmem:[%s4563 + $0x28] sm:$0xff]
          %v4570 = vld [vmem:[%s4563 + $0x30] sm:$0xff]
          %v4571 = vld [vmem:[%s4563 + $0x38] sm:$0xff]
          %v4572 = vld [vmem:[%s4563 + $0x40] sm:$0xff]
          %v4573 = vld [vmem:[%s4563 + $0x48] sm:$0xff]
          %v4574 = vld [vmem:[%s4563 + $0x50] sm:$0xff]
          %v4575 = vld [vmem:[%s4563 + $0x58] sm:$0xff]
          %v4576 = vld [vmem:[%s4563 + $0x60] sm:$0xff]
          %v4577 = vld [vmem:[%s4563 + $0x68] sm:$0xff]
          %v4578 = vld [vmem:[%s4563 + $0x70] sm:$0xff]
          %v4579 = vld [vmem:[%s4563 + $0x78] sm:$0xff]
          %v4580 = vld [vmem:[%s4563 + $0x80] sm:$0xff]
          %v4581 = vld [vmem:[%s4563 + $0x88] sm:$0xff]
          %v4582 = vld [vmem:[%s4563 + $0x90] sm:$0xff]
          %v4583 = vld [vmem:[%s4563 + $0x98] sm:$0xff]
          %v4584 = vld [vmem:[%s4563 + $0xa0] sm:$0xff]
          %v4585 = vld [vmem:[%s4563 + $0xa8] sm:$0xff]
          %v4586 = vld [vmem:[%s4563 + $0xb0] sm:$0xff]
          %v4587 = vld [vmem:[%s4563 + $0xb8] sm:$0xff]
          %v4588 = vld [vmem:[%s4563 + $0xc0] sm:$0xff]
          %v4589 = vld [vmem:[%s4563 + $0xc8] sm:$0xff]
          %v4590 = vld [vmem:[%s4563 + $0xd0] sm:$0xff]
          %v4591 = vld [vmem:[%s4563 + $0xd8] sm:$0xff]
          %v4592 = vld [vmem:[%s4563 + $0xe0] sm:$0xff]
          %v4593 = vld [vmem:[%s4563 + $0xe8] sm:$0xff]
          %v4594 = vld [vmem:[%s4563 + $0xf0] sm:$0xff]
          %v4595 = vld [vmem:[%s4563 + $0xf8] sm:$0xff]
          %v4596 = vld [vmem:[%s4563 + $0x100] sm:$0xff]
          %v4597 = vld [vmem:[%s4563 + $0x108] sm:$0xff]
          %v4598 = vld [vmem:[%s4563 + $0x110] sm:$0xff]
          %v4599 = vld [vmem:[%s4563 + $0x118] sm:$0xff]
          %v4600 = vld [vmem:[%s4563 + $0x120] sm:$0xff]
          %v4601 = vld [vmem:[%s4563 + $0x128] sm:$0xff]
          %v4602 = vld [vmem:[%s4563 + $0x130] sm:$0xff]
          %v4603 = vld [vmem:[%s4563 + $0x138] sm:$0xff]
          %v4604 = vld [vmem:[%s4563 + $0x140] sm:$0xff]
          %v4605 = vld [vmem:[%s4563 + $0x148] sm:$0xff]
          %v4606 = vld [vmem:[%s4563 + $0x150] sm:$0xff]
          %v4607 = vld [vmem:[%s4563 + $0x158] sm:$0xff]
          %v4608 = vld [vmem:[%s4563 + $0x160] sm:$0xff]
          %v4609 = vld [vmem:[%s4563 + $0x168] sm:$0xff]
          %v4610 = vld [vmem:[%s4563 + $0x170] sm:$0xff]
          %v4611 = vld [vmem:[%s4563 + $0x178] sm:$0xff]
          %v4612 = vld [vmem:[%s4563 + $0x180] sm:$0xff]
          %v4613 = vld [vmem:[%s4563 + $0x188] sm:$0xff]
          %v4614 = vld [vmem:[%s4563 + $0x190] sm:$0xff]
          %v4615 = vld [vmem:[%s4563 + $0x198] sm:$0xff]
          %v4616 = vld [vmem:[%s4563 + $0x1a0] sm:$0xff]
          %v4617 = vld [vmem:[%s4563 + $0x1a8] sm:$0xff]
          %v4618 = vld [vmem:[%s4563 + $0x1b0] sm:$0xff]
          %v4619 = vld [vmem:[%s4563 + $0x1b8] sm:$0xff]
          %v4620 = vld [vmem:[%s4563 + $0x1c0] sm:$0xff]
          %v4621 = vld [vmem:[%s4563 + $0x1c8] sm:$0xff]
          %v4622 = vld [vmem:[%s4563 + $0x1d0] sm:$0xff]
          %v4623 = vld [vmem:[%s4563 + $0x1d8] sm:$0xff]
          %v4624 = vld [vmem:[%s4563 + $0x1e0] sm:$0xff]
          %v4625 = vld [vmem:[%s4563 + $0x1e8] sm:$0xff]
          %v4626 = vld [vmem:[%s4563 + $0x1f0] sm:$0xff]
          %v4627 = vld [vmem:[%s4563 + $0x1f8] sm:$0xff]
          %v4628 = vld [vmem:[%s4563 + $0x200] sm:$0xff]
          %v4629 = vld [vmem:[%s4563 + $0x208] sm:$0xff]
          %v4630 = vld [vmem:[%s4563 + $0x210] sm:$0xff]
          %v4631 = vld [vmem:[%s4563 + $0x218] sm:$0xff]
          %v4632 = vld [vmem:[%s4563 + $0x220] sm:$0xff]
          %v4633 = vld [vmem:[%s4563 + $0x228] sm:$0xff]
          %v4634 = vld [vmem:[%s4563 + $0x230] sm:$0xff]
          %v4635 = vld [vmem:[%s4563 + $0x238] sm:$0xff]
          %v4636 = vld [vmem:[%s4563 + $0x240] sm:$0xff]
          %v4637 = vld [vmem:[%s4563 + $0x248] sm:$0xff]
          %v4638 = vld [vmem:[%s4563 + $0x250] sm:$0xff]
          %v4639 = vld [vmem:[%s4563 + $0x258] sm:$0xff]
          %v4640 = vld [vmem:[%s4563 + $0x260] sm:$0xff]
          %v4641 = vld [vmem:[%s4563 + $0x268] sm:$0xff]
          %v4642 = vld [vmem:[%s4563 + $0x270] sm:$0xff]
          %v4643 = vld [vmem:[%s4563 + $0x278] sm:$0xff]
          %v4644 = vld [vmem:[%s4563 + $0x280] sm:$0xff]
          %v4645 = vld [vmem:[%s4563 + $0x288] sm:$0xff]
          %v4646 = vld [vmem:[%s4563 + $0x290] sm:$0xff]
          %v4647 = vld [vmem:[%s4563 + $0x298] sm:$0xff]
          %v4648 = vld [vmem:[%s4563 + $0x2a0] sm:$0xff]
          %v4649 = vld [vmem:[%s4563 + $0x2a8] sm:$0xff]
          %v4650 = vld [vmem:[%s4563 + $0x2b0] sm:$0xff]
          %v4651 = vld [vmem:[%s4563 + $0x2b8] sm:$0xff]
          %v4652 = vld [vmem:[%s4563 + $0x2c0] sm:$0xff]
          %v4653 = vld [vmem:[%s4563 + $0x2c8] sm:$0xff]
          %v4654 = vld [vmem:[%s4563 + $0x2d0] sm:$0xff]
          %v4655 = vld [vmem:[%s4563 + $0x2d8] sm:$0xff]
          %v4656 = vld [vmem:[%s4563 + $0x2e0] sm:$0xff]
          %v4657 = vld [vmem:[%s4563 + $0x2e8] sm:$0xff]
          %v4658 = vld [vmem:[%s4563 + $0x2f0] sm:$0xff]
          %v4659 = vld [vmem:[%s4563 + $0x2f8] sm:$0xff]
          %v4660 = vld [vmem:[%s4563 + $0x300] sm:$0xff]
          %v4661 = vld [vmem:[%s4563 + $0x308] sm:$0xff]
          %v4662 = vld [vmem:[%s4563 + $0x310] sm:$0xff]
          %v4663 = vld [vmem:[%s4563 + $0x318] sm:$0xff]
          %v4664 = vld [vmem:[%s4563 + $0x320] sm:$0xff]
          %v4665 = vld [vmem:[%s4563 + $0x328] sm:$0xff]
          %v4666 = vld [vmem:[%s4563 + $0x330] sm:$0xff]
          %v4667 = vld [vmem:[%s4563 + $0x338] sm:$0xff]
          %v4668 = vld [vmem:[%s4563 + $0x340] sm:$0xff]
          %v4669 = vld [vmem:[%s4563 + $0x348] sm:$0xff]
          %v4670 = vld [vmem:[%s4563 + $0x350] sm:$0xff]
          %v4671 = vld [vmem:[%s4563 + $0x358] sm:$0xff]
          %v4672 = vld [vmem:[%s4563 + $0x360] sm:$0xff]
          %v4673 = vld [vmem:[%s4563 + $0x368] sm:$0xff]
          %v4674 = vld [vmem:[%s4563 + $0x370] sm:$0xff]
          %v4675 = vld [vmem:[%s4563 + $0x378] sm:$0xff]
          %v4676 = vld [vmem:[%s4563 + $0x380] sm:$0xff]
          %v4677 = vld [vmem:[%s4563 + $0x388] sm:$0xff]
          %v4678 = vld [vmem:[%s4563 + $0x390] sm:$0xff]
          %v4679 = vld [vmem:[%s4563 + $0x398] sm:$0xff]
          %v4680 = vld [vmem:[%s4563 + $0x3a0] sm:$0xff]
          %v4681 = vld [vmem:[%s4563 + $0x3a8] sm:$0xff]
          %v4682 = vld [vmem:[%s4563 + $0x3b0] sm:$0xff]
          %v4683 = vld [vmem:[%s4563 + $0x3b8] sm:$0xff]
          %v4684 = vld [vmem:[%s4563 + $0x3c0] sm:$0xff]
          %v4685 = vld [vmem:[%s4563 + $0x3c8] sm:$0xff]
          %v4686 = vld [vmem:[%s4563 + $0x3d0] sm:$0xff]
          %v4687 = vld [vmem:[%s4563 + $0x3d8] sm:$0xff]
          %v4688 = vld [vmem:[%s4563 + $0x3e0] sm:$0xff]
          %v4689 = vld [vmem:[%s4563 + $0x3e8] sm:$0xff]
          %v4690 = vld [vmem:[%s4563 + $0x3f0] sm:$0xff]
          %v4691 = vld [vmem:[%s4563 + $0x3f8] sm:$0xff]
          %s4692 = scalar_lea.vmem %s486, 1
          %v4693 = vld [vmem:[%s4692] ss:$4 sm:$0xf]
          %v4695 = vlaneseq
          %v4696 = vshrl.u32 %v4695, 7
          %v4697 = vsub.s32 0, %v4696
          %v4698 = vrot.slane %v4693, %v4697
          %v4699 = vlaneseq
          %v4700 = vshrl.u32 %v4699, 7
          %v4701 = vsub.s32 1, %v4700
          %v4702 = vrot.slane %v4693, %v4701
          %v4703 = vlaneseq
          %v4704 = vshrl.u32 %v4703, 7
          %v4705 = vsub.s32 2, %v4704
          %v4706 = vrot.slane %v4693, %v4705
          %v4707 = vlaneseq
          %v4708 = vshrl.u32 %v4707, 7
          %v4709 = vsub.s32 3, %v4708
          %v4710 = vrot.slane %v4693, %v4709
          %v4843 = vunpack.c.l.b16 %v4564
          %v4844 = vunpack.c.h.b16 %v4564
          %v4845 = vunpack.c.l.b16 %v4565
          %v4846 = vunpack.c.h.b16 %v4565
          %v4847 = vunpack.c.l.b16 %v4566
          %v4848 = vunpack.c.h.b16 %v4566
          %v4849 = vunpack.c.l.b16 %v4567
          %v4850 = vunpack.c.h.b16 %v4567
          %v4851 = vunpack.c.l.b16 %v4568
          %v4852 = vunpack.c.h.b16 %v4568
          %v4853 = vunpack.c.l.b16 %v4569
          %v4854 = vunpack.c.h.b16 %v4569
          %v4855 = vunpack.c.l.b16 %v4570
          %v4856 = vunpack.c.h.b16 %v4570
          %v4857 = vunpack.c.l.b16 %v4571
          %v4858 = vunpack.c.h.b16 %v4571
          %v4859 = vunpack.c.l.b16 %v4572
          %v4860 = vunpack.c.h.b16 %v4572
          %v4861 = vunpack.c.l.b16 %v4573
          %v4862 = vunpack.c.h.b16 %v4573
          %v4863 = vunpack.c.l.b16 %v4574
          %v4864 = vunpack.c.h.b16 %v4574
          %v4865 = vunpack.c.l.b16 %v4575
          %v4866 = vunpack.c.h.b16 %v4575
          %v4867 = vunpack.c.l.b16 %v4576
          %v4868 = vunpack.c.h.b16 %v4576
          %v4869 = vunpack.c.l.b16 %v4577
          %v4870 = vunpack.c.h.b16 %v4577
          %v4871 = vunpack.c.l.b16 %v4578
          %v4872 = vunpack.c.h.b16 %v4578
          %v4873 = vunpack.c.l.b16 %v4579
          %v4874 = vunpack.c.h.b16 %v4579
          %v4875 = vunpack.c.l.b16 %v4580
          %v4876 = vunpack.c.h.b16 %v4580
          %v4877 = vunpack.c.l.b16 %v4581
          %v4878 = vunpack.c.h.b16 %v4581
          %v4879 = vunpack.c.l.b16 %v4582
          %v4880 = vunpack.c.h.b16 %v4582
          %v4881 = vunpack.c.l.b16 %v4583
          %v4882 = vunpack.c.h.b16 %v4583
          %v4883 = vunpack.c.l.b16 %v4584
          %v4884 = vunpack.c.h.b16 %v4584
          %v4885 = vunpack.c.l.b16 %v4585
          %v4886 = vunpack.c.h.b16 %v4585
          %v4887 = vunpack.c.l.b16 %v4586
          %v4888 = vunpack.c.h.b16 %v4586
          %v4889 = vunpack.c.l.b16 %v4587
          %v4890 = vunpack.c.h.b16 %v4587
          %v4891 = vunpack.c.l.b16 %v4588
          %v4892 = vunpack.c.h.b16 %v4588
          %v4893 = vunpack.c.l.b16 %v4589
          %v4894 = vunpack.c.h.b16 %v4589
          %v4895 = vunpack.c.l.b16 %v4590
          %v4896 = vunpack.c.h.b16 %v4590
          %v4897 = vunpack.c.l.b16 %v4591
          %v4898 = vunpack.c.h.b16 %v4591
          %v4899 = vunpack.c.l.b16 %v4592
          %v4900 = vunpack.c.h.b16 %v4592
          %v4901 = vunpack.c.l.b16 %v4593
          %v4902 = vunpack.c.h.b16 %v4593
          %v4903 = vunpack.c.l.b16 %v4594
          %v4904 = vunpack.c.h.b16 %v4594
          %v4905 = vunpack.c.l.b16 %v4595
          %v4906 = vunpack.c.h.b16 %v4595
          %v4907 = vunpack.c.l.b16 %v4596
          %v4908 = vunpack.c.h.b16 %v4596
          %v4909 = vunpack.c.l.b16 %v4597
          %v4910 = vunpack.c.h.b16 %v4597
          %v4911 = vunpack.c.l.b16 %v4598
          %v4912 = vunpack.c.h.b16 %v4598
          %v4913 = vunpack.c.l.b16 %v4599
          %v4914 = vunpack.c.h.b16 %v4599
          %v4915 = vunpack.c.l.b16 %v4600
          %v4916 = vunpack.c.h.b16 %v4600
          %v4917 = vunpack.c.l.b16 %v4601
          %v4918 = vunpack.c.h.b16 %v4601
          %v4919 = vunpack.c.l.b16 %v4602
          %v4920 = vunpack.c.h.b16 %v4602
          %v4921 = vunpack.c.l.b16 %v4603
          %v4922 = vunpack.c.h.b16 %v4603
          %v4923 = vunpack.c.l.b16 %v4604
          %v4924 = vunpack.c.h.b16 %v4604
          %v4925 = vunpack.c.l.b16 %v4605
          %v4926 = vunpack.c.h.b16 %v4605
          %v4927 = vunpack.c.l.b16 %v4606
          %v4928 = vunpack.c.h.b16 %v4606
          %v4929 = vunpack.c.l.b16 %v4607
          %v4930 = vunpack.c.h.b16 %v4607
          %v4931 = vunpack.c.l.b16 %v4608
          %v4932 = vunpack.c.h.b16 %v4608
          %v4933 = vunpack.c.l.b16 %v4609
          %v4934 = vunpack.c.h.b16 %v4609
          %v4935 = vunpack.c.l.b16 %v4610
          %v4936 = vunpack.c.h.b16 %v4610
          %v4937 = vunpack.c.l.b16 %v4611
          %v4938 = vunpack.c.h.b16 %v4611
          %v4939 = vunpack.c.l.b16 %v4612
          %v4940 = vunpack.c.h.b16 %v4612
          %v4941 = vunpack.c.l.b16 %v4613
          %v4942 = vunpack.c.h.b16 %v4613
          %v4943 = vunpack.c.l.b16 %v4614
          %v4944 = vunpack.c.h.b16 %v4614
          %v4945 = vunpack.c.l.b16 %v4615
          %v4946 = vunpack.c.h.b16 %v4615
          %v4947 = vunpack.c.l.b16 %v4616
          %v4948 = vunpack.c.h.b16 %v4616
          %v4949 = vunpack.c.l.b16 %v4617
          %v4950 = vunpack.c.h.b16 %v4617
          %v4951 = vunpack.c.l.b16 %v4618
          %v4952 = vunpack.c.h.b16 %v4618
          %v4953 = vunpack.c.l.b16 %v4619
          %v4954 = vunpack.c.h.b16 %v4619
          %v4955 = vunpack.c.l.b16 %v4620
          %v4956 = vunpack.c.h.b16 %v4620
          %v4957 = vunpack.c.l.b16 %v4621
          %v4958 = vunpack.c.h.b16 %v4621
          %v4959 = vunpack.c.l.b16 %v4622
          %v4960 = vunpack.c.h.b16 %v4622
          %v4961 = vunpack.c.l.b16 %v4623
          %v4962 = vunpack.c.h.b16 %v4623
          %v4963 = vunpack.c.l.b16 %v4624
          %v4964 = vunpack.c.h.b16 %v4624
          %v4965 = vunpack.c.l.b16 %v4625
          %v4966 = vunpack.c.h.b16 %v4625
          %v4967 = vunpack.c.l.b16 %v4626
          %v4968 = vunpack.c.h.b16 %v4626
          %v4969 = vunpack.c.l.b16 %v4627
          %v4970 = vunpack.c.h.b16 %v4627
          %v4971 = vunpack.c.l.b16 %v4628
          %v4972 = vunpack.c.h.b16 %v4628
          %v4973 = vunpack.c.l.b16 %v4629
          %v4974 = vunpack.c.h.b16 %v4629
          %v4975 = vunpack.c.l.b16 %v4630
          %v4976 = vunpack.c.h.b16 %v4630
          %v4977 = vunpack.c.l.b16 %v4631
          %v4978 = vunpack.c.h.b16 %v4631
          %v4979 = vunpack.c.l.b16 %v4632
          %v4980 = vunpack.c.h.b16 %v4632
          %v4981 = vunpack.c.l.b16 %v4633
          %v4982 = vunpack.c.h.b16 %v4633
          %v4983 = vunpack.c.l.b16 %v4634
          %v4984 = vunpack.c.h.b16 %v4634
          %v4985 = vunpack.c.l.b16 %v4635
          %v4986 = vunpack.c.h.b16 %v4635
          %v4987 = vunpack.c.l.b16 %v4636
          %v4988 = vunpack.c.h.b16 %v4636
          %v4989 = vunpack.c.l.b16 %v4637
          %v4990 = vunpack.c.h.b16 %v4637
          %v4991 = vunpack.c.l.b16 %v4638
          %v4992 = vunpack.c.h.b16 %v4638
          %v4993 = vunpack.c.l.b16 %v4639
          %v4994 = vunpack.c.h.b16 %v4639
          %v4995 = vunpack.c.l.b16 %v4640
          %v4996 = vunpack.c.h.b16 %v4640
          %v4997 = vunpack.c.l.b16 %v4641
          %v4998 = vunpack.c.h.b16 %v4641
          %v4999 = vunpack.c.l.b16 %v4642
          %v5000 = vunpack.c.h.b16 %v4642
          %v5001 = vunpack.c.l.b16 %v4643
          %v5002 = vunpack.c.h.b16 %v4643
          %v5003 = vunpack.c.l.b16 %v4644
          %v5004 = vunpack.c.h.b16 %v4644
          %v5005 = vunpack.c.l.b16 %v4645
          %v5006 = vunpack.c.h.b16 %v4645
          %v5007 = vunpack.c.l.b16 %v4646
          %v5008 = vunpack.c.h.b16 %v4646
          %v5009 = vunpack.c.l.b16 %v4647
          %v5010 = vunpack.c.h.b16 %v4647
          %v5011 = vunpack.c.l.b16 %v4648
          %v5012 = vunpack.c.h.b16 %v4648
          %v5013 = vunpack.c.l.b16 %v4649
          %v5014 = vunpack.c.h.b16 %v4649
          %v5015 = vunpack.c.l.b16 %v4650
          %v5016 = vunpack.c.h.b16 %v4650
          %v5017 = vunpack.c.l.b16 %v4651
          %v5018 = vunpack.c.h.b16 %v4651
          %v5019 = vunpack.c.l.b16 %v4652
          %v5020 = vunpack.c.h.b16 %v4652
          %v5021 = vunpack.c.l.b16 %v4653
          %v5022 = vunpack.c.h.b16 %v4653
          %v5023 = vunpack.c.l.b16 %v4654
          %v5024 = vunpack.c.h.b16 %v4654
          %v5025 = vunpack.c.l.b16 %v4655
          %v5026 = vunpack.c.h.b16 %v4655
          %v5027 = vunpack.c.l.b16 %v4656
          %v5028 = vunpack.c.h.b16 %v4656
          %v5029 = vunpack.c.l.b16 %v4657
          %v5030 = vunpack.c.h.b16 %v4657
          %v5031 = vunpack.c.l.b16 %v4658
          %v5032 = vunpack.c.h.b16 %v4658
          %v5033 = vunpack.c.l.b16 %v4659
          %v5034 = vunpack.c.h.b16 %v4659
          %v5035 = vunpack.c.l.b16 %v4660
          %v5036 = vunpack.c.h.b16 %v4660
          %v5037 = vunpack.c.l.b16 %v4661
          %v5038 = vunpack.c.h.b16 %v4661
          %v5039 = vunpack.c.l.b16 %v4662
          %v5040 = vunpack.c.h.b16 %v4662
          %v5041 = vunpack.c.l.b16 %v4663
          %v5042 = vunpack.c.h.b16 %v4663
          %v5043 = vunpack.c.l.b16 %v4664
          %v5044 = vunpack.c.h.b16 %v4664
          %v5045 = vunpack.c.l.b16 %v4665
          %v5046 = vunpack.c.h.b16 %v4665
          %v5047 = vunpack.c.l.b16 %v4666
          %v5048 = vunpack.c.h.b16 %v4666
          %v5049 = vunpack.c.l.b16 %v4667
          %v5050 = vunpack.c.h.b16 %v4667
          %v5051 = vunpack.c.l.b16 %v4668
          %v5052 = vunpack.c.h.b16 %v4668
          %v5053 = vunpack.c.l.b16 %v4669
          %v5054 = vunpack.c.h.b16 %v4669
          %v5055 = vunpack.c.l.b16 %v4670
          %v5056 = vunpack.c.h.b16 %v4670
          %v5057 = vunpack.c.l.b16 %v4671
          %v5058 = vunpack.c.h.b16 %v4671
          %v5059 = vunpack.c.l.b16 %v4672
          %v5060 = vunpack.c.h.b16 %v4672
          %v5061 = vunpack.c.l.b16 %v4673
          %v5062 = vunpack.c.h.b16 %v4673
          %v5063 = vunpack.c.l.b16 %v4674
          %v5064 = vunpack.c.h.b16 %v4674
          %v5065 = vunpack.c.l.b16 %v4675
          %v5066 = vunpack.c.h.b16 %v4675
          %v5067 = vunpack.c.l.b16 %v4676
          %v5068 = vunpack.c.h.b16 %v4676
          %v5069 = vunpack.c.l.b16 %v4677
          %v5070 = vunpack.c.h.b16 %v4677
          %v5071 = vunpack.c.l.b16 %v4678
          %v5072 = vunpack.c.h.b16 %v4678
          %v5073 = vunpack.c.l.b16 %v4679
          %v5074 = vunpack.c.h.b16 %v4679
          %v5075 = vunpack.c.l.b16 %v4680
          %v5076 = vunpack.c.h.b16 %v4680
          %v5077 = vunpack.c.l.b16 %v4681
          %v5078 = vunpack.c.h.b16 %v4681
          %v5079 = vunpack.c.l.b16 %v4682
          %v5080 = vunpack.c.h.b16 %v4682
          %v5081 = vunpack.c.l.b16 %v4683
          %v5082 = vunpack.c.h.b16 %v4683
          %v5083 = vunpack.c.l.b16 %v4684
          %v5084 = vunpack.c.h.b16 %v4684
          %v5085 = vunpack.c.l.b16 %v4685
          %v5086 = vunpack.c.h.b16 %v4685
          %v5087 = vunpack.c.l.b16 %v4686
          %v5088 = vunpack.c.h.b16 %v4686
          %v5089 = vunpack.c.l.b16 %v4687
          %v5090 = vunpack.c.h.b16 %v4687
          %v5091 = vunpack.c.l.b16 %v4688
          %v5092 = vunpack.c.h.b16 %v4688
          %v5093 = vunpack.c.l.b16 %v4689
          %v5094 = vunpack.c.h.b16 %v4689
          %v5095 = vunpack.c.l.b16 %v4690
          %v5096 = vunpack.c.h.b16 %v4690
          %v5097 = vunpack.c.l.b16 %v4691
          %v5098 = vunpack.c.h.b16 %v4691
          %v5099 = vpack.c.b16 %v4847, %v4843
          %v5100 = vpack.c.b16 %v4848, %v4844
          %v5101 = vpack.c.b16 %v4849, %v4845
          %v5102 = vpack.c.b16 %v4850, %v4846
          %v5103 = vpack.c.b16 %v4855, %v4851
          %v5104 = vpack.c.b16 %v4856, %v4852
          %v5105 = vpack.c.b16 %v4857, %v4853
          %v5106 = vpack.c.b16 %v4858, %v4854
          %v5107 = vpack.c.b16 %v4863, %v4859
          %v5108 = vpack.c.b16 %v4864, %v4860
          %v5109 = vpack.c.b16 %v4865, %v4861
          %v5110 = vpack.c.b16 %v4866, %v4862
          %v5111 = vpack.c.b16 %v4871, %v4867
          %v5112 = vpack.c.b16 %v4872, %v4868
          %v5113 = vpack.c.b16 %v4873, %v4869
          %v5114 = vpack.c.b16 %v4874, %v4870
          %v5115 = vpack.c.b16 %v4879, %v4875
          %v5116 = vpack.c.b16 %v4880, %v4876
          %v5117 = vpack.c.b16 %v4881, %v4877
          %v5118 = vpack.c.b16 %v4882, %v4878
          %v5119 = vpack.c.b16 %v4887, %v4883
          %v5120 = vpack.c.b16 %v4888, %v4884
          %v5121 = vpack.c.b16 %v4889, %v4885
          %v5122 = vpack.c.b16 %v4890, %v4886
          %v5123 = vpack.c.b16 %v4895, %v4891
          %v5124 = vpack.c.b16 %v4896, %v4892
          %v5125 = vpack.c.b16 %v4897, %v4893
          %v5126 = vpack.c.b16 %v4898, %v4894
          %v5127 = vpack.c.b16 %v4903, %v4899
          %v5128 = vpack.c.b16 %v4904, %v4900
          %v5129 = vpack.c.b16 %v4905, %v4901
          %v5130 = vpack.c.b16 %v4906, %v4902
          %v5131 = vpack.c.b16 %v4911, %v4907
          %v5132 = vpack.c.b16 %v4912, %v4908
          %v5133 = vpack.c.b16 %v4913, %v4909
          %v5134 = vpack.c.b16 %v4914, %v4910
          %v5135 = vpack.c.b16 %v4919, %v4915
          %v5136 = vpack.c.b16 %v4920, %v4916
          %v5137 = vpack.c.b16 %v4921, %v4917
          %v5138 = vpack.c.b16 %v4922, %v4918
          %v5139 = vpack.c.b16 %v4927, %v4923
          %v5140 = vpack.c.b16 %v4928, %v4924
          %v5141 = vpack.c.b16 %v4929, %v4925
          %v5142 = vpack.c.b16 %v4930, %v4926
          %v5143 = vpack.c.b16 %v4935, %v4931
          %v5144 = vpack.c.b16 %v4936, %v4932
          %v5145 = vpack.c.b16 %v4937, %v4933
          %v5146 = vpack.c.b16 %v4938, %v4934
          %v5147 = vpack.c.b16 %v4943, %v4939
          %v5148 = vpack.c.b16 %v4944, %v4940
          %v5149 = vpack.c.b16 %v4945, %v4941
          %v5150 = vpack.c.b16 %v4946, %v4942
          %v5151 = vpack.c.b16 %v4951, %v4947
          %v5152 = vpack.c.b16 %v4952, %v4948
          %v5153 = vpack.c.b16 %v4953, %v4949
          %v5154 = vpack.c.b16 %v4954, %v4950
          %v5155 = vpack.c.b16 %v4959, %v4955
          %v5156 = vpack.c.b16 %v4960, %v4956
          %v5157 = vpack.c.b16 %v4961, %v4957
          %v5158 = vpack.c.b16 %v4962, %v4958
          %v5159 = vpack.c.b16 %v4967, %v4963
          %v5160 = vpack.c.b16 %v4968, %v4964
          %v5161 = vpack.c.b16 %v4969, %v4965
          %v5162 = vpack.c.b16 %v4970, %v4966
          %v5163 = vpack.c.b16 %v4975, %v4971
          %v5164 = vpack.c.b16 %v4976, %v4972
          %v5165 = vpack.c.b16 %v4977, %v4973
          %v5166 = vpack.c.b16 %v4978, %v4974
          %v5167 = vpack.c.b16 %v4983, %v4979
          %v5168 = vpack.c.b16 %v4984, %v4980
          %v5169 = vpack.c.b16 %v4985, %v4981
          %v5170 = vpack.c.b16 %v4986, %v4982
          %v5171 = vpack.c.b16 %v4991, %v4987
          %v5172 = vpack.c.b16 %v4992, %v4988
          %v5173 = vpack.c.b16 %v4993, %v4989
          %v5174 = vpack.c.b16 %v4994, %v4990
          %v5175 = vpack.c.b16 %v4999, %v4995
          %v5176 = vpack.c.b16 %v5000, %v4996
          %v5177 = vpack.c.b16 %v5001, %v4997
          %v5178 = vpack.c.b16 %v5002, %v4998
          %v5179 = vpack.c.b16 %v5007, %v5003
          %v5180 = vpack.c.b16 %v5008, %v5004
          %v5181 = vpack.c.b16 %v5009, %v5005
          %v5182 = vpack.c.b16 %v5010, %v5006
          %v5183 = vpack.c.b16 %v5015, %v5011
          %v5184 = vpack.c.b16 %v5016, %v5012
          %v5185 = vpack.c.b16 %v5017, %v5013
          %v5186 = vpack.c.b16 %v5018, %v5014
          %v5187 = vpack.c.b16 %v5023, %v5019
          %v5188 = vpack.c.b16 %v5024, %v5020
          %v5189 = vpack.c.b16 %v5025, %v5021
          %v5190 = vpack.c.b16 %v5026, %v5022
          %v5191 = vpack.c.b16 %v5031, %v5027
          %v5192 = vpack.c.b16 %v5032, %v5028
          %v5193 = vpack.c.b16 %v5033, %v5029
          %v5194 = vpack.c.b16 %v5034, %v5030
          %v5195 = vpack.c.b16 %v5039, %v5035
          %v5196 = vpack.c.b16 %v5040, %v5036
          %v5197 = vpack.c.b16 %v5041, %v5037
          %v5198 = vpack.c.b16 %v5042, %v5038
          %v5199 = vpack.c.b16 %v5047, %v5043
          %v5200 = vpack.c.b16 %v5048, %v5044
          %v5201 = vpack.c.b16 %v5049, %v5045
          %v5202 = vpack.c.b16 %v5050, %v5046
          %v5203 = vpack.c.b16 %v5055, %v5051
          %v5204 = vpack.c.b16 %v5056, %v5052
          %v5205 = vpack.c.b16 %v5057, %v5053
          %v5206 = vpack.c.b16 %v5058, %v5054
          %v5207 = vpack.c.b16 %v5063, %v5059
          %v5208 = vpack.c.b16 %v5064, %v5060
          %v5209 = vpack.c.b16 %v5065, %v5061
          %v5210 = vpack.c.b16 %v5066, %v5062
          %v5211 = vpack.c.b16 %v5071, %v5067
          %v5212 = vpack.c.b16 %v5072, %v5068
          %v5213 = vpack.c.b16 %v5073, %v5069
          %v5214 = vpack.c.b16 %v5074, %v5070
          %v5215 = vpack.c.b16 %v5079, %v5075
          %v5216 = vpack.c.b16 %v5080, %v5076
          %v5217 = vpack.c.b16 %v5081, %v5077
          %v5218 = vpack.c.b16 %v5082, %v5078
          %v5219 = vpack.c.b16 %v5087, %v5083
          %v5220 = vpack.c.b16 %v5088, %v5084
          %v5221 = vpack.c.b16 %v5089, %v5085
          %v5222 = vpack.c.b16 %v5090, %v5086
          %v5223 = vpack.c.b16 %v5095, %v5091
          %v5224 = vpack.c.b16 %v5096, %v5092
          %v5225 = vpack.c.b16 %v5097, %v5093
          %v5226 = vpack.c.b16 %v5098, %v5094
          %5355 = vmatprep.subr.bf16.mxu0 %v5100
          %5356 = vmatpush1.bf16.msra.mxu0 %v5099
          %5357 = vmatprep.subr.bf16.mxu0 %v5104
          %5358 = vmatpush1.bf16.msra.mxu0 %v5103
          %5359 = vmatprep.subr.bf16.mxu0 %v5108
          %5360 = vmatpush1.bf16.msra.mxu0 %v5107
          %5361 = vmatprep.subr.bf16.mxu0 %v5112
          %5362 = vmatpush1.bf16.msra.mxu0 %v5111
          %5363 = vmatprep.subr.bf16.mxu0 %v5116
          %5364 = vmatpush1.bf16.msra.mxu0 %v5115
          %5365 = vmatprep.subr.bf16.mxu0 %v5120
          %5366 = vmatpush1.bf16.msra.mxu0 %v5119
          %5367 = vmatprep.subr.bf16.mxu0 %v5124
          %5368 = vmatpush1.bf16.msra.mxu0 %v5123
          %5369 = vmatprep.subr.bf16.mxu0 %v5128
          %5370 = vmatpush1.bf16.msra.mxu0 %v5127
          %5371 = vmatprep.subr.bf16.mxu0 %v5132
          %5372 = vmatpush1.bf16.msra.mxu0 %v5131
          %5373 = vmatprep.subr.bf16.mxu0 %v5136
          %5374 = vmatpush1.bf16.msra.mxu0 %v5135
          %5375 = vmatprep.subr.bf16.mxu0 %v5140
          %5376 = vmatpush1.bf16.msra.mxu0 %v5139
          %5377 = vmatprep.subr.bf16.mxu0 %v5144
          %5378 = vmatpush1.bf16.msra.mxu0 %v5143
          %5379 = vmatprep.subr.bf16.mxu0 %v5148
          %5380 = vmatpush1.bf16.msra.mxu0 %v5147
          %5381 = vmatprep.subr.bf16.mxu0 %v5152
          %5382 = vmatpush1.bf16.msra.mxu0 %v5151
          %5383 = vmatprep.subr.bf16.mxu0 %v5156
          %5384 = vmatpush1.bf16.msra.mxu0 %v5155
          %5385 = vmatprep.subr.bf16.mxu0 %v5160
          %5386 = vmatpush1.bf16.msra.mxu0 %v5159
          %5387 = vmatprep.mubr.bf16.mxu0 %v4560
          %5388 = vmatmul.mubr.bf16.gmra.mrb[0].mxu0 %v4559
          %v5389 = vpop.f32.mrb[0].mxu0
          %v5390 = vadd.f32 %v4698, %v5389
          %v5391 = vpop.f32.mrb[0].mxu0
          %v5392 = vadd.f32 %v4702, %v5391
          %v5393 = vpop.f32.mrb[0].mxu0
          %v5394 = vpop.f32.mrb[0].mxu0
          %5395 = vdwg.mxu0
          %5396 = vmatprep.subr.bf16.mxu0 %v5164
          %5397 = vmatpush1.bf16.msra.mxu0 %v5163
          %5398 = vmatprep.subr.bf16.mxu0 %v5168
          %5399 = vmatpush1.bf16.msra.mxu0 %v5167
          %5400 = vmatprep.subr.bf16.mxu0 %v5172
          %5401 = vmatpush1.bf16.msra.mxu0 %v5171
          %5402 = vmatprep.subr.bf16.mxu0 %v5176
          %5403 = vmatpush1.bf16.msra.mxu0 %v5175
          %5404 = vmatprep.subr.bf16.mxu0 %v5180
          %5405 = vmatpush1.bf16.msra.mxu0 %v5179
          %5406 = vmatprep.subr.bf16.mxu0 %v5184
          %5407 = vmatpush1.bf16.msra.mxu0 %v5183
          %5408 = vmatprep.subr.bf16.mxu0 %v5188
          %5409 = vmatpush1.bf16.msra.mxu0 %v5187
          %5410 = vmatprep.subr.bf16.mxu0 %v5192
          %5411 = vmatpush1.bf16.msra.mxu0 %v5191
          %5412 = vmatprep.subr.bf16.mxu0 %v5196
          %5413 = vmatpush1.bf16.msra.mxu0 %v5195
          %5414 = vmatprep.subr.bf16.mxu0 %v5200
          %5415 = vmatpush1.bf16.msra.mxu0 %v5199
          %5416 = vmatprep.subr.bf16.mxu0 %v5204
          %5417 = vmatpush1.bf16.msra.mxu0 %v5203
          %5418 = vmatprep.subr.bf16.mxu0 %v5208
          %5419 = vmatpush1.bf16.msra.mxu0 %v5207
          %5420 = vmatprep.subr.bf16.mxu0 %v5212
          %5421 = vmatpush1.bf16.msra.mxu0 %v5211
          %5422 = vmatprep.subr.bf16.mxu0 %v5216
          %5423 = vmatpush1.bf16.msra.mxu0 %v5215
          %5424 = vmatprep.subr.bf16.mxu0 %v5220
          %5425 = vmatpush1.bf16.msra.mxu0 %v5219
          %5426 = vmatprep.subr.bf16.mxu0 %v5224
          %5427 = vmatpush1.bf16.msra.mxu0 %v5223
          %5428 = vmatprep.mubr.bf16.mxu0 %v4562
          %5429 = vmatmul.mubr.bf16.gmra.mrb[0].mxu0 %v4561
          %v5430 = vpop.f32.mrb[0].mxu0
          %v5431 = vadd.f32 %v5390, %v5430
          %v5432 = vpop.f32.mrb[0].mxu0
          %v5433 = vadd.f32 %v5392, %v5432
          %v5434 = vpop.f32.mrb[0].mxu0
          %v5435 = vpop.f32.mrb[0].mxu0
          %5436 = vdwg.mxu0
          %5437 = vmatprep.subr.bf16.mxu0 %v5102
          %5438 = vmatpush1.bf16.msra.mxu0 %v5101
          %5439 = vmatprep.subr.bf16.mxu0 %v5106
          %5440 = vmatpush1.bf16.msra.mxu0 %v5105
          %5441 = vmatprep.subr.bf16.mxu0 %v5110
          %5442 = vmatpush1.bf16.msra.mxu0 %v5109
          %5443 = vmatprep.subr.bf16.mxu0 %v5114
          %5444 = vmatpush1.bf16.msra.mxu0 %v5113
          %5445 = vmatprep.subr.bf16.mxu0 %v5118
          %5446 = vmatpush1.bf16.msra.mxu0 %v5117
          %5447 = vmatprep.subr.bf16.mxu0 %v5122
          %5448 = vmatpush1.bf16.msra.mxu0 %v5121
          %5449 = vmatprep.subr.bf16.mxu0 %v5126
          %5450 = vmatpush1.bf16.msra.mxu0 %v5125
          %5451 = vmatprep.subr.bf16.mxu0 %v5130
          %5452 = vmatpush1.bf16.msra.mxu0 %v5129
          %5453 = vmatprep.subr.bf16.mxu0 %v5134
          %5454 = vmatpush1.bf16.msra.mxu0 %v5133
          %5455 = vmatprep.subr.bf16.mxu0 %v5138
          %5456 = vmatpush1.bf16.msra.mxu0 %v5137
          %5457 = vmatprep.subr.bf16.mxu0 %v5142
          %5458 = vmatpush1.bf16.msra.mxu0 %v5141
          %5459 = vmatprep.subr.bf16.mxu0 %v5146
          %5460 = vmatpush1.bf16.msra.mxu0 %v5145
          %5461 = vmatprep.subr.bf16.mxu0 %v5150
          %5462 = vmatpush1.bf16.msra.mxu0 %v5149
          %5463 = vmatprep.subr.bf16.mxu0 %v5154
          %5464 = vmatpush1.bf16.msra.mxu0 %v5153
          %5465 = vmatprep.subr.bf16.mxu0 %v5158
          %5466 = vmatpush1.bf16.msra.mxu0 %v5157
          %5467 = vmatprep.subr.bf16.mxu0 %v5162
          %5468 = vmatpush1.bf16.msra.mxu0 %v5161
          %5469 = vmatprep.mubr.bf16.mxu0 %v4560
          %5470 = vmatmul.mubr.bf16.gmra.mrb[0].mxu0 %v4559
          %v5471 = vpop.f32.mrb[0].mxu0
          %v5472 = vadd.f32 %v4706, %v5471
          %v5473 = vpop.f32.mrb[0].mxu0
          %v5474 = vadd.f32 %v4710, %v5473
          %v5475 = vpop.f32.mrb[0].mxu0
          %v5476 = vpop.f32.mrb[0].mxu0
          %5477 = vdwg.mxu0
          %5478 = vmatprep.subr.bf16.mxu0 %v5166
          %5479 = vmatpush1.bf16.msra.mxu0 %v5165
          %5480 = vmatprep.subr.bf16.mxu0 %v5170
          %5481 = vmatpush1.bf16.msra.mxu0 %v5169
          %5482 = vmatprep.subr.bf16.mxu0 %v5174
          %5483 = vmatpush1.bf16.msra.mxu0 %v5173
          %5484 = vmatprep.subr.bf16.mxu0 %v5178
          %5485 = vmatpush1.bf16.msra.mxu0 %v5177
          %5486 = vmatprep.subr.bf16.mxu0 %v5182
          %5487 = vmatpush1.bf16.msra.mxu0 %v5181
          %5488 = vmatprep.subr.bf16.mxu0 %v5186
          %5489 = vmatpush1.bf16.msra.mxu0 %v5185
          %5490 = vmatprep.subr.bf16.mxu0 %v5190
          %5491 = vmatpush1.bf16.msra.mxu0 %v5189
          %5492 = vmatprep.subr.bf16.mxu0 %v5194
          %5493 = vmatpush1.bf16.msra.mxu0 %v5193
          %5494 = vmatprep.subr.bf16.mxu0 %v5198
          %5495 = vmatpush1.bf16.msra.mxu0 %v5197
          %5496 = vmatprep.subr.bf16.mxu0 %v5202
          %5497 = vmatpush1.bf16.msra.mxu0 %v5201
          %5498 = vmatprep.subr.bf16.mxu0 %v5206
          %5499 = vmatpush1.bf16.msra.mxu0 %v5205
          %5500 = vmatprep.subr.bf16.mxu0 %v5210
          %5501 = vmatpush1.bf16.msra.mxu0 %v5209
          %5502 = vmatprep.subr.bf16.mxu0 %v5214
          %5503 = vmatpush1.bf16.msra.mxu0 %v5213
          %5504 = vmatprep.subr.bf16.mxu0 %v5218
          %5505 = vmatpush1.bf16.msra.mxu0 %v5217
          %5506 = vmatprep.subr.bf16.mxu0 %v5222
          %5507 = vmatpush1.bf16.msra.mxu0 %v5221
          %5508 = vmatprep.subr.bf16.mxu0 %v5226
          %5509 = vmatpush1.bf16.msra.mxu0 %v5225
          %5510 = vmatprep.mubr.bf16.mxu0 %v4562
          %5511 = vmatmul.mubr.bf16.gmra.mrb[0].mxu0 %v4561
          %v5512 = vpop.f32.mrb[0].mxu0
          %v5513 = vadd.f32 %v5472, %v5512
          %v5514 = vpop.f32.mrb[0].mxu0
          %v5515 = vadd.f32 %v5474, %v5514
          %v5516 = vpop.f32.mrb[0].mxu0
          %v5517 = vpop.f32.mrb[0].mxu0
          %5518 = vdwg.mxu0
          %v5519 = vmax.f32 %v5431, 0.0
          %v5520 = vmax.f32 %v5433, 0.0
          %v5521 = vmax.f32 %v5513, 0.0
          %v5522 = vmax.f32 %v5515, 0.0
          %v5523 = vpack.c.bf16 %v5519, %v5519
          %v5524 = vpack.c.bf16 %v5520, %v5520
          %v5525 = vpack.c.bf16 %v5521, %v5521
          %v5526 = vpack.c.bf16 %v5522, %v5522
          %s5527 = scalar_lea.vmem %s426, 2048 [#allocation14]
          %v5528 = vld [vmem:[%s5527] sm:$0xff]
          %v5529 = vld [vmem:[%s5527 + $0x8] sm:$0xff]
          %v5530 = vld [vmem:[%s5527 + $0x10] sm:$0xff]
          %v5531 = vld [vmem:[%s5527 + $0x18] sm:$0xff]
          %v5532 = vld [vmem:[%s5527 + $0x20] sm:$0xff]
          %v5533 = vld [vmem:[%s5527 + $0x28] sm:$0xff]
          %v5534 = vld [vmem:[%s5527 + $0x30] sm:$0xff]
          %v5535 = vld [vmem:[%s5527 + $0x38] sm:$0xff]
          %v5536 = vld [vmem:[%s5527 + $0x40] sm:$0xff]
          %v5537 = vld [vmem:[%s5527 + $0x48] sm:$0xff]
          %v5538 = vld [vmem:[%s5527 + $0x50] sm:$0xff]
          %v5539 = vld [vmem:[%s5527 + $0x58] sm:$0xff]
          %v5540 = vld [vmem:[%s5527 + $0x60] sm:$0xff]
          %v5541 = vld [vmem:[%s5527 + $0x68] sm:$0xff]
          %v5542 = vld [vmem:[%s5527 + $0x70] sm:$0xff]
          %v5543 = vld [vmem:[%s5527 + $0x78] sm:$0xff]
          %v5544 = vld [vmem:[%s5527 + $0x80] sm:$0xff]
          %v5545 = vld [vmem:[%s5527 + $0x88] sm:$0xff]
          %v5546 = vld [vmem:[%s5527 + $0x90] sm:$0xff]
          %v5547 = vld [vmem:[%s5527 + $0x98] sm:$0xff]
          %v5548 = vld [vmem:[%s5527 + $0xa0] sm:$0xff]
          %v5549 = vld [vmem:[%s5527 + $0xa8] sm:$0xff]
          %v5550 = vld [vmem:[%s5527 + $0xb0] sm:$0xff]
          %v5551 = vld [vmem:[%s5527 + $0xb8] sm:$0xff]
          %v5552 = vld [vmem:[%s5527 + $0xc0] sm:$0xff]
          %v5553 = vld [vmem:[%s5527 + $0xc8] sm:$0xff]
          %v5554 = vld [vmem:[%s5527 + $0xd0] sm:$0xff]
          %v5555 = vld [vmem:[%s5527 + $0xd8] sm:$0xff]
          %v5556 = vld [vmem:[%s5527 + $0xe0] sm:$0xff]
          %v5557 = vld [vmem:[%s5527 + $0xe8] sm:$0xff]
          %v5558 = vld [vmem:[%s5527 + $0xf0] sm:$0xff]
          %v5559 = vld [vmem:[%s5527 + $0xf8] sm:$0xff]
          %v5560 = vld [vmem:[%s5527 + $0x100] sm:$0xff]
          %v5561 = vld [vmem:[%s5527 + $0x108] sm:$0xff]
          %v5562 = vld [vmem:[%s5527 + $0x110] sm:$0xff]
          %v5563 = vld [vmem:[%s5527 + $0x118] sm:$0xff]
          %v5564 = vld [vmem:[%s5527 + $0x120] sm:$0xff]
          %v5565 = vld [vmem:[%s5527 + $0x128] sm:$0xff]
          %v5566 = vld [vmem:[%s5527 + $0x130] sm:$0xff]
          %v5567 = vld [vmem:[%s5527 + $0x138] sm:$0xff]
          %v5568 = vld [vmem:[%s5527 + $0x140] sm:$0xff]
          %v5569 = vld [vmem:[%s5527 + $0x148] sm:$0xff]
          %v5570 = vld [vmem:[%s5527 + $0x150] sm:$0xff]
          %v5571 = vld [vmem:[%s5527 + $0x158] sm:$0xff]
          %v5572 = vld [vmem:[%s5527 + $0x160] sm:$0xff]
          %v5573 = vld [vmem:[%s5527 + $0x168] sm:$0xff]
          %v5574 = vld [vmem:[%s5527 + $0x170] sm:$0xff]
          %v5575 = vld [vmem:[%s5527 + $0x178] sm:$0xff]
          %v5576 = vld [vmem:[%s5527 + $0x180] sm:$0xff]
          %v5577 = vld [vmem:[%s5527 + $0x188] sm:$0xff]
          %v5578 = vld [vmem:[%s5527 + $0x190] sm:$0xff]
          %v5579 = vld [vmem:[%s5527 + $0x198] sm:$0xff]
          %v5580 = vld [vmem:[%s5527 + $0x1a0] sm:$0xff]
          %v5581 = vld [vmem:[%s5527 + $0x1a8] sm:$0xff]
          %v5582 = vld [vmem:[%s5527 + $0x1b0] sm:$0xff]
          %v5583 = vld [vmem:[%s5527 + $0x1b8] sm:$0xff]
          %v5584 = vld [vmem:[%s5527 + $0x1c0] sm:$0xff]
          %v5585 = vld [vmem:[%s5527 + $0x1c8] sm:$0xff]
          %v5586 = vld [vmem:[%s5527 + $0x1d0] sm:$0xff]
          %v5587 = vld [vmem:[%s5527 + $0x1d8] sm:$0xff]
          %v5588 = vld [vmem:[%s5527 + $0x1e0] sm:$0xff]
          %v5589 = vld [vmem:[%s5527 + $0x1e8] sm:$0xff]
          %v5590 = vld [vmem:[%s5527 + $0x1f0] sm:$0xff]
          %v5591 = vld [vmem:[%s5527 + $0x1f8] sm:$0xff]
          %v5592 = vld [vmem:[%s5527 + $0x200] sm:$0xff]
          %v5593 = vld [vmem:[%s5527 + $0x208] sm:$0xff]
          %v5594 = vld [vmem:[%s5527 + $0x210] sm:$0xff]
          %v5595 = vld [vmem:[%s5527 + $0x218] sm:$0xff]
          %v5596 = vld [vmem:[%s5527 + $0x220] sm:$0xff]
          %v5597 = vld [vmem:[%s5527 + $0x228] sm:$0xff]
          %v5598 = vld [vmem:[%s5527 + $0x230] sm:$0xff]
          %v5599 = vld [vmem:[%s5527 + $0x238] sm:$0xff]
          %v5600 = vld [vmem:[%s5527 + $0x240] sm:$0xff]
          %v5601 = vld [vmem:[%s5527 + $0x248] sm:$0xff]
          %v5602 = vld [vmem:[%s5527 + $0x250] sm:$0xff]
          %v5603 = vld [vmem:[%s5527 + $0x258] sm:$0xff]
          %v5604 = vld [vmem:[%s5527 + $0x260] sm:$0xff]
          %v5605 = vld [vmem:[%s5527 + $0x268] sm:$0xff]
          %v5606 = vld [vmem:[%s5527 + $0x270] sm:$0xff]
          %v5607 = vld [vmem:[%s5527 + $0x278] sm:$0xff]
          %v5608 = vld [vmem:[%s5527 + $0x280] sm:$0xff]
          %v5609 = vld [vmem:[%s5527 + $0x288] sm:$0xff]
          %v5610 = vld [vmem:[%s5527 + $0x290] sm:$0xff]
          %v5611 = vld [vmem:[%s5527 + $0x298] sm:$0xff]
          %v5612 = vld [vmem:[%s5527 + $0x2a0] sm:$0xff]
          %v5613 = vld [vmem:[%s5527 + $0x2a8] sm:$0xff]
          %v5614 = vld [vmem:[%s5527 + $0x2b0] sm:$0xff]
          %v5615 = vld [vmem:[%s5527 + $0x2b8] sm:$0xff]
          %v5616 = vld [vmem:[%s5527 + $0x2c0] sm:$0xff]
          %v5617 = vld [vmem:[%s5527 + $0x2c8] sm:$0xff]
          %v5618 = vld [vmem:[%s5527 + $0x2d0] sm:$0xff]
          %v5619 = vld [vmem:[%s5527 + $0x2d8] sm:$0xff]
          %v5620 = vld [vmem:[%s5527 + $0x2e0] sm:$0xff]
          %v5621 = vld [vmem:[%s5527 + $0x2e8] sm:$0xff]
          %v5622 = vld [vmem:[%s5527 + $0x2f0] sm:$0xff]
          %v5623 = vld [vmem:[%s5527 + $0x2f8] sm:$0xff]
          %v5624 = vld [vmem:[%s5527 + $0x300] sm:$0xff]
          %v5625 = vld [vmem:[%s5527 + $0x308] sm:$0xff]
          %v5626 = vld [vmem:[%s5527 + $0x310] sm:$0xff]
          %v5627 = vld [vmem:[%s5527 + $0x318] sm:$0xff]
          %v5628 = vld [vmem:[%s5527 + $0x320] sm:$0xff]
          %v5629 = vld [vmem:[%s5527 + $0x328] sm:$0xff]
          %v5630 = vld [vmem:[%s5527 + $0x330] sm:$0xff]
          %v5631 = vld [vmem:[%s5527 + $0x338] sm:$0xff]
          %v5632 = vld [vmem:[%s5527 + $0x340] sm:$0xff]
          %v5633 = vld [vmem:[%s5527 + $0x348] sm:$0xff]
          %v5634 = vld [vmem:[%s5527 + $0x350] sm:$0xff]
          %v5635 = vld [vmem:[%s5527 + $0x358] sm:$0xff]
          %v5636 = vld [vmem:[%s5527 + $0x360] sm:$0xff]
          %v5637 = vld [vmem:[%s5527 + $0x368] sm:$0xff]
          %v5638 = vld [vmem:[%s5527 + $0x370] sm:$0xff]
          %v5639 = vld [vmem:[%s5527 + $0x378] sm:$0xff]
          %v5640 = vld [vmem:[%s5527 + $0x380] sm:$0xff]
          %v5641 = vld [vmem:[%s5527 + $0x388] sm:$0xff]
          %v5642 = vld [vmem:[%s5527 + $0x390] sm:$0xff]
          %v5643 = vld [vmem:[%s5527 + $0x398] sm:$0xff]
          %v5644 = vld [vmem:[%s5527 + $0x3a0] sm:$0xff]
          %v5645 = vld [vmem:[%s5527 + $0x3a8] sm:$0xff]
          %v5646 = vld [vmem:[%s5527 + $0x3b0] sm:$0xff]
          %v5647 = vld [vmem:[%s5527 + $0x3b8] sm:$0xff]
          %v5648 = vld [vmem:[%s5527 + $0x3c0] sm:$0xff]
          %v5649 = vld [vmem:[%s5527 + $0x3c8] sm:$0xff]
          %v5650 = vld [vmem:[%s5527 + $0x3d0] sm:$0xff]
          %v5651 = vld [vmem:[%s5527 + $0x3d8] sm:$0xff]
          %v5652 = vld [vmem:[%s5527 + $0x3e0] sm:$0xff]
          %v5653 = vld [vmem:[%s5527 + $0x3e8] sm:$0xff]
          %v5654 = vld [vmem:[%s5527 + $0x3f0] sm:$0xff]
          %v5655 = vld [vmem:[%s5527 + $0x3f8] sm:$0xff]
          %s5656 = scalar_lea.vmem %s486, 2
          %v5657 = vld [vmem:[%s5656] ss:$4 sm:$0xf]
          %v5659 = vlaneseq
          %v5660 = vshrl.u32 %v5659, 7
          %v5661 = vsub.s32 0, %v5660
          %v5662 = vrot.slane %v5657, %v5661
          %v5663 = vlaneseq
          %v5664 = vshrl.u32 %v5663, 7
          %v5665 = vsub.s32 1, %v5664
          %v5666 = vrot.slane %v5657, %v5665
          %v5667 = vlaneseq
          %v5668 = vshrl.u32 %v5667, 7
          %v5669 = vsub.s32 2, %v5668
          %v5670 = vrot.slane %v5657, %v5669
          %v5671 = vlaneseq
          %v5672 = vshrl.u32 %v5671, 7
          %v5673 = vsub.s32 3, %v5672
          %v5674 = vrot.slane %v5657, %v5673
          %v5807 = vunpack.c.l.b16 %v5528
          %v5808 = vunpack.c.h.b16 %v5528
          %v5809 = vunpack.c.l.b16 %v5529
          %v5810 = vunpack.c.h.b16 %v5529
          %v5811 = vunpack.c.l.b16 %v5530
          %v5812 = vunpack.c.h.b16 %v5530
          %v5813 = vunpack.c.l.b16 %v5531
          %v5814 = vunpack.c.h.b16 %v5531
          %v5815 = vunpack.c.l.b16 %v5532
          %v5816 = vunpack.c.h.b16 %v5532
          %v5817 = vunpack.c.l.b16 %v5533
          %v5818 = vunpack.c.h.b16 %v5533
          %v5819 = vunpack.c.l.b16 %v5534
          %v5820 = vunpack.c.h.b16 %v5534
          %v5821 = vunpack.c.l.b16 %v5535
          %v5822 = vunpack.c.h.b16 %v5535
          %v5823 = vunpack.c.l.b16 %v5536
          %v5824 = vunpack.c.h.b16 %v5536
          %v5825 = vunpack.c.l.b16 %v5537
          %v5826 = vunpack.c.h.b16 %v5537
          %v5827 = vunpack.c.l.b16 %v5538
          %v5828 = vunpack.c.h.b16 %v5538
          %v5829 = vunpack.c.l.b16 %v5539
          %v5830 = vunpack.c.h.b16 %v5539
          %v5831 = vunpack.c.l.b16 %v5540
          %v5832 = vunpack.c.h.b16 %v5540
          %v5833 = vunpack.c.l.b16 %v5541
          %v5834 = vunpack.c.h.b16 %v5541
          %v5835 = vunpack.c.l.b16 %v5542
          %v5836 = vunpack.c.h.b16 %v5542
          %v5837 = vunpack.c.l.b16 %v5543
          %v5838 = vunpack.c.h.b16 %v5543
          %v5839 = vunpack.c.l.b16 %v5544
          %v5840 = vunpack.c.h.b16 %v5544
          %v5841 = vunpack.c.l.b16 %v5545
          %v5842 = vunpack.c.h.b16 %v5545
          %v5843 = vunpack.c.l.b16 %v5546
          %v5844 = vunpack.c.h.b16 %v5546
          %v5845 = vunpack.c.l.b16 %v5547
          %v5846 = vunpack.c.h.b16 %v5547
          %v5847 = vunpack.c.l.b16 %v5548
          %v5848 = vunpack.c.h.b16 %v5548
          %v5849 = vunpack.c.l.b16 %v5549
          %v5850 = vunpack.c.h.b16 %v5549
          %v5851 = vunpack.c.l.b16 %v5550
          %v5852 = vunpack.c.h.b16 %v5550
          %v5853 = vunpack.c.l.b16 %v5551
          %v5854 = vunpack.c.h.b16 %v5551
          %v5855 = vunpack.c.l.b16 %v5552
          %v5856 = vunpack.c.h.b16 %v5552
          %v5857 = vunpack.c.l.b16 %v5553
          %v5858 = vunpack.c.h.b16 %v5553
          %v5859 = vunpack.c.l.b16 %v5554
          %v5860 = vunpack.c.h.b16 %v5554
          %v5861 = vunpack.c.l.b16 %v5555
          %v5862 = vunpack.c.h.b16 %v5555
          %v5863 = vunpack.c.l.b16 %v5556
          %v5864 = vunpack.c.h.b16 %v5556
          %v5865 = vunpack.c.l.b16 %v5557
          %v5866 = vunpack.c.h.b16 %v5557
          %v5867 = vunpack.c.l.b16 %v5558
          %v5868 = vunpack.c.h.b16 %v5558
          %v5869 = vunpack.c.l.b16 %v5559
          %v5870 = vunpack.c.h.b16 %v5559
          %v5871 = vunpack.c.l.b16 %v5560
          %v5872 = vunpack.c.h.b16 %v5560
          %v5873 = vunpack.c.l.b16 %v5561
          %v5874 = vunpack.c.h.b16 %v5561
          %v5875 = vunpack.c.l.b16 %v5562
          %v5876 = vunpack.c.h.b16 %v5562
          %v5877 = vunpack.c.l.b16 %v5563
          %v5878 = vunpack.c.h.b16 %v5563
          %v5879 = vunpack.c.l.b16 %v5564
          %v5880 = vunpack.c.h.b16 %v5564
          %v5881 = vunpack.c.l.b16 %v5565
          %v5882 = vunpack.c.h.b16 %v5565
          %v5883 = vunpack.c.l.b16 %v5566
          %v5884 = vunpack.c.h.b16 %v5566
          %v5885 = vunpack.c.l.b16 %v5567
          %v5886 = vunpack.c.h.b16 %v5567
          %v5887 = vunpack.c.l.b16 %v5568
          %v5888 = vunpack.c.h.b16 %v5568
          %v5889 = vunpack.c.l.b16 %v5569
          %v5890 = vunpack.c.h.b16 %v5569
          %v5891 = vunpack.c.l.b16 %v5570
          %v5892 = vunpack.c.h.b16 %v5570
          %v5893 = vunpack.c.l.b16 %v5571
          %v5894 = vunpack.c.h.b16 %v5571
          %v5895 = vunpack.c.l.b16 %v5572
          %v5896 = vunpack.c.h.b16 %v5572
          %v5897 = vunpack.c.l.b16 %v5573
          %v5898 = vunpack.c.h.b16 %v5573
          %v5899 = vunpack.c.l.b16 %v5574
          %v5900 = vunpack.c.h.b16 %v5574
          %v5901 = vunpack.c.l.b16 %v5575
          %v5902 = vunpack.c.h.b16 %v5575
          %v5903 = vunpack.c.l.b16 %v5576
          %v5904 = vunpack.c.h.b16 %v5576
          %v5905 = vunpack.c.l.b16 %v5577
          %v5906 = vunpack.c.h.b16 %v5577
          %v5907 = vunpack.c.l.b16 %v5578
          %v5908 = vunpack.c.h.b16 %v5578
          %v5909 = vunpack.c.l.b16 %v5579
          %v5910 = vunpack.c.h.b16 %v5579
          %v5911 = vunpack.c.l.b16 %v5580
          %v5912 = vunpack.c.h.b16 %v5580
          %v5913 = vunpack.c.l.b16 %v5581
          %v5914 = vunpack.c.h.b16 %v5581
          %v5915 = vunpack.c.l.b16 %v5582
          %v5916 = vunpack.c.h.b16 %v5582
          %v5917 = vunpack.c.l.b16 %v5583
          %v5918 = vunpack.c.h.b16 %v5583
          %v5919 = vunpack.c.l.b16 %v5584
          %v5920 = vunpack.c.h.b16 %v5584
          %v5921 = vunpack.c.l.b16 %v5585
          %v5922 = vunpack.c.h.b16 %v5585
          %v5923 = vunpack.c.l.b16 %v5586
          %v5924 = vunpack.c.h.b16 %v5586
          %v5925 = vunpack.c.l.b16 %v5587
          %v5926 = vunpack.c.h.b16 %v5587
          %v5927 = vunpack.c.l.b16 %v5588
          %v5928 = vunpack.c.h.b16 %v5588
          %v5929 = vunpack.c.l.b16 %v5589
          %v5930 = vunpack.c.h.b16 %v5589
          %v5931 = vunpack.c.l.b16 %v5590
          %v5932 = vunpack.c.h.b16 %v5590
          %v5933 = vunpack.c.l.b16 %v5591
          %v5934 = vunpack.c.h.b16 %v5591
          %v5935 = vunpack.c.l.b16 %v5592
          %v5936 = vunpack.c.h.b16 %v5592
          %v5937 = vunpack.c.l.b16 %v5593
          %v5938 = vunpack.c.h.b16 %v5593
          %v5939 = vunpack.c.l.b16 %v5594
          %v5940 = vunpack.c.h.b16 %v5594
          %v5941 = vunpack.c.l.b16 %v5595
          %v5942 = vunpack.c.h.b16 %v5595
          %v5943 = vunpack.c.l.b16 %v5596
          %v5944 = vunpack.c.h.b16 %v5596
          %v5945 = vunpack.c.l.b16 %v5597
          %v5946 = vunpack.c.h.b16 %v5597
          %v5947 = vunpack.c.l.b16 %v5598
          %v5948 = vunpack.c.h.b16 %v5598
          %v5949 = vunpack.c.l.b16 %v5599
          %v5950 = vunpack.c.h.b16 %v5599
          %v5951 = vunpack.c.l.b16 %v5600
          %v5952 = vunpack.c.h.b16 %v5600
          %v5953 = vunpack.c.l.b16 %v5601
          %v5954 = vunpack.c.h.b16 %v5601
          %v5955 = vunpack.c.l.b16 %v5602
          %v5956 = vunpack.c.h.b16 %v5602
          %v5957 = vunpack.c.l.b16 %v5603
          %v5958 = vunpack.c.h.b16 %v5603
          %v5959 = vunpack.c.l.b16 %v5604
          %v5960 = vunpack.c.h.b16 %v5604
          %v5961 = vunpack.c.l.b16 %v5605
          %v5962 = vunpack.c.h.b16 %v5605
          %v5963 = vunpack.c.l.b16 %v5606
          %v5964 = vunpack.c.h.b16 %v5606
          %v5965 = vunpack.c.l.b16 %v5607
          %v5966 = vunpack.c.h.b16 %v5607
          %v5967 = vunpack.c.l.b16 %v5608
          %v5968 = vunpack.c.h.b16 %v5608
          %v5969 = vunpack.c.l.b16 %v5609
          %v5970 = vunpack.c.h.b16 %v5609
          %v5971 = vunpack.c.l.b16 %v5610
          %v5972 = vunpack.c.h.b16 %v5610
          %v5973 = vunpack.c.l.b16 %v5611
          %v5974 = vunpack.c.h.b16 %v5611
          %v5975 = vunpack.c.l.b16 %v5612
          %v5976 = vunpack.c.h.b16 %v5612
          %v5977 = vunpack.c.l.b16 %v5613
          %v5978 = vunpack.c.h.b16 %v5613
          %v5979 = vunpack.c.l.b16 %v5614
          %v5980 = vunpack.c.h.b16 %v5614
          %v5981 = vunpack.c.l.b16 %v5615
          %v5982 = vunpack.c.h.b16 %v5615
          %v5983 = vunpack.c.l.b16 %v5616
          %v5984 = vunpack.c.h.b16 %v5616
          %v5985 = vunpack.c.l.b16 %v5617
          %v5986 = vunpack.c.h.b16 %v5617
          %v5987 = vunpack.c.l.b16 %v5618
          %v5988 = vunpack.c.h.b16 %v5618
          %v5989 = vunpack.c.l.b16 %v5619
          %v5990 = vunpack.c.h.b16 %v5619
          %v5991 = vunpack.c.l.b16 %v5620
          %v5992 = vunpack.c.h.b16 %v5620
          %v5993 = vunpack.c.l.b16 %v5621
          %v5994 = vunpack.c.h.b16 %v5621
          %v5995 = vunpack.c.l.b16 %v5622
          %v5996 = vunpack.c.h.b16 %v5622
          %v5997 = vunpack.c.l.b16 %v5623
          %v5998 = vunpack.c.h.b16 %v5623
          %v5999 = vunpack.c.l.b16 %v5624
          %v6000 = vunpack.c.h.b16 %v5624
          %v6001 = vunpack.c.l.b16 %v5625
          %v6002 = vunpack.c.h.b16 %v5625
          %v6003 = vunpack.c.l.b16 %v5626
          %v6004 = vunpack.c.h.b16 %v5626
          %v6005 = vunpack.c.l.b16 %v5627
          %v6006 = vunpack.c.h.b16 %v5627
          %v6007 = vunpack.c.l.b16 %v5628
          %v6008 = vunpack.c.h.b16 %v5628
          %v6009 = vunpack.c.l.b16 %v5629
          %v6010 = vunpack.c.h.b16 %v5629
          %v6011 = vunpack.c.l.b16 %v5630
          %v6012 = vunpack.c.h.b16 %v5630
          %v6013 = vunpack.c.l.b16 %v5631
          %v6014 = vunpack.c.h.b16 %v5631
          %v6015 = vunpack.c.l.b16 %v5632
          %v6016 = vunpack.c.h.b16 %v5632
          %v6017 = vunpack.c.l.b16 %v5633
          %v6018 = vunpack.c.h.b16 %v5633
          %v6019 = vunpack.c.l.b16 %v5634
          %v6020 = vunpack.c.h.b16 %v5634
          %v6021 = vunpack.c.l.b16 %v5635
          %v6022 = vunpack.c.h.b16 %v5635
          %v6023 = vunpack.c.l.b16 %v5636
          %v6024 = vunpack.c.h.b16 %v5636
          %v6025 = vunpack.c.l.b16 %v5637
          %v6026 = vunpack.c.h.b16 %v5637
          %v6027 = vunpack.c.l.b16 %v5638
          %v6028 = vunpack.c.h.b16 %v5638
          %v6029 = vunpack.c.l.b16 %v5639
          %v6030 = vunpack.c.h.b16 %v5639
          %v6031 = vunpack.c.l.b16 %v5640
          %v6032 = vunpack.c.h.b16 %v5640
          %v6033 = vunpack.c.l.b16 %v5641
          %v6034 = vunpack.c.h.b16 %v5641
          %v6035 = vunpack.c.l.b16 %v5642
          %v6036 = vunpack.c.h.b16 %v5642
          %v6037 = vunpack.c.l.b16 %v5643
          %v6038 = vunpack.c.h.b16 %v5643
          %v6039 = vunpack.c.l.b16 %v5644
          %v6040 = vunpack.c.h.b16 %v5644
          %v6041 = vunpack.c.l.b16 %v5645
          %v6042 = vunpack.c.h.b16 %v5645
          %v6043 = vunpack.c.l.b16 %v5646
          %v6044 = vunpack.c.h.b16 %v5646
          %v6045 = vunpack.c.l.b16 %v5647
          %v6046 = vunpack.c.h.b16 %v5647
          %v6047 = vunpack.c.l.b16 %v5648
          %v6048 = vunpack.c.h.b16 %v5648
          %v6049 = vunpack.c.l.b16 %v5649
          %v6050 = vunpack.c.h.b16 %v5649
          %v6051 = vunpack.c.l.b16 %v5650
          %v6052 = vunpack.c.h.b16 %v5650
          %v6053 = vunpack.c.l.b16 %v5651
          %v6054 = vunpack.c.h.b16 %v5651
          %v6055 = vunpack.c.l.b16 %v5652
          %v6056 = vunpack.c.h.b16 %v5652
          %v6057 = vunpack.c.l.b16 %v5653
          %v6058 = vunpack.c.h.b16 %v5653
          %v6059 = vunpack.c.l.b16 %v5654
          %v6060 = vunpack.c.h.b16 %v5654
          %v6061 = vunpack.c.l.b16 %v5655
          %v6062 = vunpack.c.h.b16 %v5655
          %v6063 = vpack.c.b16 %v5811, %v5807
          %v6064 = vpack.c.b16 %v5812, %v5808
          %v6065 = vpack.c.b16 %v5813, %v5809
          %v6066 = vpack.c.b16 %v5814, %v5810
          %v6067 = vpack.c.b16 %v5819, %v5815
          %v6068 = vpack.c.b16 %v5820, %v5816
          %v6069 = vpack.c.b16 %v5821, %v5817
          %v6070 = vpack.c.b16 %v5822, %v5818
          %v6071 = vpack.c.b16 %v5827, %v5823
          %v6072 = vpack.c.b16 %v5828, %v5824
          %v6073 = vpack.c.b16 %v5829, %v5825
          %v6074 = vpack.c.b16 %v5830, %v5826
          %v6075 = vpack.c.b16 %v5835, %v5831
          %v6076 = vpack.c.b16 %v5836, %v5832
          %v6077 = vpack.c.b16 %v5837, %v5833
          %v6078 = vpack.c.b16 %v5838, %v5834
          %v6079 = vpack.c.b16 %v5843, %v5839
          %v6080 = vpack.c.b16 %v5844, %v5840
          %v6081 = vpack.c.b16 %v5845, %v5841
          %v6082 = vpack.c.b16 %v5846, %v5842
          %v6083 = vpack.c.b16 %v5851, %v5847
          %v6084 = vpack.c.b16 %v5852, %v5848
          %v6085 = vpack.c.b16 %v5853, %v5849
          %v6086 = vpack.c.b16 %v5854, %v5850
          %v6087 = vpack.c.b16 %v5859, %v5855
          %v6088 = vpack.c.b16 %v5860, %v5856
          %v6089 = vpack.c.b16 %v5861, %v5857
          %v6090 = vpack.c.b16 %v5862, %v5858
          %v6091 = vpack.c.b16 %v5867, %v5863
          %v6092 = vpack.c.b16 %v5868, %v5864
          %v6093 = vpack.c.b16 %v5869, %v5865
          %v6094 = vpack.c.b16 %v5870, %v5866
          %v6095 = vpack.c.b16 %v5875, %v5871
          %v6096 = vpack.c.b16 %v5876, %v5872
          %v6097 = vpack.c.b16 %v5877, %v5873
          %v6098 = vpack.c.b16 %v5878, %v5874
          %v6099 = vpack.c.b16 %v5883, %v5879
          %v6100 = vpack.c.b16 %v5884, %v5880
          %v6101 = vpack.c.b16 %v5885, %v5881
          %v6102 = vpack.c.b16 %v5886, %v5882
          %v6103 = vpack.c.b16 %v5891, %v5887
          %v6104 = vpack.c.b16 %v5892, %v5888
          %v6105 = vpack.c.b16 %v5893, %v5889
          %v6106 = vpack.c.b16 %v5894, %v5890
          %v6107 = vpack.c.b16 %v5899, %v5895
          %v6108 = vpack.c.b16 %v5900, %v5896
          %v6109 = vpack.c.b16 %v5901, %v5897
          %v6110 = vpack.c.b16 %v5902, %v5898
          %v6111 = vpack.c.b16 %v5907, %v5903
          %v6112 = vpack.c.b16 %v5908, %v5904
          %v6113 = vpack.c.b16 %v5909, %v5905
          %v6114 = vpack.c.b16 %v5910, %v5906
          %v6115 = vpack.c.b16 %v5915, %v5911
          %v6116 = vpack.c.b16 %v5916, %v5912
          %v6117 = vpack.c.b16 %v5917, %v5913
          %v6118 = vpack.c.b16 %v5918, %v5914
          %v6119 = vpack.c.b16 %v5923, %v5919
          %v6120 = vpack.c.b16 %v5924, %v5920
          %v6121 = vpack.c.b16 %v5925, %v5921
          %v6122 = vpack.c.b16 %v5926, %v5922
          %v6123 = vpack.c.b16 %v5931, %v5927
          %v6124 = vpack.c.b16 %v5932, %v5928
          %v6125 = vpack.c.b16 %v5933, %v5929
          %v6126 = vpack.c.b16 %v5934, %v5930
          %v6127 = vpack.c.b16 %v5939, %v5935
          %v6128 = vpack.c.b16 %v5940, %v5936
          %v6129 = vpack.c.b16 %v5941, %v5937
          %v6130 = vpack.c.b16 %v5942, %v5938
          %v6131 = vpack.c.b16 %v5947, %v5943
          %v6132 = vpack.c.b16 %v5948, %v5944
          %v6133 = vpack.c.b16 %v5949, %v5945
          %v6134 = vpack.c.b16 %v5950, %v5946
          %v6135 = vpack.c.b16 %v5955, %v5951
          %v6136 = vpack.c.b16 %v5956, %v5952
          %v6137 = vpack.c.b16 %v5957, %v5953
          %v6138 = vpack.c.b16 %v5958, %v5954
          %v6139 = vpack.c.b16 %v5963, %v5959
          %v6140 = vpack.c.b16 %v5964, %v5960
          %v6141 = vpack.c.b16 %v5965, %v5961
          %v6142 = vpack.c.b16 %v5966, %v5962
          %v6143 = vpack.c.b16 %v5971, %v5967
          %v6144 = vpack.c.b16 %v5972, %v5968
          %v6145 = vpack.c.b16 %v5973, %v5969
          %v6146 = vpack.c.b16 %v5974, %v5970
          %v6147 = vpack.c.b16 %v5979, %v5975
          %v6148 = vpack.c.b16 %v5980, %v5976
          %v6149 = vpack.c.b16 %v5981, %v5977
          %v6150 = vpack.c.b16 %v5982, %v5978
          %v6151 = vpack.c.b16 %v5987, %v5983
          %v6152 = vpack.c.b16 %v5988, %v5984
          %v6153 = vpack.c.b16 %v5989, %v5985
          %v6154 = vpack.c.b16 %v5990, %v5986
          %v6155 = vpack.c.b16 %v5995, %v5991
          %v6156 = vpack.c.b16 %v5996, %v5992
          %v6157 = vpack.c.b16 %v5997, %v5993
          %v6158 = vpack.c.b16 %v5998, %v5994
          %v6159 = vpack.c.b16 %v6003, %v5999
          %v6160 = vpack.c.b16 %v6004, %v6000
          %v6161 = vpack.c.b16 %v6005, %v6001
          %v6162 = vpack.c.b16 %v6006, %v6002
          %v6163 = vpack.c.b16 %v6011, %v6007
          %v6164 = vpack.c.b16 %v6012, %v6008
          %v6165 = vpack.c.b16 %v6013, %v6009
          %v6166 = vpack.c.b16 %v6014, %v6010
          %v6167 = vpack.c.b16 %v6019, %v6015
          %v6168 = vpack.c.b16 %v6020, %v6016
          %v6169 = vpack.c.b16 %v6021, %v6017
          %v6170 = vpack.c.b16 %v6022, %v6018
          %v6171 = vpack.c.b16 %v6027, %v6023
          %v6172 = vpack.c.b16 %v6028, %v6024
          %v6173 = vpack.c.b16 %v6029, %v6025
          %v6174 = vpack.c.b16 %v6030, %v6026
          %v6175 = vpack.c.b16 %v6035, %v6031
          %v6176 = vpack.c.b16 %v6036, %v6032
          %v6177 = vpack.c.b16 %v6037, %v6033
          %v6178 = vpack.c.b16 %v6038, %v6034
          %v6179 = vpack.c.b16 %v6043, %v6039
          %v6180 = vpack.c.b16 %v6044, %v6040
          %v6181 = vpack.c.b16 %v6045, %v6041
          %v6182 = vpack.c.b16 %v6046, %v6042
          %v6183 = vpack.c.b16 %v6051, %v6047
          %v6184 = vpack.c.b16 %v6052, %v6048
          %v6185 = vpack.c.b16 %v6053, %v6049
          %v6186 = vpack.c.b16 %v6054, %v6050
          %v6187 = vpack.c.b16 %v6059, %v6055
          %v6188 = vpack.c.b16 %v6060, %v6056
          %v6189 = vpack.c.b16 %v6061, %v6057
          %v6190 = vpack.c.b16 %v6062, %v6058
          %6319 = vmatprep.subr.bf16.mxu0 %v6064
          %6320 = vmatpush1.bf16.msra.mxu0 %v6063
          %6321 = vmatprep.subr.bf16.mxu0 %v6068
          %6322 = vmatpush1.bf16.msra.mxu0 %v6067
          %6323 = vmatprep.subr.bf16.mxu0 %v6072
          %6324 = vmatpush1.bf16.msra.mxu0 %v6071
          %6325 = vmatprep.subr.bf16.mxu0 %v6076
          %6326 = vmatpush1.bf16.msra.mxu0 %v6075
          %6327 = vmatprep.subr.bf16.mxu0 %v6080
          %6328 = vmatpush1.bf16.msra.mxu0 %v6079
          %6329 = vmatprep.subr.bf16.mxu0 %v6084
          %6330 = vmatpush1.bf16.msra.mxu0 %v6083
          %6331 = vmatprep.subr.bf16.mxu0 %v6088
          %6332 = vmatpush1.bf16.msra.mxu0 %v6087
          %6333 = vmatprep.subr.bf16.mxu0 %v6092
          %6334 = vmatpush1.bf16.msra.mxu0 %v6091
          %6335 = vmatprep.subr.bf16.mxu0 %v6096
          %6336 = vmatpush1.bf16.msra.mxu0 %v6095
          %6337 = vmatprep.subr.bf16.mxu0 %v6100
          %6338 = vmatpush1.bf16.msra.mxu0 %v6099
          %6339 = vmatprep.subr.bf16.mxu0 %v6104
          %6340 = vmatpush1.bf16.msra.mxu0 %v6103
          %6341 = vmatprep.subr.bf16.mxu0 %v6108
          %6342 = vmatpush1.bf16.msra.mxu0 %v6107
          %6343 = vmatprep.subr.bf16.mxu0 %v6112
          %6344 = vmatpush1.bf16.msra.mxu0 %v6111
          %6345 = vmatprep.subr.bf16.mxu0 %v6116
          %6346 = vmatpush1.bf16.msra.mxu0 %v6115
          %6347 = vmatprep.subr.bf16.mxu0 %v6120
          %6348 = vmatpush1.bf16.msra.mxu0 %v6119
          %6349 = vmatprep.subr.bf16.mxu0 %v6124
          %6350 = vmatpush1.bf16.msra.mxu0 %v6123
          %6351 = vmatprep.mubr.bf16.mxu0 %v5524
          %6352 = vmatmul.mubr.bf16.gmra.mrb[0].mxu0 %v5523
          %v6353 = vpop.f32.mrb[0].mxu0
          %v6354 = vadd.f32 %v5662, %v6353
          %v6355 = vpop.f32.mrb[0].mxu0
          %v6356 = vadd.f32 %v5666, %v6355
          %v6357 = vpop.f32.mrb[0].mxu0
          %v6358 = vpop.f32.mrb[0].mxu0
          %6359 = vdwg.mxu0
          %6360 = vmatprep.subr.bf16.mxu0 %v6128
          %6361 = vmatpush1.bf16.msra.mxu0 %v6127
          %6362 = vmatprep.subr.bf16.mxu0 %v6132
          %6363 = vmatpush1.bf16.msra.mxu0 %v6131
          %6364 = vmatprep.subr.bf16.mxu0 %v6136
          %6365 = vmatpush1.bf16.msra.mxu0 %v6135
          %6366 = vmatprep.subr.bf16.mxu0 %v6140
          %6367 = vmatpush1.bf16.msra.mxu0 %v6139
          %6368 = vmatprep.subr.bf16.mxu0 %v6144
          %6369 = vmatpush1.bf16.msra.mxu0 %v6143
          %6370 = vmatprep.subr.bf16.mxu0 %v6148
          %6371 = vmatpush1.bf16.msra.mxu0 %v6147
          %6372 = vmatprep.subr.bf16.mxu0 %v6152
          %6373 = vmatpush1.bf16.msra.mxu0 %v6151
          %6374 = vmatprep.subr.bf16.mxu0 %v6156
          %6375 = vmatpush1.bf16.msra.mxu0 %v6155
          %6376 = vmatprep.subr.bf16.mxu0 %v6160
          %6377 = vmatpush1.bf16.msra.mxu0 %v6159
          %6378 = vmatprep.subr.bf16.mxu0 %v6164
          %6379 = vmatpush1.bf16.msra.mxu0 %v6163
          %6380 = vmatprep.subr.bf16.mxu0 %v6168
          %6381 = vmatpush1.bf16.msra.mxu0 %v6167
          %6382 = vmatprep.subr.bf16.mxu0 %v6172
          %6383 = vmatpush1.bf16.msra.mxu0 %v6171
          %6384 = vmatprep.subr.bf16.mxu0 %v6176
          %6385 = vmatpush1.bf16.msra.mxu0 %v6175
          %6386 = vmatprep.subr.bf16.mxu0 %v6180
          %6387 = vmatpush1.bf16.msra.mxu0 %v6179
          %6388 = vmatprep.subr.bf16.mxu0 %v6184
          %6389 = vmatpush1.bf16.msra.mxu0 %v6183
          %6390 = vmatprep.subr.bf16.mxu0 %v6188
          %6391 = vmatpush1.bf16.msra.mxu0 %v6187
          %6392 = vmatprep.mubr.bf16.mxu0 %v5526
          %6393 = vmatmul.mubr.bf16.gmra.mrb[0].mxu0 %v5525
          %v6394 = vpop.f32.mrb[0].mxu0
          %v6395 = vadd.f32 %v6354, %v6394
          %v6396 = vpop.f32.mrb[0].mxu0
          %v6397 = vadd.f32 %v6356, %v6396
          %v6398 = vpop.f32.mrb[0].mxu0
          %v6399 = vpop.f32.mrb[0].mxu0
          %6400 = vdwg.mxu0
          %6401 = vmatprep.subr.bf16.mxu0 %v6066
          %6402 = vmatpush1.bf16.msra.mxu0 %v6065
          %6403 = vmatprep.subr.bf16.mxu0 %v6070
          %6404 = vmatpush1.bf16.msra.mxu0 %v6069
          %6405 = vmatprep.subr.bf16.mxu0 %v6074
          %6406 = vmatpush1.bf16.msra.mxu0 %v6073
          %6407 = vmatprep.subr.bf16.mxu0 %v6078
          %6408 = vmatpush1.bf16.msra.mxu0 %v6077
          %6409 = vmatprep.subr.bf16.mxu0 %v6082
          %6410 = vmatpush1.bf16.msra.mxu0 %v6081
          %6411 = vmatprep.subr.bf16.mxu0 %v6086
          %6412 = vmatpush1.bf16.msra.mxu0 %v6085
          %6413 = vmatprep.subr.bf16.mxu0 %v6090
          %6414 = vmatpush1.bf16.msra.mxu0 %v6089
          %6415 = vmatprep.subr.bf16.mxu0 %v6094
          %6416 = vmatpush1.bf16.msra.mxu0 %v6093
          %6417 = vmatprep.subr.bf16.mxu0 %v6098
          %6418 = vmatpush1.bf16.msra.mxu0 %v6097
          %6419 = vmatprep.subr.bf16.mxu0 %v6102
          %6420 = vmatpush1.bf16.msra.mxu0 %v6101
          %6421 = vmatprep.subr.bf16.mxu0 %v6106
          %6422 = vmatpush1.bf16.msra.mxu0 %v6105
          %6423 = vmatprep.subr.bf16.mxu0 %v6110
          %6424 = vmatpush1.bf16.msra.mxu0 %v6109
          %6425 = vmatprep.subr.bf16.mxu0 %v6114
          %6426 = vmatpush1.bf16.msra.mxu0 %v6113
          %6427 = vmatprep.subr.bf16.mxu0 %v6118
          %6428 = vmatpush1.bf16.msra.mxu0 %v6117
          %6429 = vmatprep.subr.bf16.mxu0 %v6122
          %6430 = vmatpush1.bf16.msra.mxu0 %v6121
          %6431 = vmatprep.subr.bf16.mxu0 %v6126
          %6432 = vmatpush1.bf16.msra.mxu0 %v6125
          %6433 = vmatprep.mubr.bf16.mxu0 %v5524
          %6434 = vmatmul.mubr.bf16.gmra.mrb[0].mxu0 %v5523
          %v6435 = vpop.f32.mrb[0].mxu0
          %v6436 = vadd.f32 %v5670, %v6435
          %v6437 = vpop.f32.mrb[0].mxu0
          %v6438 = vadd.f32 %v5674, %v6437
          %v6439 = vpop.f32.mrb[0].mxu0
          %v6440 = vpop.f32.mrb[0].mxu0
          %6441 = vdwg.mxu0
          %6442 = vmatprep.subr.bf16.mxu0 %v6130
          %6443 = vmatpush1.bf16.msra.mxu0 %v6129
          %6444 = vmatprep.subr.bf16.mxu0 %v6134
          %6445 = vmatpush1.bf16.msra.mxu0 %v6133
          %6446 = vmatprep.subr.bf16.mxu0 %v6138
          %6447 = vmatpush1.bf16.msra.mxu0 %v6137
          %6448 = vmatprep.subr.bf16.mxu0 %v6142
          %6449 = vmatpush1.bf16.msra.mxu0 %v6141
          %6450 = vmatprep.subr.bf16.mxu0 %v6146
          %6451 = vmatpush1.bf16.msra.mxu0 %v6145
          %6452 = vmatprep.subr.bf16.mxu0 %v6150
          %6453 = vmatpush1.bf16.msra.mxu0 %v6149
          %6454 = vmatprep.subr.bf16.mxu0 %v6154
          %6455 = vmatpush1.bf16.msra.mxu0 %v6153
          %6456 = vmatprep.subr.bf16.mxu0 %v6158
          %6457 = vmatpush1.bf16.msra.mxu0 %v6157
          %6458 = vmatprep.subr.bf16.mxu0 %v6162
          %6459 = vmatpush1.bf16.msra.mxu0 %v6161
          %6460 = vmatprep.subr.bf16.mxu0 %v6166
          %6461 = vmatpush1.bf16.msra.mxu0 %v6165
          %6462 = vmatprep.subr.bf16.mxu0 %v6170
          %6463 = vmatpush1.bf16.msra.mxu0 %v6169
          %6464 = vmatprep.subr.bf16.mxu0 %v6174
          %6465 = vmatpush1.bf16.msra.mxu0 %v6173
          %6466 = vmatprep.subr.bf16.mxu0 %v6178
          %6467 = vmatpush1.bf16.msra.mxu0 %v6177
          %6468 = vmatprep.subr.bf16.mxu0 %v6182
          %6469 = vmatpush1.bf16.msra.mxu0 %v6181
          %6470 = vmatprep.subr.bf16.mxu0 %v6186
          %6471 = vmatpush1.bf16.msra.mxu0 %v6185
          %6472 = vmatprep.subr.bf16.mxu0 %v6190
          %6473 = vmatpush1.bf16.msra.mxu0 %v6189
          %6474 = vmatprep.mubr.bf16.mxu0 %v5526
          %6475 = vmatmul.mubr.bf16.gmra.mrb[0].mxu0 %v5525
          %v6476 = vpop.f32.mrb[0].mxu0
          %v6477 = vadd.f32 %v6436, %v6476
          %v6478 = vpop.f32.mrb[0].mxu0
          %v6479 = vadd.f32 %v6438, %v6478
          %v6480 = vpop.f32.mrb[0].mxu0
          %v6481 = vpop.f32.mrb[0].mxu0
          %6482 = vdwg.mxu0
          %v6483 = vmax.f32 %v6395, 0.0
          %v6484 = vmax.f32 %v6397, 0.0
          %v6485 = vmax.f32 %v6477, 0.0
          %v6486 = vmax.f32 %v6479, 0.0
          %v6487 = vpack.c.bf16 %v6483, %v6483
          %v6488 = vpack.c.bf16 %v6484, %v6484
          %v6489 = vpack.c.bf16 %v6485, %v6485
          %v6490 = vpack.c.bf16 %v6486, %v6486
          %v6491 = vld [vmem:[%s493] sm:$0xf]
          %v6492 = vld [vmem:[%s493 + $0x4] sm:$0xf]
          %v6493 = vld [vmem:[%s493 + $0x8] sm:$0xf]
          %v6494 = vld [vmem:[%s493 + $0xc] sm:$0xf]
          %v6495 = vld [vmem:[%s493 + $0x10] sm:$0xf]
          %v6496 = vld [vmem:[%s493 + $0x14] sm:$0xf]
          %v6497 = vld [vmem:[%s493 + $0x18] sm:$0xf]
          %v6498 = vld [vmem:[%s493 + $0x1c] sm:$0xf]
          %v6499 = vld [vmem:[%s493 + $0x20] sm:$0xf]
          %v6500 = vld [vmem:[%s493 + $0x24] sm:$0xf]
          %v6501 = vld [vmem:[%s493 + $0x28] sm:$0xf]
          %v6502 = vld [vmem:[%s493 + $0x2c] sm:$0xf]
          %v6503 = vld [vmem:[%s493 + $0x30] sm:$0xf]
          %v6504 = vld [vmem:[%s493 + $0x34] sm:$0xf]
          %v6505 = vld [vmem:[%s493 + $0x38] sm:$0xf]
          %v6506 = vld [vmem:[%s493 + $0x3c] sm:$0xf]
          %v6507 = vld [vmem:[%s493 + $0x40] sm:$0xf]
          %v6508 = vld [vmem:[%s493 + $0x44] sm:$0xf]
          %v6509 = vld [vmem:[%s493 + $0x48] sm:$0xf]
          %v6510 = vld [vmem:[%s493 + $0x4c] sm:$0xf]
          %v6511 = vld [vmem:[%s493 + $0x50] sm:$0xf]
          %v6512 = vld [vmem:[%s493 + $0x54] sm:$0xf]
          %v6513 = vld [vmem:[%s493 + $0x58] sm:$0xf]
          %v6514 = vld [vmem:[%s493 + $0x5c] sm:$0xf]
          %v6515 = vld [vmem:[%s493 + $0x60] sm:$0xf]
          %v6516 = vld [vmem:[%s493 + $0x64] sm:$0xf]
          %v6517 = vld [vmem:[%s493 + $0x68] sm:$0xf]
          %v6518 = vld [vmem:[%s493 + $0x6c] sm:$0xf]
          %v6519 = vld [vmem:[%s493 + $0x70] sm:$0xf]
          %v6520 = vld [vmem:[%s493 + $0x74] sm:$0xf]
          %v6521 = vld [vmem:[%s493 + $0x78] sm:$0xf]
          %v6522 = vld [vmem:[%s493 + $0x7c] sm:$0xf]
          %v6523 = vld [vmem:[%s493 + $0x80] sm:$0xf]
          %v6524 = vld [vmem:[%s493 + $0x84] sm:$0xf]
          %v6525 = vld [vmem:[%s493 + $0x88] sm:$0xf]
          %v6526 = vld [vmem:[%s493 + $0x8c] sm:$0xf]
          %v6527 = vld [vmem:[%s493 + $0x90] sm:$0xf]
          %v6528 = vld [vmem:[%s493 + $0x94] sm:$0xf]
          %v6529 = vld [vmem:[%s493 + $0x98] sm:$0xf]
          %v6530 = vld [vmem:[%s493 + $0x9c] sm:$0xf]
          %v6531 = vld [vmem:[%s493 + $0xa0] sm:$0xf]
          %v6532 = vld [vmem:[%s493 + $0xa4] sm:$0xf]
          %v6533 = vld [vmem:[%s493 + $0xa8] sm:$0xf]
          %v6534 = vld [vmem:[%s493 + $0xac] sm:$0xf]
          %v6535 = vld [vmem:[%s493 + $0xb0] sm:$0xf]
          %v6536 = vld [vmem:[%s493 + $0xb4] sm:$0xf]
          %v6537 = vld [vmem:[%s493 + $0xb8] sm:$0xf]
          %v6538 = vld [vmem:[%s493 + $0xbc] sm:$0xf]
          %v6539 = vld [vmem:[%s493 + $0xc0] sm:$0xf]
          %v6540 = vld [vmem:[%s493 + $0xc4] sm:$0xf]
          %v6541 = vld [vmem:[%s493 + $0xc8] sm:$0xf]
          %v6542 = vld [vmem:[%s493 + $0xcc] sm:$0xf]
          %v6543 = vld [vmem:[%s493 + $0xd0] sm:$0xf]
          %v6544 = vld [vmem:[%s493 + $0xd4] sm:$0xf]
          %v6545 = vld [vmem:[%s493 + $0xd8] sm:$0xf]
          %v6546 = vld [vmem:[%s493 + $0xdc] sm:$0xf]
          %v6547 = vld [vmem:[%s493 + $0xe0] sm:$0xf]
          %v6548 = vld [vmem:[%s493 + $0xe4] sm:$0xf]
          %v6549 = vld [vmem:[%s493 + $0xe8] sm:$0xf]
          %v6550 = vld [vmem:[%s493 + $0xec] sm:$0xf]
          %v6551 = vld [vmem:[%s493 + $0xf0] sm:$0xf]
          %v6552 = vld [vmem:[%s493 + $0xf4] sm:$0xf]
          %v6553 = vld [vmem:[%s493 + $0xf8] sm:$0xf]
          %v6554 = vld [vmem:[%s493 + $0xfc] sm:$0xf]
          %v6555 = vld [vmem:[%s434] sm:$0x1]
          %v6557 = vlaneseq
          %v6558 = vshrl.u32 %v6557, 7
          %v6559 = vsub.s32 0, %v6558
          %v6560 = vrot.slane %v6555, %v6559
          %v6626 = vunpack.c.l.b16 %v6491
          %v6627 = vunpack.c.l.b16 %v6492
          %v6628 = vunpack.c.l.b16 %v6493
          %v6629 = vunpack.c.l.b16 %v6494
          %v6630 = vunpack.c.l.b16 %v6495
          %v6631 = vunpack.c.l.b16 %v6496
          %v6632 = vunpack.c.l.b16 %v6497
          %v6633 = vunpack.c.l.b16 %v6498
          %v6634 = vunpack.c.l.b16 %v6499
          %v6635 = vunpack.c.l.b16 %v6500
          %v6636 = vunpack.c.l.b16 %v6501
          %v6637 = vunpack.c.l.b16 %v6502
          %v6638 = vunpack.c.l.b16 %v6503
          %v6639 = vunpack.c.l.b16 %v6504
          %v6640 = vunpack.c.l.b16 %v6505
          %v6641 = vunpack.c.l.b16 %v6506
          %v6642 = vunpack.c.l.b16 %v6507
          %v6643 = vunpack.c.l.b16 %v6508
          %v6644 = vunpack.c.l.b16 %v6509
          %v6645 = vunpack.c.l.b16 %v6510
          %v6646 = vunpack.c.l.b16 %v6511
          %v6647 = vunpack.c.l.b16 %v6512
          %v6648 = vunpack.c.l.b16 %v6513
          %v6649 = vunpack.c.l.b16 %v6514
          %v6650 = vunpack.c.l.b16 %v6515
          %v6651 = vunpack.c.l.b16 %v6516
          %v6652 = vunpack.c.l.b16 %v6517
          %v6653 = vunpack.c.l.b16 %v6518
          %v6654 = vunpack.c.l.b16 %v6519
          %v6655 = vunpack.c.l.b16 %v6520
          %v6656 = vunpack.c.l.b16 %v6521
          %v6657 = vunpack.c.l.b16 %v6522
          %v6658 = vunpack.c.l.b16 %v6523
          %v6659 = vunpack.c.l.b16 %v6524
          %v6660 = vunpack.c.l.b16 %v6525
          %v6661 = vunpack.c.l.b16 %v6526
          %v6662 = vunpack.c.l.b16 %v6527
          %v6663 = vunpack.c.l.b16 %v6528
          %v6664 = vunpack.c.l.b16 %v6529
          %v6665 = vunpack.c.l.b16 %v6530
          %v6666 = vunpack.c.l.b16 %v6531
          %v6667 = vunpack.c.l.b16 %v6532
          %v6668 = vunpack.c.l.b16 %v6533
          %v6669 = vunpack.c.l.b16 %v6534
          %v6670 = vunpack.c.l.b16 %v6535
          %v6671 = vunpack.c.l.b16 %v6536
          %v6672 = vunpack.c.l.b16 %v6537
          %v6673 = vunpack.c.l.b16 %v6538
          %v6674 = vunpack.c.l.b16 %v6539
          %v6675 = vunpack.c.l.b16 %v6540
          %v6676 = vunpack.c.l.b16 %v6541
          %v6677 = vunpack.c.l.b16 %v6542
          %v6678 = vunpack.c.l.b16 %v6543
          %v6679 = vunpack.c.l.b16 %v6544
          %v6680 = vunpack.c.l.b16 %v6545
          %v6681 = vunpack.c.l.b16 %v6546
          %v6682 = vunpack.c.l.b16 %v6547
          %v6683 = vunpack.c.l.b16 %v6548
          %v6684 = vunpack.c.l.b16 %v6549
          %v6685 = vunpack.c.l.b16 %v6550
          %v6686 = vunpack.c.l.b16 %v6551
          %v6687 = vunpack.c.l.b16 %v6552
          %v6688 = vunpack.c.l.b16 %v6553
          %v6689 = vunpack.c.l.b16 %v6554
          %v6690 = vpack.c.b16 %v6627, %v6626
          %v6691 = vpack.c.b16 %v6629, %v6628
          %v6692 = vpack.c.b16 %v6631, %v6630
          %v6693 = vpack.c.b16 %v6633, %v6632
          %v6694 = vpack.c.b16 %v6635, %v6634
          %v6695 = vpack.c.b16 %v6637, %v6636
          %v6696 = vpack.c.b16 %v6639, %v6638
          %v6697 = vpack.c.b16 %v6641, %v6640
          %v6698 = vpack.c.b16 %v6643, %v6642
          %v6699 = vpack.c.b16 %v6645, %v6644
          %v6700 = vpack.c.b16 %v6647, %v6646
          %v6701 = vpack.c.b16 %v6649, %v6648
          %v6702 = vpack.c.b16 %v6651, %v6650
          %v6703 = vpack.c.b16 %v6653, %v6652
          %v6704 = vpack.c.b16 %v6655, %v6654
          %v6705 = vpack.c.b16 %v6657, %v6656
          %v6706 = vpack.c.b16 %v6659, %v6658
          %v6707 = vpack.c.b16 %v6661, %v6660
          %v6708 = vpack.c.b16 %v6663, %v6662
          %v6709 = vpack.c.b16 %v6665, %v6664
          %v6710 = vpack.c.b16 %v6667, %v6666
          %v6711 = vpack.c.b16 %v6669, %v6668
          %v6712 = vpack.c.b16 %v6671, %v6670
          %v6713 = vpack.c.b16 %v6673, %v6672
          %v6714 = vpack.c.b16 %v6675, %v6674
          %v6715 = vpack.c.b16 %v6677, %v6676
          %v6716 = vpack.c.b16 %v6679, %v6678
          %v6717 = vpack.c.b16 %v6681, %v6680
          %v6718 = vpack.c.b16 %v6683, %v6682
          %v6719 = vpack.c.b16 %v6685, %v6684
          %v6720 = vpack.c.b16 %v6687, %v6686
          %v6721 = vpack.c.b16 %v6689, %v6688
          %6754 = vmatprep.subr.bf16.mxu0 0
          %6755 = vmatpush1.bf16.msra.mxu0 %v6690
          %6756 = vmatprep.subr.bf16.mxu0 0
          %6757 = vmatpush1.bf16.msra.mxu0 %v6691
          %6758 = vmatprep.subr.bf16.mxu0 0
          %6759 = vmatpush1.bf16.msra.mxu0 %v6692
          %6760 = vmatprep.subr.bf16.mxu0 0
          %6761 = vmatpush1.bf16.msra.mxu0 %v6693
          %6762 = vmatprep.subr.bf16.mxu0 0
          %6763 = vmatpush1.bf16.msra.mxu0 %v6694
          %6764 = vmatprep.subr.bf16.mxu0 0
          %6765 = vmatpush1.bf16.msra.mxu0 %v6695
          %6766 = vmatprep.subr.bf16.mxu0 0
          %6767 = vmatpush1.bf16.msra.mxu0 %v6696
          %6768 = vmatprep.subr.bf16.mxu0 0
          %6769 = vmatpush1.bf16.msra.mxu0 %v6697
          %6770 = vmatprep.subr.bf16.mxu0 0
          %6771 = vmatpush1.bf16.msra.mxu0 %v6698
          %6772 = vmatprep.subr.bf16.mxu0 0
          %6773 = vmatpush1.bf16.msra.mxu0 %v6699
          %6774 = vmatprep.subr.bf16.mxu0 0
          %6775 = vmatpush1.bf16.msra.mxu0 %v6700
          %6776 = vmatprep.subr.bf16.mxu0 0
          %6777 = vmatpush1.bf16.msra.mxu0 %v6701
          %6778 = vmatprep.subr.bf16.mxu0 0
          %6779 = vmatpush1.bf16.msra.mxu0 %v6702
          %6780 = vmatprep.subr.bf16.mxu0 0
          %6781 = vmatpush1.bf16.msra.mxu0 %v6703
          %6782 = vmatprep.subr.bf16.mxu0 0
          %6783 = vmatpush1.bf16.msra.mxu0 %v6704
          %6784 = vmatprep.subr.bf16.mxu0 0
          %6785 = vmatpush1.bf16.msra.mxu0 %v6705
          %6786 = vmatprep.mubr.bf16.mxu0 %v6488
          %6787 = vmatmul.mubr.bf16.gmra.mrb[0].mxu0 %v6487
          %v6788 = vpop.f32.mrb[0].mxu0
          %v6789 = vadd.f32 %v6560, %v6788
          %v6790 = vpop.f32.mrb[0].mxu0
          %v6791 = vpop.f32.mrb[0].mxu0
          %v6792 = vpop.f32.mrb[0].mxu0
          %6793 = vdwg.mxu0
          %6794 = vmatprep.subr.bf16.mxu0 0
          %6795 = vmatpush1.bf16.msra.mxu0 %v6706
          %6796 = vmatprep.subr.bf16.mxu0 0
          %6797 = vmatpush1.bf16.msra.mxu0 %v6707
          %6798 = vmatprep.subr.bf16.mxu0 0
          %6799 = vmatpush1.bf16.msra.mxu0 %v6708
          %6800 = vmatprep.subr.bf16.mxu0 0
          %6801 = vmatpush1.bf16.msra.mxu0 %v6709
          %6802 = vmatprep.subr.bf16.mxu0 0
          %6803 = vmatpush1.bf16.msra.mxu0 %v6710
          %6804 = vmatprep.subr.bf16.mxu0 0
          %6805 = vmatpush1.bf16.msra.mxu0 %v6711
          %6806 = vmatprep.subr.bf16.mxu0 0
          %6807 = vmatpush1.bf16.msra.mxu0 %v6712
          %6808 = vmatprep.subr.bf16.mxu0 0
          %6809 = vmatpush1.bf16.msra.mxu0 %v6713
          %6810 = vmatprep.subr.bf16.mxu0 0
          %6811 = vmatpush1.bf16.msra.mxu0 %v6714
          %6812 = vmatprep.subr.bf16.mxu0 0
          %6813 = vmatpush1.bf16.msra.mxu0 %v6715
          %6814 = vmatprep.subr.bf16.mxu0 0
          %6815 = vmatpush1.bf16.msra.mxu0 %v6716
          %6816 = vmatprep.subr.bf16.mxu0 0
          %6817 = vmatpush1.bf16.msra.mxu0 %v6717
          %6818 = vmatprep.subr.bf16.mxu0 0
          %6819 = vmatpush1.bf16.msra.mxu0 %v6718
          %6820 = vmatprep.subr.bf16.mxu0 0
          %6821 = vmatpush1.bf16.msra.mxu0 %v6719
          %6822 = vmatprep.subr.bf16.mxu0 0
          %6823 = vmatpush1.bf16.msra.mxu0 %v6720
          %6824 = vmatprep.subr.bf16.mxu0 0
          %6825 = vmatpush1.bf16.msra.mxu0 %v6721
          %6826 = vmatprep.mubr.bf16.mxu0 %v6490
          %6827 = vmatmul.mubr.bf16.gmra.mrb[0].mxu0 %v6489
          %v6828 = vpop.f32.mrb[0].mxu0
          %v6829 = vadd.f32 %v6789, %v6828
          %v6830 = vpop.f32.mrb[0].mxu0
          %v6831 = vpop.f32.mrb[0].mxu0
          %v6832 = vpop.f32.mrb[0].mxu0
          %6833 = vdwg.mxu0
          %v6834 = vld [vmem:[%s3] sm:$0x3]
          %v6835 = vstv %s36
          %vm6836 = vcmp.eq.s32.totalorder %v6834, %v6835
          %v6837 = vld [vmem:[#allocation16] sm:$0x3]
          %v6838 = vsel %vm6836, 1, 0
          %6839 = vset.pattern.permute.xlu0 0
          %6840 = vperm.xlu0 %6839, %v6838
          %v6841 = vpop.permute.xlu0 %6840
          %vm6842 = vcmp.eq.s32.totalorder %v6841, 1
          %v6843 = vsel %vm6842, %v6829, %v6837
          %vm6844 = vcmask 517120
          %6845 = vst.msk [vmem:[#allocation16] sm:$0x3] %vm6844, %v6843
        $region88: #{mapping_forward.1} parent=55 // pred_fallthru
          _
        // Predicated region
        $region89: #{mapping_forward.1} parent=55 // pred_check
          %p6846 = pneg %p266
        $region90: #{mapping_forward.1} parent=55 // pred_check_branch
          %6848 = sbr.rel (%p6846) target = $region92
        $region91: #{mapping_forward.1} parent=55 // pred_region
          %s6850 = ssub.s32 32, 32
          %6851 = vsyncadd [#allocation8], %s6850
          %s6853 = sshll.u32 [#allocation16], 4
          %s6854 = int_to_ptr.vmem [resolvable:$true] %s6853
          %6856 = dma.vmem_to_hbm [thread:$0]  %s6854, 32, %s11, [#allocation8]
        $region92: #{mapping_forward.1} parent=55 // pred_fallthru
          _
        // Predicated region
        $region93: #{mapping_forward.1} parent=55 // pred_check
          %p6857 = pneg %p266
        $region94: #{mapping_forward.1} parent=55 // pred_check_branch
          %6859 = sbr.rel (%p6857) target = $region96
        $region95: #{mapping_forward.1} parent=55 // pred_region
          %6860 = dma.done [#allocation8], 32
        $region96: #{mapping_forward.1} parent=55 // pred_fallthru
          _
      $region56: #{mapping_forward.1} parent=5 // pred_fallthru
        _
      %p6861 = scmp.le.s32.totalorder 2, %s31
      // Predicated region
      $region97: #{mapping_forward.1} parent=5 // pred_check
        %p6862 = pneg %p6861
      $region98: #{mapping_forward.1} parent=5 // pred_check_branch
        %6864 = sbr.rel (%p6862) target = $region100
      $region99: #{mapping_forward.1} parent=5 // pred_region
        %s6865 = ssub.s32 %s31, 2
      $region100: #{mapping_forward.1} parent=5 // pred_fallthru
        _
    $region6: #{mapping_forward.1} parent=1 // loop_footer
      %s35 = sadd.s32 1, %s31
    $region7: #{mapping_forward.1} parent=1 // loop_footer_branch
      %30 = sbr.rel target = $region3
    $region8: #{mapping_forward.1} parent=1 // loop_exit
      _
    %6866 = vsyncpa [#allocation7], 1
    %s6867 = scalar_lea.sflag [#allocation7], 1
    %6868 = vsyncpa %s6867, 1
    %6869 = vsyncpa [#allocation10], 1
    %6870 = vsyncpa [#allocation13], 1
    %6871 = vsyncpa [#allocation8], 1
    %s6872 = scalar_lea.sflag [#allocation8], 1
    %6873 = vsyncpa %s6872, 1

</llo_original>
